<compile_context>
chip_gen: v5e
topology: v5e:2x2
jax: 0.10.0
libtpu: 0.0.40
codegen_flags: <defaults>
</compile_context>

<pallas_src>
import jax
import jax.numpy as jnp
import numpy as np
from jax.experimental import pallas as pl
from jax.experimental.pallas import tpu as pltpu

D = 480        # hidden_size
H = 1024       # hidden_layer width
C = 45         # num classes
C_PAD = 128    # lane-dense classifier width (zero padded, sliced in wrapper)

# Params consumed by the kernel (attn_b is intentionally excluded, see above).
KERNEL_PARAMS = ["ln1_g", "ln1_b", "attn_w",
                 "so_w", "so_b", "so_g", "so_beta",
                 "hid_w", "hid_b", "ln2_g", "ln2_b",
                 "out_w", "out_b"]


def _ln(x, g, b, eps):
    mu = jnp.mean(x, axis=-1, keepdims=True)
    var = jnp.mean(jnp.square(x - mu), axis=-1, keepdims=True)
    return (x - mu) * jax.lax.rsqrt(var + eps) * g + b


def classification_kernel(x_ref, ln1_g, ln1_b, attn_w,
                          so_w, so_b, so_g, so_beta,
                          hid_w, hid_b, ln2_g, ln2_b,
                          out_w, out_b, o_ref):
    f32 = jnp.float32
    bf16 = jnp.bfloat16

    # (TB, L, D) tile of sequences; all LN/softmax math in f32.
    seq = x_ref[...].astype(f32)
    seq = _ln(seq, ln1_g[...], ln1_b[...], 1e-5)            # layernorm1

    # attention scores + softmax over the sequence axis (VPU/XLU, no matmul).
    # (attn_b adds the same constant to every score and cancels in softmax.)
    scores = jnp.sum(seq * attn_w[...], axis=-1)            # (TB, L)
    m = jnp.max(scores, axis=-1, keepdims=True)
    e = jnp.exp(scores - m)
    w = e / jnp.sum(e, axis=-1, keepdims=True)              # (TB, L)

    # softmax-weighted pooling over L.
    emb = jnp.sum(seq * w[..., None], axis=1)               # (TB, D), f32

    # ProteinBertSelfOutput applied twice with SHARED weights:
    #   LN(dense(x) + x), eps=1e-12 (Bert default); dropout = identity.
    for _ in range(2):
        h = jnp.dot(emb.astype(bf16), so_w[...],
                    preferred_element_type=f32) + so_b[...]
        emb = _ln(h + emb, so_g[...], so_beta[...], 1e-12)

    # hidden layer -> ReLU -> layernorm2
    hid = jnp.dot(emb.astype(bf16), hid_w[...],
                  preferred_element_type=f32) + hid_b[...]
    hid = jnp.maximum(hid, 0.0)
    hid = _ln(hid, ln2_g[...], ln2_b[...], 1e-5)            # (TB, H)

    # classifier head, lane-dense (padded to C_PAD = 128)
    out = jnp.dot(hid.astype(bf16), out_w[...],
                  preferred_element_type=f32) + out_b[...]
    o_ref[...] = out.astype(o_ref.dtype)                    # (TB, C_PAD)


def _choose_tb(B, L, x_itemsize):
    """Pick the batch tile so the per-step working set fits comfortably in VMEM
    (double-buffered input block + the f32 activations derived from it)."""
    per_row = L * D * (2 * x_itemsize + 12)
    tb = int((24 << 20) // max(per_row, 1))
    tb = max(8, min(256, tb))
    if tb >= B:
        # One step would cover the whole batch; for large batches keep >= 2
        # grid steps so both v7x TensorCores are used ("parallel" axis).
        tb = B if B <= 8 else max(8, (((B + 1) // 2) + 7) // 8 * 8)
    else:
        tb = max(8, (tb // 8) * 8)   # partial tiles must stay 8-row aligned
    return tb


def _vmem_limit_bytes(tb, L, x_itemsize, weight_bytes):
    x_block = tb * L * D * x_itemsize        # one pipeline buffer of the input
    f32_work = tb * L * D * 4                # f32 working copy inside the kernel
    out_block = tb * C_PAD * 4
    need = 2 * (x_block + out_block) + 2 * weight_bytes + 3 * f32_work + (4 << 20)
    # floor keeps headroom for compiler scratch; cap stays within v7x's 64 MiB.
    return int(min(max(need, 32 << 20), 64 << 20))


def classification_model2(x, params, *, tb=None):
    """x: (B, L, 480) float32 or bfloat16 activations. Returns (B, 45) f32 logits."""
    B, L, d = x.shape
    assert d == D, f"expected hidden dim {D}, got {d}"
    x_itemsize = jnp.dtype(x.dtype).itemsize
    if tb is None:
        tb = _choose_tb(B, L, x_itemsize)
    grid_b = pl.cdiv(B, tb)

    kernel_args = [params[k] for k in KERNEL_PARAMS]
    weight_bytes = sum(int(p.size) * jnp.dtype(p.dtype).itemsize
                       for p in kernel_args)

    # Weights use a constant block index -> fetched once, resident across steps.
    weight_spec = lambda p: pl.BlockSpec(p.shape, lambda b: (0, 0))
    in_specs = [pl.BlockSpec((tb, L, D), lambda b: (b, 0, 0))]
    in_specs += [weight_spec(p) for p in kernel_args]

    out_padded = pl.pallas_call(
        classification_kernel,
        out_shape=jax.ShapeDtypeStruct((B, C_PAD), jnp.float32),
        grid=(grid_b,),
        in_specs=in_specs,
        out_specs=pl.BlockSpec((tb, C_PAD), lambda b: (b, 0)),
        compiler_params=pltpu.CompilerParams(
            dimension_semantics=("parallel",),
            vmem_limit_bytes=_vmem_limit_bytes(tb, L, x_itemsize, weight_bytes),
        ),
    )(x, *kernel_args)

    return out_padded[:, :C]   # drop the lane padding of the classifier head


def init_params(key):
    ks = jax.random.split(key, 4)

    def linear(k, fan_in, fan_out):
        # PyTorch-style uniform(-1/sqrt(fan_in), 1/sqrt(fan_in))
        bound = 1.0 / np.sqrt(fan_in)
        kw, kb = jax.random.split(k)
        w = jax.random.uniform(kw, (fan_in, fan_out), jnp.float32, -bound, bound)
        b = jax.random.uniform(kb, (1, fan_out), jnp.float32, -bound, bound)
        return w, b

    attn_w, attn_b = linear(ks[0], D, 1)     # nn.Linear(480, 1)
    so_w, so_b = linear(ks[1], D, D)         # ProteinBertSelfOutput.dense
    hid_w, hid_b = linear(ks[2], D, H)       # nn.Linear(480, 1024)
    out_w, out_b = linear(ks[3], H, C)       # nn.Linear(1024, 45)

    # lane-dense classifier head: zero-pad 45 -> 128
    out_w = jnp.pad(out_w, ((0, 0), (0, C_PAD - C)))
    out_b = jnp.pad(out_b, ((0, 0), (0, C_PAD - C)))

    return {
        "ln1_g": jnp.ones((1, D), jnp.float32),
        "ln1_b": jnp.zeros((1, D), jnp.float32),
        "attn_w": attn_w.T,                  # (1, 480) f32 (score path stays f32)
        "attn_b": attn_b,                    # (1, 1) — cancelled by softmax
        "so_w": so_w.astype(jnp.bfloat16), "so_b": so_b,
        "so_g": jnp.ones((1, D), jnp.float32),
        "so_beta": jnp.zeros((1, D), jnp.float32),
        "hid_w": hid_w.astype(jnp.bfloat16), "hid_b": hid_b,
        "ln2_g": jnp.ones((1, H), jnp.float32),
        "ln2_b": jnp.zeros((1, H), jnp.float32),
        "out_w": out_w.astype(jnp.bfloat16), "out_b": out_b,
    }


def reference(x, p):
    """Plain-JAX mirror of the PyTorch forward (eval mode), using the same
    mixed-precision policy as the kernel (bf16 matmul operands, f32 LN/softmax)."""
    f32, bf16 = jnp.float32, jnp.bfloat16

    def ln(v, g, b, eps):
        mu = v.mean(-1, keepdims=True)
        var = ((v - mu) ** 2).mean(-1, keepdims=True)
        return (v - mu) / jnp.sqrt(var + eps) * g + b

    seq = ln(x.astype(f32), p["ln1_g"][0], p["ln1_b"][0], 1e-5)
    scores = jnp.einsum("bld,d->bl", seq, p["attn_w"][0].astype(f32)) + p["attn_b"][0, 0]
    w = jax.nn.softmax(scores, axis=1)[..., None]
    emb = jnp.sum(seq * w, axis=1)
    for _ in range(2):
        h = jnp.dot(emb.astype(bf16), p["so_w"], preferred_element_type=f32) + p["so_b"][0]
        emb = ln(h + emb, p["so_g"][0], p["so_beta"][0], 1e-12)
    hid = jax.nn.relu(jnp.dot(emb.astype(bf16), p["hid_w"],
                              preferred_element_type=f32) + p["hid_b"][0])
    hid = ln(hid, p["ln2_g"][0], p["ln2_b"][0], 1e-5)
    out = jnp.dot(hid.astype(bf16), p["out_w"], preferred_element_type=f32) + p["out_b"][0]
    return out[:, :C]


if __name__ == "__main__":
    key = jax.random.PRNGKey(0)
    kx, kp = jax.random.split(key)

    B, L = 2, 8
    # sequence activations in bf16 (halves the dominant HBM stream); the kernel
    # upcasts to f32 for LayerNorm / softmax / pooling.
    x = jax.random.normal(kx, (B, L, D), jnp.float32).astype(jnp.bfloat16)
    params = init_params(kp)

    out = classification_model2(x, params)
    out = jax.block_until_ready(out)
    assert out.shape == (B, C)

    ref = reference(x, params)
    # tolerance reflects bf16 matmul operands (f32 accumulation, f32 LN/softmax)
    np.testing.assert_allclose(np.asarray(out), np.asarray(ref),
                               rtol=5e-3, atol=5e-3)

    print("KERNEL_OK")
</pallas_src>

<mosaic_0001>
module attributes {stable_mosaic.version = 11 : i64} {
  func.func @classification_kernel(%arg0: i32, %arg1: memref<2x8x480xbf16, #tpu.memory_space<vmem>>, %arg2: memref<1x480xf32, #tpu.memory_space<vmem>>, %arg3: memref<1x480xf32, #tpu.memory_space<vmem>>, %arg4: memref<1x480xf32, #tpu.memory_space<vmem>>, %arg5: memref<480x480xbf16, #tpu.memory_space<vmem>>, %arg6: memref<1x480xf32, #tpu.memory_space<vmem>>, %arg7: memref<1x480xf32, #tpu.memory_space<vmem>>, %arg8: memref<1x480xf32, #tpu.memory_space<vmem>>, %arg9: memref<480x1024xbf16, #tpu.memory_space<vmem>>, %arg10: memref<1x1024xf32, #tpu.memory_space<vmem>>, %arg11: memref<1x1024xf32, #tpu.memory_space<vmem>>, %arg12: memref<1x1024xf32, #tpu.memory_space<vmem>>, %arg13: memref<1024x128xbf16, #tpu.memory_space<vmem>>, %arg14: memref<1x128xf32, #tpu.memory_space<vmem>>, %arg15: memref<2x128xf32, #tpu.memory_space<vmem>>) attributes {dimension_semantics = [#tpu.dimension_semantics<parallel>], iteration_bounds = array<i64: 1>, scalar_prefetch = 0 : i64, scratch_operands = 0 : i64, tpu.core_type = #tpu.core_type<tc>, window_params = [{transform_indices = @transform_0, window_bounds = array<i64: 2, 8, 480>}, {pipeline_mode = #tpu.pipeline_mode<synchronous>, transform_indices = @transform_1, window_bounds = array<i64: 1, 480>}, {pipeline_mode = #tpu.pipeline_mode<synchronous>, transform_indices = @transform_2, window_bounds = array<i64: 1, 480>}, {pipeline_mode = #tpu.pipeline_mode<synchronous>, transform_indices = @transform_3, window_bounds = array<i64: 1, 480>}, {pipeline_mode = #tpu.pipeline_mode<synchronous>, transform_indices = @transform_4, window_bounds = array<i64: 480, 480>}, {pipeline_mode = #tpu.pipeline_mode<synchronous>, transform_indices = @transform_5, window_bounds = array<i64: 1, 480>}, {pipeline_mode = #tpu.pipeline_mode<synchronous>, transform_indices = @transform_6, window_bounds = array<i64: 1, 480>}, {pipeline_mode = #tpu.pipeline_mode<synchronous>, transform_indices = @transform_7, window_bounds = array<i64: 1, 480>}, {pipeline_mode = #tpu.pipeline_mode<synchronous>, transform_indices = @transform_8, window_bounds = array<i64: 480, 1024>}, {pipeline_mode = #tpu.pipeline_mode<synchronous>, transform_indices = @transform_9, window_bounds = array<i64: 1, 1024>}, {pipeline_mode = #tpu.pipeline_mode<synchronous>, transform_indices = @transform_10, window_bounds = array<i64: 1, 1024>}, {pipeline_mode = #tpu.pipeline_mode<synchronous>, transform_indices = @transform_11, window_bounds = array<i64: 1, 1024>}, {pipeline_mode = #tpu.pipeline_mode<synchronous>, transform_indices = @transform_12, window_bounds = array<i64: 1024, 128>}, {pipeline_mode = #tpu.pipeline_mode<synchronous>, transform_indices = @transform_13, window_bounds = array<i64: 1, 128>}, {transform_indices = @transform_14, window_bounds = array<i64: 2, 128>}]} {
    %c0 = arith.constant 0 : index
    %c0_0 = arith.constant 0 : index
    %c0_1 = arith.constant 0 : index
    %0 = vector.load %arg1[%c0, %c0_0, %c0_1] : memref<2x8x480xbf16, #tpu.memory_space<vmem>>, vector<2x8x480xbf16>
    %1 = arith.extf %0 : vector<2x8x480xbf16> to vector<2x8x480xf32>
    %c0_2 = arith.constant 0 : index
    %c0_3 = arith.constant 0 : index
    %2 = vector.load %arg2[%c0_2, %c0_3] : memref<1x480xf32, #tpu.memory_space<vmem>>, vector<1x480xf32>
    %c0_4 = arith.constant 0 : index
    %c0_5 = arith.constant 0 : index
    %3 = vector.load %arg3[%c0_4, %c0_5] : memref<1x480xf32, #tpu.memory_space<vmem>>, vector<1x480xf32>
    %cst = arith.constant dense<0.000000e+00> : vector<2x8xf32>
    %4 = vector.multi_reduction <add>, %1, %cst [2] : vector<2x8x480xf32> to vector<2x8xf32>
    %5 = vector.shape_cast %4 : vector<2x8xf32> to vector<2x8x1xf32>
    %cst_6 = arith.constant 4.800000e+02 : f32
    %6 = vector.broadcast %cst_6 : f32 to vector<2x8x1xf32>
    %7 = arith.divf %5, %6 : vector<2x8x1xf32>
    %8 = vector.broadcast %7 : vector<2x8x1xf32> to vector<2x8x480xf32>
    %9 = arith.subf %1, %8 : vector<2x8x480xf32>
    %10 = arith.mulf %9, %9 : vector<2x8x480xf32>
    %cst_7 = arith.constant dense<0.000000e+00> : vector<2x8xf32>
    %11 = vector.multi_reduction <add>, %10, %cst_7 [2] : vector<2x8x480xf32> to vector<2x8xf32>
    %12 = vector.shape_cast %11 : vector<2x8xf32> to vector<2x8x1xf32>
    %cst_8 = arith.constant 4.800000e+02 : f32
    %13 = vector.broadcast %cst_8 : f32 to vector<2x8x1xf32>
    %14 = arith.divf %12, %13 : vector<2x8x1xf32>
    %15 = vector.broadcast %7 : vector<2x8x1xf32> to vector<2x8x480xf32>
    %16 = arith.subf %1, %15 : vector<2x8x480xf32>
    %cst_9 = arith.constant 9.99999974E-6 : f32
    %17 = vector.broadcast %cst_9 : f32 to vector<2x8x1xf32>
    %18 = arith.addf %14, %17 : vector<2x8x1xf32>
    %19 = math.rsqrt %18 : vector<2x8x1xf32>
    %20 = vector.broadcast %19 : vector<2x8x1xf32> to vector<2x8x480xf32>
    %21 = arith.mulf %16, %20 : vector<2x8x480xf32>
    %22 = vector.shape_cast %2 : vector<1x480xf32> to vector<1x1x480xf32>
    %23 = vector.broadcast %22 : vector<1x1x480xf32> to vector<2x8x480xf32>
    %24 = arith.mulf %21, %23 : vector<2x8x480xf32>
    %25 = vector.shape_cast %3 : vector<1x480xf32> to vector<1x1x480xf32>
    %26 = vector.broadcast %25 : vector<1x1x480xf32> to vector<2x8x480xf32>
    %27 = arith.addf %24, %26 : vector<2x8x480xf32>
    %c0_10 = arith.constant 0 : index
    %c0_11 = arith.constant 0 : index
    %28 = vector.load %arg4[%c0_10, %c0_11] : memref<1x480xf32, #tpu.memory_space<vmem>>, vector<1x480xf32>
    %29 = vector.shape_cast %28 : vector<1x480xf32> to vector<1x1x480xf32>
    %30 = vector.broadcast %29 : vector<1x1x480xf32> to vector<2x8x480xf32>
    %31 = arith.mulf %27, %30 : vector<2x8x480xf32>
    %cst_12 = arith.constant dense<0.000000e+00> : vector<2x8xf32>
    %32 = vector.multi_reduction <add>, %31, %cst_12 [2] : vector<2x8x480xf32> to vector<2x8xf32>
    %cst_13 = arith.constant dense<0xFF800000> : vector<2xf32>
    %33 = vector.multi_reduction <maximumf>, %32, %cst_13 [1] : vector<2x8xf32> to vector<2xf32>
    %34 = vector.shape_cast %33 : vector<2xf32> to vector<2x1xf32>
    %35 = vector.broadcast %34 : vector<2x1xf32> to vector<2x8xf32>
    %36 = arith.subf %32, %35 : vector<2x8xf32>
    %37 = math.exp %36 : vector<2x8xf32>
    %cst_14 = arith.constant dense<0.000000e+00> : vector<2xf32>
    %38 = vector.multi_reduction <add>, %37, %cst_14 [1] : vector<2x8xf32> to vector<2xf32>
    %39 = vector.shape_cast %38 : vector<2xf32> to vector<2x1xf32>
    %40 = vector.broadcast %39 : vector<2x1xf32> to vector<2x8xf32>
    %41 = arith.divf %37, %40 : vector<2x8xf32>
    %42 = vector.shape_cast %41 : vector<2x8xf32> to vector<2x8x1xf32>
    %43 = vector.broadcast %42 : vector<2x8x1xf32> to vector<2x8x480xf32>
    %44 = arith.mulf %27, %43 : vector<2x8x480xf32>
    %cst_15 = arith.constant dense<0.000000e+00> : vector<2x480xf32>
    %45 = vector.multi_reduction <add>, %44, %cst_15 [1] : vector<2x8x480xf32> to vector<2x480xf32>
    %46 = arith.truncf %45 : vector<2x480xf32> to vector<2x480xbf16>
    %c0_16 = arith.constant 0 : index
    %c0_17 = arith.constant 0 : index
    %47 = vector.load %arg5[%c0_16, %c0_17] : memref<480x480xbf16, #tpu.memory_space<vmem>>, vector<480x480xbf16>
    %cst_18 = arith.constant dense<0.000000e+00> : vector<2x480xf32>
    %48 = tpu.matmul %46, %47, %cst_18 {dimension_numbers = #tpu.dot_dimension_numbers<[1], [0], [0], [1], [0, 0, 1, 1], [], []>} : vector<2x480xbf16>, vector<480x480xbf16>, vector<2x480xf32> -> vector<2x480xf32>
    %c0_19 = arith.constant 0 : index
    %c0_20 = arith.constant 0 : index
    %49 = vector.load %arg6[%c0_19, %c0_20] : memref<1x480xf32, #tpu.memory_space<vmem>>, vector<1x480xf32>
    %50 = vector.broadcast %49 : vector<1x480xf32> to vector<2x480xf32>
    %51 = arith.addf %48, %50 : vector<2x480xf32>
    %52 = arith.addf %51, %45 : vector<2x480xf32>
    %c0_21 = arith.constant 0 : index
    %c0_22 = arith.constant 0 : index
    %53 = vector.load %arg7[%c0_21, %c0_22] : memref<1x480xf32, #tpu.memory_space<vmem>>, vector<1x480xf32>
    %c0_23 = arith.constant 0 : index
    %c0_24 = arith.constant 0 : index
    %54 = vector.load %arg8[%c0_23, %c0_24] : memref<1x480xf32, #tpu.memory_space<vmem>>, vector<1x480xf32>
    %cst_25 = arith.constant dense<0.000000e+00> : vector<2xf32>
    %55 = vector.multi_reduction <add>, %52, %cst_25 [1] : vector<2x480xf32> to vector<2xf32>
    %56 = vector.shape_cast %55 : vector<2xf32> to vector<2x1xf32>
    %cst_26 = arith.constant 4.800000e+02 : f32
    %57 = vector.broadcast %cst_26 : f32 to vector<2x1xf32>
    %58 = arith.divf %56, %57 : vector<2x1xf32>
    %59 = vector.broadcast %58 : vector<2x1xf32> to vector<2x480xf32>
    %60 = arith.subf %52, %59 : vector<2x480xf32>
    %61 = arith.mulf %60, %60 : vector<2x480xf32>
    %cst_27 = arith.constant dense<0.000000e+00> : vector<2xf32>
    %62 = vector.multi_reduction <add>, %61, %cst_27 [1] : vector<2x480xf32> to vector<2xf32>
    %63 = vector.shape_cast %62 : vector<2xf32> to vector<2x1xf32>
    %cst_28 = arith.constant 4.800000e+02 : f32
    %64 = vector.broadcast %cst_28 : f32 to vector<2x1xf32>
    %65 = arith.divf %63, %64 : vector<2x1xf32>
    %66 = vector.broadcast %58 : vector<2x1xf32> to vector<2x480xf32>
    %67 = arith.subf %52, %66 : vector<2x480xf32>
    %cst_29 = arith.constant 9.99999996E-13 : f32
    %68 = vector.broadcast %cst_29 : f32 to vector<2x1xf32>
    %69 = arith.addf %65, %68 : vector<2x1xf32>
    %70 = math.rsqrt %69 : vector<2x1xf32>
    %71 = vector.broadcast %70 : vector<2x1xf32> to vector<2x480xf32>
    %72 = arith.mulf %67, %71 : vector<2x480xf32>
    %73 = vector.broadcast %53 : vector<1x480xf32> to vector<2x480xf32>
    %74 = arith.mulf %72, %73 : vector<2x480xf32>
    %75 = vector.broadcast %54 : vector<1x480xf32> to vector<2x480xf32>
    %76 = arith.addf %74, %75 : vector<2x480xf32>
    %77 = arith.truncf %76 : vector<2x480xf32> to vector<2x480xbf16>
    %c0_30 = arith.constant 0 : index
    %c0_31 = arith.constant 0 : index
    %78 = vector.load %arg5[%c0_30, %c0_31] : memref<480x480xbf16, #tpu.memory_space<vmem>>, vector<480x480xbf16>
    %cst_32 = arith.constant dense<0.000000e+00> : vector<2x480xf32>
    %79 = tpu.matmul %77, %78, %cst_32 {dimension_numbers = #tpu.dot_dimension_numbers<[1], [0], [0], [1], [0, 0, 1, 1], [], []>} : vector<2x480xbf16>, vector<480x480xbf16>, vector<2x480xf32> -> vector<2x480xf32>
    %c0_33 = arith.constant 0 : index
    %c0_34 = arith.constant 0 : index
    %80 = vector.load %arg6[%c0_33, %c0_34] : memref<1x480xf32, #tpu.memory_space<vmem>>, vector<1x480xf32>
    %81 = vector.broadcast %80 : vector<1x480xf32> to vector<2x480xf32>
    %82 = arith.addf %79, %81 : vector<2x480xf32>
    %83 = arith.addf %82, %76 : vector<2x480xf32>
    %c0_35 = arith.constant 0 : index
    %c0_36 = arith.constant 0 : index
    %84 = vector.load %arg7[%c0_35, %c0_36] : memref<1x480xf32, #tpu.memory_space<vmem>>, vector<1x480xf32>
    %c0_37 = arith.constant 0 : index
    %c0_38 = arith.constant 0 : index
    %85 = vector.load %arg8[%c0_37, %c0_38] : memref<1x480xf32, #tpu.memory_space<vmem>>, vector<1x480xf32>
    %cst_39 = arith.constant dense<0.000000e+00> : vector<2xf32>
    %86 = vector.multi_reduction <add>, %83, %cst_39 [1] : vector<2x480xf32> to vector<2xf32>
    %87 = vector.shape_cast %86 : vector<2xf32> to vector<2x1xf32>
    %cst_40 = arith.constant 4.800000e+02 : f32
    %88 = vector.broadcast %cst_40 : f32 to vector<2x1xf32>
    %89 = arith.divf %87, %88 : vector<2x1xf32>
    %90 = vector.broadcast %89 : vector<2x1xf32> to vector<2x480xf32>
    %91 = arith.subf %83, %90 : vector<2x480xf32>
    %92 = arith.mulf %91, %91 : vector<2x480xf32>
    %cst_41 = arith.constant dense<0.000000e+00> : vector<2xf32>
    %93 = vector.multi_reduction <add>, %92, %cst_41 [1] : vector<2x480xf32> to vector<2xf32>
    %94 = vector.shape_cast %93 : vector<2xf32> to vector<2x1xf32>
    %cst_42 = arith.constant 4.800000e+02 : f32
    %95 = vector.broadcast %cst_42 : f32 to vector<2x1xf32>
    %96 = arith.divf %94, %95 : vector<2x1xf32>
    %97 = vector.broadcast %89 : vector<2x1xf32> to vector<2x480xf32>
    %98 = arith.subf %83, %97 : vector<2x480xf32>
    %cst_43 = arith.constant 9.99999996E-13 : f32
    %99 = vector.broadcast %cst_43 : f32 to vector<2x1xf32>
    %100 = arith.addf %96, %99 : vector<2x1xf32>
    %101 = math.rsqrt %100 : vector<2x1xf32>
    %102 = vector.broadcast %101 : vector<2x1xf32> to vector<2x480xf32>
    %103 = arith.mulf %98, %102 : vector<2x480xf32>
    %104 = vector.broadcast %84 : vector<1x480xf32> to vector<2x480xf32>
    %105 = arith.mulf %103, %104 : vector<2x480xf32>
    %106 = vector.broadcast %85 : vector<1x480xf32> to vector<2x480xf32>
    %107 = arith.addf %105, %106 : vector<2x480xf32>
    %108 = arith.truncf %107 : vector<2x480xf32> to vector<2x480xbf16>
    %c0_44 = arith.constant 0 : index
    %c0_45 = arith.constant 0 : index
    %109 = vector.load %arg9[%c0_44, %c0_45] : memref<480x1024xbf16, #tpu.memory_space<vmem>>, vector<480x1024xbf16>
    %cst_46 = arith.constant dense<0.000000e+00> : vector<2x1024xf32>
    %110 = tpu.matmul %108, %109, %cst_46 {dimension_numbers = #tpu.dot_dimension_numbers<[1], [0], [0], [1], [0, 0, 1, 1], [], []>} : vector<2x480xbf16>, vector<480x1024xbf16>, vector<2x1024xf32> -> vector<2x1024xf32>
    %c0_47 = arith.constant 0 : index
    %c0_48 = arith.constant 0 : index
    %111 = vector.load %arg10[%c0_47, %c0_48] : memref<1x1024xf32, #tpu.memory_space<vmem>>, vector<1x1024xf32>
    %112 = vector.broadcast %111 : vector<1x1024xf32> to vector<2x1024xf32>
    %113 = arith.addf %110, %112 : vector<2x1024xf32>
    %cst_49 = arith.constant 0.000000e+00 : f32
    %114 = vector.broadcast %cst_49 : f32 to vector<2x1024xf32>
    %115 = arith.maximumf %113, %114 : vector<2x1024xf32>
    %c0_50 = arith.constant 0 : index
    %c0_51 = arith.constant 0 : index
    %116 = vector.load %arg11[%c0_50, %c0_51] : memref<1x1024xf32, #tpu.memory_space<vmem>>, vector<1x1024xf32>
    %c0_52 = arith.constant 0 : index
    %c0_53 = arith.constant 0 : index
    %117 = vector.load %arg12[%c0_52, %c0_53] : memref<1x1024xf32, #tpu.memory_space<vmem>>, vector<1x1024xf32>
    %cst_54 = arith.constant dense<0.000000e+00> : vector<2xf32>
    %118 = vector.multi_reduction <add>, %115, %cst_54 [1] : vector<2x1024xf32> to vector<2xf32>
    %119 = vector.shape_cast %118 : vector<2xf32> to vector<2x1xf32>
    %cst_55 = arith.constant 1.024000e+03 : f32
    %120 = vector.broadcast %cst_55 : f32 to vector<2x1xf32>
    %121 = arith.divf %119, %120 : vector<2x1xf32>
    %122 = vector.broadcast %121 : vector<2x1xf32> to vector<2x1024xf32>
    %123 = arith.subf %115, %122 : vector<2x1024xf32>
    %124 = arith.mulf %123, %123 : vector<2x1024xf32>
    %cst_56 = arith.constant dense<0.000000e+00> : vector<2xf32>
    %125 = vector.multi_reduction <add>, %124, %cst_56 [1] : vector<2x1024xf32> to vector<2xf32>
    %126 = vector.shape_cast %125 : vector<2xf32> to vector<2x1xf32>
    %cst_57 = arith.constant 1.024000e+03 : f32
    %127 = vector.broadcast %cst_57 : f32 to vector<2x1xf32>
    %128 = arith.divf %126, %127 : vector<2x1xf32>
    %129 = vector.broadcast %121 : vector<2x1xf32> to vector<2x1024xf32>
    %130 = arith.subf %115, %129 : vector<2x1024xf32>
    %cst_58 = arith.constant 9.99999974E-6 : f32
    %131 = vector.broadcast %cst_58 : f32 to vector<2x1xf32>
    %132 = arith.addf %128, %131 : vector<2x1xf32>
    %133 = math.rsqrt %132 : vector<2x1xf32>
    %134 = vector.broadcast %133 : vector<2x1xf32> to vector<2x1024xf32>
    %135 = arith.mulf %130, %134 : vector<2x1024xf32>
    %136 = vector.broadcast %116 : vector<1x1024xf32> to vector<2x1024xf32>
    %137 = arith.mulf %135, %136 : vector<2x1024xf32>
    %138 = vector.broadcast %117 : vector<1x1024xf32> to vector<2x1024xf32>
    %139 = arith.addf %137, %138 : vector<2x1024xf32>
    %140 = arith.truncf %139 : vector<2x1024xf32> to vector<2x1024xbf16>
    %c0_59 = arith.constant 0 : index
    %c0_60 = arith.constant 0 : index
    %141 = vector.load %arg13[%c0_59, %c0_60] : memref<1024x128xbf16, #tpu.memory_space<vmem>>, vector<1024x128xbf16>
    %cst_61 = arith.constant dense<0.000000e+00> : vector<2x128xf32>
    %142 = tpu.matmul %140, %141, %cst_61 {dimension_numbers = #tpu.dot_dimension_numbers<[1], [0], [0], [1], [0, 0, 1, 1], [], []>} : vector<2x1024xbf16>, vector<1024x128xbf16>, vector<2x128xf32> -> vector<2x128xf32>
    %c0_62 = arith.constant 0 : index
    %c0_63 = arith.constant 0 : index
    %143 = vector.load %arg14[%c0_62, %c0_63] : memref<1x128xf32, #tpu.memory_space<vmem>>, vector<1x128xf32>
    %144 = vector.broadcast %143 : vector<1x128xf32> to vector<2x128xf32>
    %145 = arith.addf %142, %144 : vector<2x128xf32>
    %c0_64 = arith.constant 0 : index
    %c0_65 = arith.constant 0 : index
    %146 = vector.load %arg15[%c0_64, %c0_65] : memref<2x128xf32, #tpu.memory_space<vmem>>, vector<2x128xf32>
    tpu.vector_store %arg15[%c0_64, %c0_65], %145 {strides = array<i32>} : memref<2x128xf32, #tpu.memory_space<vmem>>, vector<2x128xf32>,
    return
  }
  func.func @transform_0(%arg0: i32) -> (i32, i32, i32) {
    %c0_i32 = arith.constant 0 : i32
    %c0_i32_0 = arith.constant 0 : i32
    %c0_i32_1 = arith.constant 0 : i32
    return %arg0, %c0_i32, %c0_i32_0 : i32, i32, i32
  }
  func.func @transform_1(%arg0: i32) -> (i32, i32) {
    %c0_i32 = arith.constant 0 : i32
    %c0_i32_0 = arith.constant 0 : i32
    %c0_i32_1 = arith.constant 0 : i32
    return %c0_i32, %c0_i32_0 : i32, i32
  }
  func.func @transform_2(%arg0: i32) -> (i32, i32) {
    %c0_i32 = arith.constant 0 : i32
    %c0_i32_0 = arith.constant 0 : i32
    %c0_i32_1 = arith.constant 0 : i32
    return %c0_i32, %c0_i32_0 : i32, i32
  }
  func.func @transform_3(%arg0: i32) -> (i32, i32) {
    %c0_i32 = arith.constant 0 : i32
    %c0_i32_0 = arith.constant 0 : i32
    %c0_i32_1 = arith.constant 0 : i32
    return %c0_i32, %c0_i32_0 : i32, i32
  }
  func.func @transform_4(%arg0: i32) -> (i32, i32) {
    %c0_i32 = arith.constant 0 : i32
    %c0_i32_0 = arith.constant 0 : i32
    %c0_i32_1 = arith.constant 0 : i32
    return %c0_i32, %c0_i32_0 : i32, i32
  }
  func.func @transform_5(%arg0: i32) -> (i32, i32) {
    %c0_i32 = arith.constant 0 : i32
    %c0_i32_0 = arith.constant 0 : i32
    %c0_i32_1 = arith.constant 0 : i32
    return %c0_i32, %c0_i32_0 : i32, i32
  }
  func.func @transform_6(%arg0: i32) -> (i32, i32) {
    %c0_i32 = arith.constant 0 : i32
    %c0_i32_0 = arith.constant 0 : i32
    %c0_i32_1 = arith.constant 0 : i32
    return %c0_i32, %c0_i32_0 : i32, i32
  }
  func.func @transform_7(%arg0: i32) -> (i32, i32) {
    %c0_i32 = arith.constant 0 : i32
    %c0_i32_0 = arith.constant 0 : i32
    %c0_i32_1 = arith.constant 0 : i32
    return %c0_i32, %c0_i32_0 : i32, i32
  }
  func.func @transform_8(%arg0: i32) -> (i32, i32) {
    %c0_i32 = arith.constant 0 : i32
    %c0_i32_0 = arith.constant 0 : i32
    %c0_i32_1 = arith.constant 0 : i32
    return %c0_i32, %c0_i32_0 : i32, i32
  }
  func.func @transform_9(%arg0: i32) -> (i32, i32) {
    %c0_i32 = arith.constant 0 : i32
    %c0_i32_0 = arith.constant 0 : i32
    %c0_i32_1 = arith.constant 0 : i32
    return %c0_i32, %c0_i32_0 : i32, i32
  }
  func.func @transform_10(%arg0: i32) -> (i32, i32) {
    %c0_i32 = arith.constant 0 : i32
    %c0_i32_0 = arith.constant 0 : i32
    %c0_i32_1 = arith.constant 0 : i32
    return %c0_i32, %c0_i32_0 : i32, i32
  }
  func.func @transform_11(%arg0: i32) -> (i32, i32) {
    %c0_i32 = arith.constant 0 : i32
    %c0_i32_0 = arith.constant 0 : i32
    %c0_i32_1 = arith.constant 0 : i32
    return %c0_i32, %c0_i32_0 : i32, i32
  }
  func.func @transform_12(%arg0: i32) -> (i32, i32) {
    %c0_i32 = arith.constant 0 : i32
    %c0_i32_0 = arith.constant 0 : i32
    %c0_i32_1 = arith.constant 0 : i32
    return %c0_i32, %c0_i32_0 : i32, i32
  }
  func.func @transform_13(%arg0: i32) -> (i32, i32) {
    %c0_i32 = arith.constant 0 : i32
    %c0_i32_0 = arith.constant 0 : i32
    %c0_i32_1 = arith.constant 0 : i32
    return %c0_i32, %c0_i32_0 : i32, i32
  }
  func.func @transform_14(%arg0: i32) -> (i32, i32) {
    %c0_i32 = arith.constant 0 : i32
    %c0_i32_0 = arith.constant 0 : i32
    return %arg0, %c0_i32 : i32, i32
  }
}

</mosaic_0001>

<llo_original>
// kernel: tpu_custom_call.1
$region0: #{tpu_custom_call.1}
  #allocation0 [shape = 'u32[]', space=smem, size = 0x4, offset = 0x4, fixed_abs, tag = 'smem constant byte address 0x4 - core index']
  #allocation1 [shape = 'u32[72,128]{1,0:T(1,128)}', space=vmem, size = 0x9000, scoped, tag = 'internal scratch']
  %s0 = inlined_call_operand.hbm [shape: bf16[2,8,480], index: 0, kind: input, shape index: {}]
  %s1 = inlined_call_operand.hbm [shape: f32[1,480], index: 1, kind: input, shape index: {}]
  %s2 = inlined_call_operand.hbm [shape: f32[1,480], index: 2, kind: input, shape index: {}]
  %s3 = inlined_call_operand.hbm [shape: f32[1,480], index: 3, kind: input, shape index: {}]
  %s4 = inlined_call_operand.hbm [shape: bf16[480,480], index: 4, kind: input, shape index: {}]
  %s5 = inlined_call_operand.hbm [shape: f32[1,480], index: 5, kind: input, shape index: {}]
  %s6 = inlined_call_operand.hbm [shape: f32[1,480], index: 6, kind: input, shape index: {}]
  %s7 = inlined_call_operand.hbm [shape: f32[1,480], index: 7, kind: input, shape index: {}]
  %s8 = inlined_call_operand.hbm [shape: bf16[480,1024], index: 8, kind: input, shape index: {}]
  %s9 = inlined_call_operand.vmem [shape: f32[1,1024], index: 9, kind: input, shape index: {}]
  %s10 = inlined_call_operand.hbm [shape: f32[1,1024], index: 10, kind: input, shape index: {}]
  %s11 = inlined_call_operand.hbm [shape: f32[1,1024], index: 11, kind: input, shape index: {}]
  %s12 = inlined_call_operand.hbm [shape: bf16[1024,128], index: 12, kind: input, shape index: {}]
  %s13 = inlined_call_operand.vmem [shape: f32[1,128], index: 13, kind: input, shape index: {}]
  %s14 = inlined_call_operand.hbm [shape: f32[2,128], index: 14, kind: output, shape index: {}]
  %s15 = sld [smem:[#allocation0]]
  $region114: #{tpu_custom_call.1} parent=0
    _
  %s17 = ssub.s32 1, %s15
  %s18 = scalar_select 0, %s17, %s15
  $region1: #{tpu_custom_call.1} parent=0
    #allocation2 [shape = 'u8[16384]{0}', space=vmem, size = 0x4000, scoped, tag = 'input window, operand 0, single buffered']
    #allocation3 [shape = 's32[1]{0}', space=sflag, size = 0x4, scoped, tag = 'scoped memory for tpu_custom_call.1']
    #allocation4 [shape = 's32[1]{0}', space=sflag, size = 0x4, scoped, tag = 'scoped memory for tpu_custom_call.1']
    #allocation5 [shape = 'u8[2048]{0}', space=vmem, size = 0x800, scoped, tag = 'input window, operand 1, single buffered']
    #allocation6 [shape = 's32[1]{0}', space=sflag, size = 0x4, scoped, tag = 'scoped memory for tpu_custom_call.1']
    #allocation7 [shape = 'u8[2048]{0}', space=vmem, size = 0x800, scoped, tag = 'input window, operand 2, single buffered']
    #allocation8 [shape = 'u8[2048]{0}', space=vmem, size = 0x800, scoped, tag = 'input window, operand 3, single buffered']
    #allocation9 [shape = 's32[1]{0}', space=sflag, size = 0x4, scoped, tag = 'scoped memory for tpu_custom_call.1']
    #allocation10 [shape = 'u8[491520]{0}', space=vmem, size = 0x78000, scoped, tag = 'input window, operand 4, single buffered']
    #allocation11 [shape = 'u8[2048]{0}', space=vmem, size = 0x800, scoped, tag = 'input window, operand 5, single buffered']
    #allocation12 [shape = 's32[1]{0}', space=sflag, size = 0x4, scoped, tag = 'scoped memory for tpu_custom_call.1']
    #allocation13 [shape = 'u8[2048]{0}', space=vmem, size = 0x800, scoped, tag = 'input window, operand 6, single buffered']
    #allocation14 [shape = 'u8[2048]{0}', space=vmem, size = 0x800, scoped, tag = 'input window, operand 7, single buffered']
    #allocation15 [shape = 's32[1]{0}', space=sflag, size = 0x4, scoped, tag = 'scoped memory for tpu_custom_call.1']
    #allocation16 [shape = 'u8[983040]{0}', space=vmem, size = 0xf0000, scoped, tag = 'input window, operand 8, single buffered']
    #allocation17 [shape = 'u8[4096]{0}', space=vmem, size = 0x1000, scoped, tag = 'input window, operand 10, single buffered']
    #allocation18 [shape = 's32[1]{0}', space=sflag, size = 0x4, scoped, tag = 'scoped memory for tpu_custom_call.1']
    #allocation19 [shape = 'u8[4096]{0}', space=vmem, size = 0x1000, scoped, tag = 'input window, operand 11, single buffered']
    #allocation20 [shape = 'u8[262144]{0}', space=vmem, size = 0x40000, scoped, tag = 'input window, operand 12, single buffered']
    #allocation21 [shape = 's32[1]{0}', space=sflag, size = 0x4, scoped, tag = 'scoped memory for tpu_custom_call.1']
    #allocation22 [shape = 'u8[1024]{0}', space=vmem, size = 0x400, scoped, tag = 'output window, operand 0, single buffered']
    %19 = vsyncpa [#allocation3], 0
    %20 = vsyncpa [#allocation6], 0
    %21 = vsyncpa [#allocation9], 0
    %22 = vsyncpa [#allocation12], 0
    %23 = vsyncpa [#allocation15], 0
    %24 = vsyncpa [#allocation18], 0
    %25 = vsyncpa [#allocation21], 0
    %26 = vsyncpa [#allocation4], 0
    // Predicated region
    $region2: #{tpu_custom_call.1} parent=1 // pred_check
      _
    $region3: #{tpu_custom_call.1} parent=1 // pred_check_branch
      %28 = sbr.rel (0) target = $region5
    $region4: #{tpu_custom_call.1} parent=1 // pred_region
      %30 = vsyncadd [#allocation3], 0
      %s31 = sshll.u32 %s0, 4
      %s32 = int_to_ptr.hbm [resolvable:$true] %s31
      %s33 = sshll.u32 [#allocation2], 4
      %s34 = int_to_ptr.vmem [resolvable:$true] %s33
      %39 = dma.hbm_to_vmem [thread:$0]  %s32, 512, %s34, [#allocation3], 256, 256, 16
    $region5: #{tpu_custom_call.1} parent=1 // pred_fallthru
      _
    // Predicated region
    $region6: #{tpu_custom_call.1} parent=1 // pred_check
      _
    $region7: #{tpu_custom_call.1} parent=1 // pred_check_branch
      %41 = sbr.rel (0) target = $region9
    $region8: #{tpu_custom_call.1} parent=1 // pred_region
      %43 = vsyncadd [#allocation6], 0
      %s45 = sshll.u32 %s1, 4
      %s46 = int_to_ptr.hbm [resolvable:$true] %s45
      %s47 = sshll.u32 [#allocation5], 4
      %s48 = int_to_ptr.vmem [resolvable:$true] %s47
      %50 = dma.hbm_to_vmem [thread:$0]  %s46, 64, %s48, [#allocation6]
    $region9: #{tpu_custom_call.1} parent=1 // pred_fallthru
      _
    // Predicated region
    $region10: #{tpu_custom_call.1} parent=1 // pred_check
      _
    $region11: #{tpu_custom_call.1} parent=1 // pred_check_branch
      %52 = sbr.rel (0) target = $region13
    $region12: #{tpu_custom_call.1} parent=1 // pred_region
      %54 = vsyncadd [#allocation6], 0
      %s56 = sshll.u32 %s2, 4
      %s57 = int_to_ptr.hbm [resolvable:$true] %s56
      %s58 = sshll.u32 [#allocation7], 4
      %s59 = int_to_ptr.vmem [resolvable:$true] %s58
      %61 = dma.hbm_to_vmem [thread:$0]  %s57, 64, %s59, [#allocation6]
    $region13: #{tpu_custom_call.1} parent=1 // pred_fallthru
      _
    // Predicated region
    $region14: #{tpu_custom_call.1} parent=1 // pred_check
      _
    $region15: #{tpu_custom_call.1} parent=1 // pred_check_branch
      %63 = sbr.rel (0) target = $region17
    $region16: #{tpu_custom_call.1} parent=1 // pred_region
      %65 = vsyncadd [#allocation9], 0
      %s67 = sshll.u32 %s3, 4
      %s68 = int_to_ptr.hbm [resolvable:$true] %s67
      %s69 = sshll.u32 [#allocation8], 4
      %s70 = int_to_ptr.vmem [resolvable:$true] %s69
      %72 = dma.hbm_to_vmem [thread:$0]  %s68, 64, %s70, [#allocation9]
    $region17: #{tpu_custom_call.1} parent=1 // pred_fallthru
      _
    // Predicated region
    $region18: #{tpu_custom_call.1} parent=1 // pred_check
      _
    $region19: #{tpu_custom_call.1} parent=1 // pred_check_branch
      %74 = sbr.rel (0) target = $region21
    $region20: #{tpu_custom_call.1} parent=1 // pred_region
      %76 = vsyncadd [#allocation9], 0
      %s77 = sshll.u32 %s4, 4
      %s78 = int_to_ptr.hbm [resolvable:$true] %s77
      %s79 = sshll.u32 [#allocation10], 4
      %s80 = int_to_ptr.vmem [resolvable:$true] %s79
      %85 = dma.hbm_to_vmem [thread:$0]  %s78, 15360, %s80, [#allocation9], 256, 256, 16
    $region21: #{tpu_custom_call.1} parent=1 // pred_fallthru
      _
    // Predicated region
    $region22: #{tpu_custom_call.1} parent=1 // pred_check
      _
    $region23: #{tpu_custom_call.1} parent=1 // pred_check_branch
      %87 = sbr.rel (0) target = $region25
    $region24: #{tpu_custom_call.1} parent=1 // pred_region
      %89 = vsyncadd [#allocation12], 0
      %s91 = sshll.u32 %s5, 4
      %s92 = int_to_ptr.hbm [resolvable:$true] %s91
      %s93 = sshll.u32 [#allocation11], 4
      %s94 = int_to_ptr.vmem [resolvable:$true] %s93
      %96 = dma.hbm_to_vmem [thread:$0]  %s92, 64, %s94, [#allocation12]
    $region25: #{tpu_custom_call.1} parent=1 // pred_fallthru
      _
    // Predicated region
    $region26: #{tpu_custom_call.1} parent=1 // pred_check
      _
    $region27: #{tpu_custom_call.1} parent=1 // pred_check_branch
      %98 = sbr.rel (0) target = $region29
    $region28: #{tpu_custom_call.1} parent=1 // pred_region
      %100 = vsyncadd [#allocation12], 0
      %s102 = sshll.u32 %s6, 4
      %s103 = int_to_ptr.hbm [resolvable:$true] %s102
      %s104 = sshll.u32 [#allocation13], 4
      %s105 = int_to_ptr.vmem [resolvable:$true] %s104
      %107 = dma.hbm_to_vmem [thread:$0]  %s103, 64, %s105, [#allocation12]
    $region29: #{tpu_custom_call.1} parent=1 // pred_fallthru
      _
    // Predicated region
    $region30: #{tpu_custom_call.1} parent=1 // pred_check
      _
    $region31: #{tpu_custom_call.1} parent=1 // pred_check_branch
      %109 = sbr.rel (0) target = $region33
    $region32: #{tpu_custom_call.1} parent=1 // pred_region
      %111 = vsyncadd [#allocation15], 0
      %s113 = sshll.u32 %s7, 4
      %s114 = int_to_ptr.hbm [resolvable:$true] %s113
      %s115 = sshll.u32 [#allocation14], 4
      %s116 = int_to_ptr.vmem [resolvable:$true] %s115
      %118 = dma.hbm_to_vmem [thread:$0]  %s114, 64, %s116, [#allocation15]
    $region33: #{tpu_custom_call.1} parent=1 // pred_fallthru
      _
    // Predicated region
    $region34: #{tpu_custom_call.1} parent=1 // pred_check
      _
    $region35: #{tpu_custom_call.1} parent=1 // pred_check_branch
      %120 = sbr.rel (0) target = $region37
    $region36: #{tpu_custom_call.1} parent=1 // pred_region
      %122 = vsyncadd [#allocation15], 0
      %s123 = sshll.u32 %s8, 4
      %s124 = int_to_ptr.hbm [resolvable:$true] %s123
      %s125 = sshll.u32 [#allocation16], 4
      %s126 = int_to_ptr.vmem [resolvable:$true] %s125
      %131 = dma.hbm_to_vmem [thread:$0]  %s124, 30720, %s126, [#allocation15], 512, 512, 32
    $region37: #{tpu_custom_call.1} parent=1 // pred_fallthru
      _
    // Predicated region
    $region38: #{tpu_custom_call.1} parent=1 // pred_check
      _
    $region39: #{tpu_custom_call.1} parent=1 // pred_check_branch
      %133 = sbr.rel (0) target = $region41
    $region40: #{tpu_custom_call.1} parent=1 // pred_region
      _
    $region41: #{tpu_custom_call.1} parent=1 // pred_fallthru
      _
    // Predicated region
    $region42: #{tpu_custom_call.1} parent=1 // pred_check
      _
    $region43: #{tpu_custom_call.1} parent=1 // pred_check_branch
      %135 = sbr.rel (0) target = $region45
    $region44: #{tpu_custom_call.1} parent=1 // pred_region
      %137 = vsyncadd [#allocation18], 0
      %s139 = sshll.u32 %s10, 4
      %s140 = int_to_ptr.hbm [resolvable:$true] %s139
      %s141 = sshll.u32 [#allocation17], 4
      %s142 = int_to_ptr.vmem [resolvable:$true] %s141
      %144 = dma.hbm_to_vmem [thread:$0]  %s140, 128, %s142, [#allocation18]
    $region45: #{tpu_custom_call.1} parent=1 // pred_fallthru
      _
    // Predicated region
    $region46: #{tpu_custom_call.1} parent=1 // pred_check
      _
    $region47: #{tpu_custom_call.1} parent=1 // pred_check_branch
      %146 = sbr.rel (0) target = $region49
    $region48: #{tpu_custom_call.1} parent=1 // pred_region
      %148 = vsyncadd [#allocation18], 0
      %s150 = sshll.u32 %s11, 4
      %s151 = int_to_ptr.hbm [resolvable:$true] %s150
      %s152 = sshll.u32 [#allocation19], 4
      %s153 = int_to_ptr.vmem [resolvable:$true] %s152
      %155 = dma.hbm_to_vmem [thread:$0]  %s151, 128, %s153, [#allocation18]
    $region49: #{tpu_custom_call.1} parent=1 // pred_fallthru
      _
    // Predicated region
    $region50: #{tpu_custom_call.1} parent=1 // pred_check
      _
    $region51: #{tpu_custom_call.1} parent=1 // pred_check_branch
      %157 = sbr.rel (0) target = $region53
    $region52: #{tpu_custom_call.1} parent=1 // pred_region
      %159 = vsyncadd [#allocation21], 0
      %s160 = sshll.u32 %s12, 4
      %s161 = int_to_ptr.hbm [resolvable:$true] %s160
      %s162 = sshll.u32 [#allocation20], 4
      %s163 = int_to_ptr.vmem [resolvable:$true] %s162
      %168 = dma.hbm_to_vmem [thread:$0]  %s161, 8192, %s163, [#allocation21], 64, 64, 4
    $region53: #{tpu_custom_call.1} parent=1 // pred_fallthru
      _
    // Predicated region
    $region54: #{tpu_custom_call.1} parent=1 // pred_check
      _
    $region55: #{tpu_custom_call.1} parent=1 // pred_check_branch
      %170 = sbr.rel (0) target = $region57
    $region56: #{tpu_custom_call.1} parent=1 // pred_region
      _
    $region57: #{tpu_custom_call.1} parent=1 // pred_fallthru
      _
    // Predicated region
    $region58: #{tpu_custom_call.1} parent=1 // pred_check
      _
    $region59: #{tpu_custom_call.1} parent=1 // pred_check_branch
      %172 = sbr.rel (0) target = $region61
    $region60: #{tpu_custom_call.1} parent=1 // pred_region
      %174 = dma.done [#allocation3], 512
    $region61: #{tpu_custom_call.1} parent=1 // pred_fallthru
      _
    // Predicated region
    $region62: #{tpu_custom_call.1} parent=1 // pred_check
      _
    $region63: #{tpu_custom_call.1} parent=1 // pred_check_branch
      %176 = sbr.rel (0) target = $region65
    $region64: #{tpu_custom_call.1} parent=1 // pred_region
      %178 = dma.done [#allocation6], 64
    $region65: #{tpu_custom_call.1} parent=1 // pred_fallthru
      _
    // Predicated region
    $region66: #{tpu_custom_call.1} parent=1 // pred_check
      _
    $region67: #{tpu_custom_call.1} parent=1 // pred_check_branch
      %180 = sbr.rel (0) target = $region69
    $region68: #{tpu_custom_call.1} parent=1 // pred_region
      %182 = dma.done [#allocation6], 64
    $region69: #{tpu_custom_call.1} parent=1 // pred_fallthru
      _
    // Predicated region
    $region70: #{tpu_custom_call.1} parent=1 // pred_check
      _
    $region71: #{tpu_custom_call.1} parent=1 // pred_check_branch
      %184 = sbr.rel (0) target = $region73
    $region72: #{tpu_custom_call.1} parent=1 // pred_region
      %186 = dma.done [#allocation9], 64
    $region73: #{tpu_custom_call.1} parent=1 // pred_fallthru
      _
    // Predicated region
    $region74: #{tpu_custom_call.1} parent=1 // pred_check
      _
    $region75: #{tpu_custom_call.1} parent=1 // pred_check_branch
      %188 = sbr.rel (0) target = $region77
    $region76: #{tpu_custom_call.1} parent=1 // pred_region
      %190 = dma.done [#allocation9], 15360
    $region77: #{tpu_custom_call.1} parent=1 // pred_fallthru
      _
    // Predicated region
    $region78: #{tpu_custom_call.1} parent=1 // pred_check
      _
    $region79: #{tpu_custom_call.1} parent=1 // pred_check_branch
      %192 = sbr.rel (0) target = $region81
    $region80: #{tpu_custom_call.1} parent=1 // pred_region
      %194 = dma.done [#allocation12], 64
    $region81: #{tpu_custom_call.1} parent=1 // pred_fallthru
      _
    // Predicated region
    $region82: #{tpu_custom_call.1} parent=1 // pred_check
      _
    $region83: #{tpu_custom_call.1} parent=1 // pred_check_branch
      %196 = sbr.rel (0) target = $region85
    $region84: #{tpu_custom_call.1} parent=1 // pred_region
      %198 = dma.done [#allocation12], 64
    $region85: #{tpu_custom_call.1} parent=1 // pred_fallthru
      _
    // Predicated region
    $region86: #{tpu_custom_call.1} parent=1 // pred_check
      _
    $region87: #{tpu_custom_call.1} parent=1 // pred_check_branch
      %200 = sbr.rel (0) target = $region89
    $region88: #{tpu_custom_call.1} parent=1 // pred_region
      %202 = dma.done [#allocation15], 64
    $region89: #{tpu_custom_call.1} parent=1 // pred_fallthru
      _
    // Predicated region
    $region90: #{tpu_custom_call.1} parent=1 // pred_check
      _
    $region91: #{tpu_custom_call.1} parent=1 // pred_check_branch
      %204 = sbr.rel (0) target = $region93
    $region92: #{tpu_custom_call.1} parent=1 // pred_region
      %206 = dma.done [#allocation15], 30720
    $region93: #{tpu_custom_call.1} parent=1 // pred_fallthru
      _
    // Predicated region
    $region94: #{tpu_custom_call.1} parent=1 // pred_check
      _
    $region95: #{tpu_custom_call.1} parent=1 // pred_check_branch
      %208 = sbr.rel (0) target = $region97
    $region96: #{tpu_custom_call.1} parent=1 // pred_region
      %210 = dma.done [#allocation18], 128
    $region97: #{tpu_custom_call.1} parent=1 // pred_fallthru
      _
    // Predicated region
    $region98: #{tpu_custom_call.1} parent=1 // pred_check
      _
    $region99: #{tpu_custom_call.1} parent=1 // pred_check_branch
      %212 = sbr.rel (0) target = $region101
    $region100: #{tpu_custom_call.1} parent=1 // pred_region
      %214 = dma.done [#allocation18], 128
    $region101: #{tpu_custom_call.1} parent=1 // pred_fallthru
      _
    // Predicated region
    $region102: #{tpu_custom_call.1} parent=1 // pred_check
      _
    $region103: #{tpu_custom_call.1} parent=1 // pred_check_branch
      %216 = sbr.rel (0) target = $region105
    $region104: #{tpu_custom_call.1} parent=1 // pred_region
      %218 = dma.done [#allocation21], 8192
    $region105: #{tpu_custom_call.1} parent=1 // pred_fallthru
      _
    %v220 = vld [vmem:[#allocation2] sm:$0xff]
    %v221 = vld [vmem:[#allocation2 + $0x8] sm:$0xff]
    %v222 = vld [vmem:[#allocation2 + $0x10] sm:$0xff]
    %v223 = vld [vmem:[#allocation2 + $0x18] sm:$0xff]
    %v224 = vunpack.c.l.bf16 %v220
    %v225 = vunpack.c.h.bf16 %v220
    %v226 = vunpack.c.l.bf16 %v221
    %v227 = vunpack.c.h.bf16 %v221
    %v228 = vunpack.c.l.bf16 %v222
    %v229 = vunpack.c.h.bf16 %v222
    %v230 = vunpack.c.l.bf16 %v223
    %v231 = vunpack.c.h.bf16 %v223
    %v232 = vld [vmem:[#allocation5] sm:$0xf]
    %v233 = vld [vmem:[#allocation7] sm:$0xf]
    %v234 = vadd.f32 %v224, %v225
    %v235 = vadd.f32 %v234, %v226
    %vm236 = vcmask 785408
    %v237 = vsel %vm236, %v227, 0.0
    %v238 = vadd.f32 %v235, %v237
    %239 = vadd.xlane.f32.xlu0 %v238
    %v240 = vpop.xlane.xlu0 %239
    %v241 = vadd.f32 %v228, %v229
    %v242 = vadd.f32 %v241, %v230
    %v243 = vsel %vm236, %v231, 0.0
    %v244 = vadd.f32 %v242, %v243
    %245 = vadd.xlane.f32.xlu0 %v244
    %v246 = vpop.xlane.xlu0 %245
    %v247 = vrcp.pop 480.0
    %v248 = vmul.f32 480.0, %v247
    %v249 = vsub.f32 1.0, %v248
    %v250 = vmul.f32 %v247, %v249
    %v251 = vadd.f32 %v247, %v250
    %vm252 = vweird.f32 %v247
    %v253 = vsel %vm252, %v247, %v251
    %v254 = vmul.f32 %v240, %v253
    %v255 = vmul.f32 %v246, %v253
    %v256 = vsub.f32 %v224, %v254
    %v257 = vsub.f32 %v225, %v254
    %v258 = vsub.f32 %v226, %v254
    %v259 = vsub.f32 %v227, %v254
    %v260 = vsub.f32 %v228, %v255
    %v261 = vsub.f32 %v229, %v255
    %v262 = vsub.f32 %v230, %v255
    %v263 = vsub.f32 %v231, %v255
    %v264 = vmul.f32 %v256, %v256
    %v265 = vmul.f32 %v257, %v257
    %v266 = vmul.f32 %v258, %v258
    %v267 = vmul.f32 %v259, %v259
    %v268 = vmul.f32 %v260, %v260
    %v269 = vmul.f32 %v261, %v261
    %v270 = vmul.f32 %v262, %v262
    %v271 = vmul.f32 %v263, %v263
    %v272 = vadd.f32 %v264, %v265
    %v273 = vadd.f32 %v272, %v266
    %v274 = vsel %vm236, %v267, 0.0
    %v275 = vadd.f32 %v273, %v274
    %276 = vadd.xlane.f32.xlu0 %v275
    %v277 = vpop.xlane.xlu0 %276
    %v278 = vadd.f32 %v268, %v269
    %v279 = vadd.f32 %v278, %v270
    %v280 = vsel %vm236, %v271, 0.0
    %v281 = vadd.f32 %v279, %v280
    %282 = vadd.xlane.f32.xlu0 %v281
    %v283 = vpop.xlane.xlu0 %282
    %v284 = vmul.f32 %v277, %v253
    %v285 = vmul.f32 %v283, %v253
    %v286 = vadd.f32 %v284, 1e-05
    %v287 = vadd.f32 %v285, 1e-05
    %v288 = vrsqrt.pop %v286
    %v289 = vmul.f32 %v288, %v286
    %v290 = vmul.f32 %v289, %v288
    %v291 = vmul.f32 0.5, %v290
    %v292 = vsub.f32 1.5, %v291
    %v293 = vmul.f32 %v288, %v292
    %vm294 = vweird.f32 %v286
    %vm295 = vweird.f32 %v288
    %vm296 = vmor %vm294, %vm295
    %v297 = vsel %vm296, %v288, %v293
    %v298 = vrsqrt.pop %v287
    %v299 = vmul.f32 %v298, %v287
    %v300 = vmul.f32 %v299, %v298
    %v301 = vmul.f32 0.5, %v300
    %v302 = vsub.f32 1.5, %v301
    %v303 = vmul.f32 %v298, %v302
    %vm304 = vweird.f32 %v287
    %vm305 = vweird.f32 %v298
    %vm306 = vmor %vm304, %vm305
    %v307 = vsel %vm306, %v298, %v303
    %v308 = vmul.f32 %v256, %v297
    %v309 = vmul.f32 %v257, %v297
    %v310 = vmul.f32 %v258, %v297
    %v311 = vmul.f32 %v259, %v297
    %v312 = vmul.f32 %v260, %v307
    %v313 = vmul.f32 %v261, %v307
    %v314 = vmul.f32 %v262, %v307
    %v315 = vmul.f32 %v263, %v307
    %v317 = vperm.slane %v232, 0
    %v318 = vperm.slane %v232, 1
    %v319 = vperm.slane %v232, 2
    %v320 = vperm.slane %v232, 3
    %v325 = vmul.f32 %v308, %v317
    %v326 = vmul.f32 %v309, %v318
    %v327 = vmul.f32 %v310, %v319
    %v328 = vmul.f32 %v311, %v320
    %v329 = vmul.f32 %v312, %v317
    %v330 = vmul.f32 %v313, %v318
    %v331 = vmul.f32 %v314, %v319
    %v332 = vmul.f32 %v315, %v320
    %v334 = vperm.slane %v233, 0
    %v335 = vperm.slane %v233, 1
    %v336 = vperm.slane %v233, 2
    %v337 = vperm.slane %v233, 3
    %v342 = vadd.f32 %v325, %v334
    %v343 = vadd.f32 %v326, %v335
    %v344 = vadd.f32 %v327, %v336
    %v345 = vadd.f32 %v328, %v337
    %v346 = vadd.f32 %v329, %v334
    %v347 = vadd.f32 %v330, %v335
    %v348 = vadd.f32 %v331, %v336
    %v349 = vadd.f32 %v332, %v337
    %v350 = vld [vmem:[#allocation8] sm:$0xf]
    %v352 = vperm.slane %v350, 0
    %v353 = vperm.slane %v350, 1
    %v354 = vperm.slane %v350, 2
    %v355 = vperm.slane %v350, 3
    %v360 = vmul.f32 %v342, %v352
    %v361 = vmul.f32 %v343, %v353
    %v362 = vmul.f32 %v344, %v354
    %v363 = vmul.f32 %v345, %v355
    %v364 = vmul.f32 %v346, %v352
    %v365 = vmul.f32 %v347, %v353
    %v366 = vmul.f32 %v348, %v354
    %v367 = vmul.f32 %v349, %v355
    %v368 = vadd.f32 %v360, %v361
    %v369 = vadd.f32 %v368, %v362
    %v370 = vsel %vm236, %v363, 0.0
    %v371 = vadd.f32 %v369, %v370
    %372 = vadd.xlane.f32.xlu0 %v371
    %v373 = vpop.xlane.xlu0 %372
    %v374 = vadd.f32 %v364, %v365
    %v375 = vadd.f32 %v374, %v366
    %v376 = vsel %vm236, %v367, 0.0
    %v377 = vadd.f32 %v375, %v376
    %378 = vadd.xlane.f32.xlu0 %v377
    %v379 = vpop.xlane.xlu0 %378
    %v382 = vlaneseq
    %v383 = vand.u32 %v382, 127
    %v384 = vperm.slane %v373, %v383
    %v385 = vperm.slane %v379, %v383
    %vm386 = vcmask 1041409
    %v387 = vsel %vm386, %v385, %v384
    %vm389 = vcmask 58368
    %v390 = vsel %vm389, %v387, -inf
    %391 = vmax.xlane.f32.xlu0 %v390
    %v392 = vpop.xlane.xlu0 %391
    %v394 = vperm.slane %v392, 0
    %v395 = vperm.slane %v392, 1
    %v398 = vsub.f32 %v373, %v394
    %v399 = vsub.f32 %v379, %v395
    %v400 = vmul.f32 %v398, 1.442695
    %v401 = vpow.pop %v400
    %v402 = vmul.f32 %v399, 1.442695
    %v403 = vpow.pop %v402
    %406 = vset.pattern.permute.xlu0 0
    %407 = vperm.xlu0 %406, %v401
    %v408 = vpop.permute.xlu0 %407
    %409 = vset.pattern.permute.xlu0 0
    %410 = vperm.xlu0 %409, %v403
    %v411 = vpop.permute.xlu0 %410
    %v412 = vperm.slane %v408, %v383
    %v413 = vperm.slane %v411, %v383
    %v414 = vsel %vm386, %v413, %v412
    %v416 = vsel %vm389, %v414, 0.0
    %417 = vadd.xlane.f32.xlu0 %v416
    %v418 = vpop.xlane.xlu0 %417
    %v420 = vperm.slane %v418, 0
    %v421 = vperm.slane %v418, 1
    %v424 = vrcp.pop %v420
    %v425 = vmul.f32 %v420, %v424
    %v426 = vsub.f32 1.0, %v425
    %v427 = vmul.f32 %v424, %v426
    %v428 = vadd.f32 %v424, %v427
    %vm429 = vweird.f32 %v420
    %vm430 = vweird.f32 %v424
    %vm431 = vmor %vm429, %vm430
    %v432 = vsel %vm431, %v424, %v428
    %v433 = vand.u32 2147483647, %v420
    %vm434 = vcmp.eq.f32.partialorder %v433, 8.507059e+37
    %v435 = vand.u32 %v420, 2147483648
    %v436 = vor.u32 1.1754944e-38, %v435
    %v437 = vsel %vm434, %v436, %v432
    %v438 = vmul.f32 %v401, %v437
    %v439 = vrcp.pop %v421
    %v440 = vmul.f32 %v421, %v439
    %v441 = vsub.f32 1.0, %v440
    %v442 = vmul.f32 %v439, %v441
    %v443 = vadd.f32 %v439, %v442
    %vm444 = vweird.f32 %v421
    %vm445 = vweird.f32 %v439
    %vm446 = vmor %vm444, %vm445
    %v447 = vsel %vm446, %v439, %v443
    %v448 = vand.u32 2147483647, %v421
    %vm449 = vcmp.eq.f32.partialorder %v448, 8.507059e+37
    %v450 = vand.u32 %v421, 2147483648
    %v451 = vor.u32 1.1754944e-38, %v450
    %v452 = vsel %vm449, %v451, %v447
    %v453 = vmul.f32 %v403, %v452
    %455 = vset.pattern.permute.xlu0 0
    %456 = vperm.xlu0 %455, %v438
    %v457 = vpop.permute.xlu0 %456
    %460 = vset.pattern.permute.xlu0 0
    %461 = vperm.xlu0 %460, %v453
    %v462 = vpop.permute.xlu0 %461
    %v464 = vmul.f32 %v342, %v457
    %v465 = vmul.f32 %v343, %v457
    %v466 = vmul.f32 %v344, %v457
    %v467 = vmul.f32 %v345, %v457
    %v468 = vmul.f32 %v346, %v462
    %v469 = vmul.f32 %v347, %v462
    %v470 = vmul.f32 %v348, %v462
    %v471 = vmul.f32 %v349, %v462
    %v472 = vrot.slane %v464, 4
    %v473 = vadd.f32 %v464, %v472
    %v474 = vrot.slane %v473, 2
    %v475 = vadd.f32 %v473, %v474
    %v476 = vrot.slane %v475, 1
    %v477 = vadd.f32 %v475, %v476
    %v478 = vrot.slane %v465, 4
    %v479 = vadd.f32 %v465, %v478
    %v480 = vrot.slane %v479, 2
    %v481 = vadd.f32 %v479, %v480
    %v482 = vrot.slane %v481, 1
    %v483 = vadd.f32 %v481, %v482
    %v484 = vrot.slane %v466, 4
    %v485 = vadd.f32 %v466, %v484
    %v486 = vrot.slane %v485, 2
    %v487 = vadd.f32 %v485, %v486
    %v488 = vrot.slane %v487, 1
    %v489 = vadd.f32 %v487, %v488
    %v490 = vsel %vm236, %v467, 0.0
    %v491 = vrot.slane %v490, 4
    %v492 = vadd.f32 %v490, %v491
    %v493 = vrot.slane %v492, 2
    %v494 = vadd.f32 %v492, %v493
    %v495 = vrot.slane %v494, 1
    %v496 = vadd.f32 %v494, %v495
    %v497 = vrot.slane %v468, 4
    %v498 = vadd.f32 %v468, %v497
    %v499 = vrot.slane %v498, 2
    %v500 = vadd.f32 %v498, %v499
    %v501 = vrot.slane %v500, 1
    %v502 = vadd.f32 %v500, %v501
    %v503 = vrot.slane %v469, 4
    %v504 = vadd.f32 %v469, %v503
    %v505 = vrot.slane %v504, 2
    %v506 = vadd.f32 %v504, %v505
    %v507 = vrot.slane %v506, 1
    %v508 = vadd.f32 %v506, %v507
    %v509 = vrot.slane %v470, 4
    %v510 = vadd.f32 %v470, %v509
    %v511 = vrot.slane %v510, 2
    %v512 = vadd.f32 %v510, %v511
    %v513 = vrot.slane %v512, 1
    %v514 = vadd.f32 %v512, %v513
    %v515 = vsel %vm236, %v471, 0.0
    %v516 = vrot.slane %v515, 4
    %v517 = vadd.f32 %v515, %v516
    %v518 = vrot.slane %v517, 2
    %v519 = vadd.f32 %v517, %v518
    %v520 = vrot.slane %v519, 1
    %v521 = vadd.f32 %v519, %v520
    %v522 = vpack.c.bf16 %v477, %v477
    %v523 = vpack.c.bf16 %v483, %v483
    %v524 = vpack.c.bf16 %v489, %v489
    %v525 = vpack.c.bf16 %v496, %v496
    %v526 = vpack.c.bf16 %v502, %v502
    %v527 = vpack.c.bf16 %v508, %v508
    %v528 = vpack.c.bf16 %v514, %v514
    %v529 = vpack.c.bf16 %v521, %v521
    %v530 = vld [vmem:[#allocation10] sm:$0xff]
    %v531 = vld [vmem:[#allocation10 + $0x8] sm:$0xff]
    %v532 = vld [vmem:[#allocation10 + $0x10] sm:$0xff]
    %v533 = vld [vmem:[#allocation10 + $0x18] sm:$0xff]
    %v534 = vld [vmem:[#allocation10 + $0x20] sm:$0xff]
    %v535 = vld [vmem:[#allocation10 + $0x28] sm:$0xff]
    %v536 = vld [vmem:[#allocation10 + $0x30] sm:$0xff]
    %v537 = vld [vmem:[#allocation10 + $0x38] sm:$0xff]
    %v538 = vld [vmem:[#allocation10 + $0x40] sm:$0xff]
    %v539 = vld [vmem:[#allocation10 + $0x48] sm:$0xff]
    %v540 = vld [vmem:[#allocation10 + $0x50] sm:$0xff]
    %v541 = vld [vmem:[#allocation10 + $0x58] sm:$0xff]
    %v542 = vld [vmem:[#allocation10 + $0x60] sm:$0xff]
    %v543 = vld [vmem:[#allocation10 + $0x68] sm:$0xff]
    %v544 = vld [vmem:[#allocation10 + $0x70] sm:$0xff]
    %v545 = vld [vmem:[#allocation10 + $0x78] sm:$0xff]
    %v546 = vld [vmem:[#allocation10 + $0x80] sm:$0xff]
    %v547 = vld [vmem:[#allocation10 + $0x88] sm:$0xff]
    %v548 = vld [vmem:[#allocation10 + $0x90] sm:$0xff]
    %v549 = vld [vmem:[#allocation10 + $0x98] sm:$0xff]
    %v550 = vld [vmem:[#allocation10 + $0xa0] sm:$0xff]
    %v551 = vld [vmem:[#allocation10 + $0xa8] sm:$0xff]
    %v552 = vld [vmem:[#allocation10 + $0xb0] sm:$0xff]
    %v553 = vld [vmem:[#allocation10 + $0xb8] sm:$0xff]
    %v554 = vld [vmem:[#allocation10 + $0xc0] sm:$0xff]
    %v555 = vld [vmem:[#allocation10 + $0xc8] sm:$0xff]
    %v556 = vld [vmem:[#allocation10 + $0xd0] sm:$0xff]
    %v557 = vld [vmem:[#allocation10 + $0xd8] sm:$0xff]
    %v558 = vld [vmem:[#allocation10 + $0xe0] sm:$0xff]
    %v559 = vld [vmem:[#allocation10 + $0xe8] sm:$0xff]
    %v560 = vld [vmem:[#allocation10 + $0xf0] sm:$0xff]
    %v561 = vld [vmem:[#allocation10 + $0xf8] sm:$0xff]
    %v562 = vld [vmem:[#allocation10 + $0x100] sm:$0xff]
    %v563 = vld [vmem:[#allocation10 + $0x108] sm:$0xff]
    %v564 = vld [vmem:[#allocation10 + $0x110] sm:$0xff]
    %v565 = vld [vmem:[#allocation10 + $0x118] sm:$0xff]
    %v566 = vld [vmem:[#allocation10 + $0x120] sm:$0xff]
    %v567 = vld [vmem:[#allocation10 + $0x128] sm:$0xff]
    %v568 = vld [vmem:[#allocation10 + $0x130] sm:$0xff]
    %v569 = vld [vmem:[#allocation10 + $0x138] sm:$0xff]
    %v570 = vld [vmem:[#allocation10 + $0x140] sm:$0xff]
    %v571 = vld [vmem:[#allocation10 + $0x148] sm:$0xff]
    %v572 = vld [vmem:[#allocation10 + $0x150] sm:$0xff]
    %v573 = vld [vmem:[#allocation10 + $0x158] sm:$0xff]
    %v574 = vld [vmem:[#allocation10 + $0x160] sm:$0xff]
    %v575 = vld [vmem:[#allocation10 + $0x168] sm:$0xff]
    %v576 = vld [vmem:[#allocation10 + $0x170] sm:$0xff]
    %v577 = vld [vmem:[#allocation10 + $0x178] sm:$0xff]
    %v578 = vld [vmem:[#allocation10 + $0x180] sm:$0xff]
    %v579 = vld [vmem:[#allocation10 + $0x188] sm:$0xff]
    %v580 = vld [vmem:[#allocation10 + $0x190] sm:$0xff]
    %v581 = vld [vmem:[#allocation10 + $0x198] sm:$0xff]
    %v582 = vld [vmem:[#allocation10 + $0x1a0] sm:$0xff]
    %v583 = vld [vmem:[#allocation10 + $0x1a8] sm:$0xff]
    %v584 = vld [vmem:[#allocation10 + $0x1b0] sm:$0xff]
    %v585 = vld [vmem:[#allocation10 + $0x1b8] sm:$0xff]
    %v586 = vld [vmem:[#allocation10 + $0x1c0] sm:$0xff]
    %v587 = vld [vmem:[#allocation10 + $0x1c8] sm:$0xff]
    %v588 = vld [vmem:[#allocation10 + $0x1d0] sm:$0xff]
    %v589 = vld [vmem:[#allocation10 + $0x1d8] sm:$0xff]
    %v590 = vld [vmem:[#allocation10 + $0x1e0] sm:$0xff]
    %v591 = vld [vmem:[#allocation10 + $0x1e8] sm:$0xff]
    %v592 = vld [vmem:[#allocation10 + $0x1f0] sm:$0xff]
    %v593 = vld [vmem:[#allocation10 + $0x1f8] sm:$0xff]
    %v594 = vld [vmem:[#allocation10 + $0x200] sm:$0xff]
    %v595 = vld [vmem:[#allocation10 + $0x208] sm:$0xff]
    %v596 = vld [vmem:[#allocation10 + $0x210] sm:$0xff]
    %v597 = vld [vmem:[#allocation10 + $0x218] sm:$0xff]
    %v598 = vld [vmem:[#allocation10 + $0x220] sm:$0xff]
    %v599 = vld [vmem:[#allocation10 + $0x228] sm:$0xff]
    %v600 = vld [vmem:[#allocation10 + $0x230] sm:$0xff]
    %v601 = vld [vmem:[#allocation10 + $0x238] sm:$0xff]
    %v602 = vld [vmem:[#allocation10 + $0x240] sm:$0xff]
    %v603 = vld [vmem:[#allocation10 + $0x248] sm:$0xff]
    %v604 = vld [vmem:[#allocation10 + $0x250] sm:$0xff]
    %v605 = vld [vmem:[#allocation10 + $0x258] sm:$0xff]
    %v606 = vld [vmem:[#allocation10 + $0x260] sm:$0xff]
    %v607 = vld [vmem:[#allocation10 + $0x268] sm:$0xff]
    %v608 = vld [vmem:[#allocation10 + $0x270] sm:$0xff]
    %v609 = vld [vmem:[#allocation10 + $0x278] sm:$0xff]
    %v610 = vld [vmem:[#allocation10 + $0x280] sm:$0xff]
    %v611 = vld [vmem:[#allocation10 + $0x288] sm:$0xff]
    %v612 = vld [vmem:[#allocation10 + $0x290] sm:$0xff]
    %v613 = vld [vmem:[#allocation10 + $0x298] sm:$0xff]
    %v614 = vld [vmem:[#allocation10 + $0x2a0] sm:$0xff]
    %v615 = vld [vmem:[#allocation10 + $0x2a8] sm:$0xff]
    %v616 = vld [vmem:[#allocation10 + $0x2b0] sm:$0xff]
    %v617 = vld [vmem:[#allocation10 + $0x2b8] sm:$0xff]
    %v618 = vld [vmem:[#allocation10 + $0x2c0] sm:$0xff]
    %v619 = vld [vmem:[#allocation10 + $0x2c8] sm:$0xff]
    %v620 = vld [vmem:[#allocation10 + $0x2d0] sm:$0xff]
    %v621 = vld [vmem:[#allocation10 + $0x2d8] sm:$0xff]
    %v622 = vld [vmem:[#allocation10 + $0x2e0] sm:$0xff]
    %v623 = vld [vmem:[#allocation10 + $0x2e8] sm:$0xff]
    %v624 = vld [vmem:[#allocation10 + $0x2f0] sm:$0xff]
    %v625 = vld [vmem:[#allocation10 + $0x2f8] sm:$0xff]
    %v626 = vld [vmem:[#allocation10 + $0x300] sm:$0xff]
    %v627 = vld [vmem:[#allocation10 + $0x308] sm:$0xff]
    %v628 = vld [vmem:[#allocation10 + $0x310] sm:$0xff]
    %v629 = vld [vmem:[#allocation10 + $0x318] sm:$0xff]
    %v630 = vld [vmem:[#allocation10 + $0x320] sm:$0xff]
    %v631 = vld [vmem:[#allocation10 + $0x328] sm:$0xff]
    %v632 = vld [vmem:[#allocation10 + $0x330] sm:$0xff]
    %v633 = vld [vmem:[#allocation10 + $0x338] sm:$0xff]
    %v634 = vld [vmem:[#allocation10 + $0x340] sm:$0xff]
    %v635 = vld [vmem:[#allocation10 + $0x348] sm:$0xff]
    %v636 = vld [vmem:[#allocation10 + $0x350] sm:$0xff]
    %v637 = vld [vmem:[#allocation10 + $0x358] sm:$0xff]
    %v638 = vld [vmem:[#allocation10 + $0x360] sm:$0xff]
    %v639 = vld [vmem:[#allocation10 + $0x368] sm:$0xff]
    %v640 = vld [vmem:[#allocation10 + $0x370] sm:$0xff]
    %v641 = vld [vmem:[#allocation10 + $0x378] sm:$0xff]
    %v642 = vld [vmem:[#allocation10 + $0x380] sm:$0xff]
    %v643 = vld [vmem:[#allocation10 + $0x388] sm:$0xff]
    %v644 = vld [vmem:[#allocation10 + $0x390] sm:$0xff]
    %v645 = vld [vmem:[#allocation10 + $0x398] sm:$0xff]
    %v646 = vld [vmem:[#allocation10 + $0x3a0] sm:$0xff]
    %v647 = vld [vmem:[#allocation10 + $0x3a8] sm:$0xff]
    %v648 = vld [vmem:[#allocation10 + $0x3b0] sm:$0xff]
    %v649 = vld [vmem:[#allocation10 + $0x3b8] sm:$0xff]
    %v650 = vld [vmem:[#allocation11] sm:$0xf]
    %v652 = vperm.slane %v650, 0
    %v653 = vperm.slane %v650, 1
    %v654 = vperm.slane %v650, 2
    %v655 = vperm.slane %v650, 3
    %v668 = vunpack.c.l.b16 %v522
    %v669 = vunpack.c.l.b16 %v523
    %v670 = vunpack.c.l.b16 %v524
    %v671 = vunpack.c.l.b16 %v525
    %v672 = vunpack.c.l.b16 %v526
    %v673 = vunpack.c.l.b16 %v527
    %v674 = vunpack.c.l.b16 %v528
    %v675 = vunpack.c.l.b16 %v529
    %v676 = vsel %vm386, %v672, %v668
    %v677 = vsel %vm386, %v673, %v669
    %v678 = vsel %vm386, %v674, %v670
    %v679 = vsel %vm386, %v675, %v671
    %v680 = vpack.c.b16 %v676, %v676
    %v681 = vpack.c.b16 %v677, %v677
    %v682 = vpack.c.b16 %v678, %v678
    %v683 = vpack.c.b16 %v679, %v679
    %v807 = vunpack.c.l.b16 %v530
    %v808 = vunpack.c.h.b16 %v530
    %v809 = vunpack.c.l.b16 %v531
    %v810 = vunpack.c.h.b16 %v531
    %v811 = vunpack.c.l.b16 %v532
    %v812 = vunpack.c.h.b16 %v532
    %v813 = vunpack.c.l.b16 %v533
    %v814 = vunpack.c.h.b16 %v533
    %v815 = vunpack.c.l.b16 %v534
    %v816 = vunpack.c.h.b16 %v534
    %v817 = vunpack.c.l.b16 %v535
    %v818 = vunpack.c.h.b16 %v535
    %v819 = vunpack.c.l.b16 %v536
    %v820 = vunpack.c.h.b16 %v536
    %v821 = vunpack.c.l.b16 %v537
    %v822 = vunpack.c.h.b16 %v537
    %v823 = vunpack.c.l.b16 %v538
    %v824 = vunpack.c.h.b16 %v538
    %v825 = vunpack.c.l.b16 %v539
    %v826 = vunpack.c.h.b16 %v539
    %v827 = vunpack.c.l.b16 %v540
    %v828 = vunpack.c.h.b16 %v540
    %v829 = vunpack.c.l.b16 %v541
    %v830 = vunpack.c.h.b16 %v541
    %v831 = vunpack.c.l.b16 %v542
    %v832 = vunpack.c.h.b16 %v542
    %v833 = vunpack.c.l.b16 %v543
    %v834 = vunpack.c.h.b16 %v543
    %v835 = vunpack.c.l.b16 %v544
    %v836 = vunpack.c.h.b16 %v544
    %v837 = vunpack.c.l.b16 %v545
    %v838 = vunpack.c.h.b16 %v545
    %v839 = vunpack.c.l.b16 %v546
    %v840 = vunpack.c.h.b16 %v546
    %v841 = vunpack.c.l.b16 %v547
    %v842 = vunpack.c.h.b16 %v547
    %v843 = vunpack.c.l.b16 %v548
    %v844 = vunpack.c.h.b16 %v548
    %v845 = vunpack.c.l.b16 %v549
    %v846 = vunpack.c.h.b16 %v549
    %v847 = vunpack.c.l.b16 %v550
    %v848 = vunpack.c.h.b16 %v550
    %v849 = vunpack.c.l.b16 %v551
    %v850 = vunpack.c.h.b16 %v551
    %v851 = vunpack.c.l.b16 %v552
    %v852 = vunpack.c.h.b16 %v552
    %v853 = vunpack.c.l.b16 %v553
    %v854 = vunpack.c.h.b16 %v553
    %v855 = vunpack.c.l.b16 %v554
    %v856 = vunpack.c.h.b16 %v554
    %v857 = vunpack.c.l.b16 %v555
    %v858 = vunpack.c.h.b16 %v555
    %v859 = vunpack.c.l.b16 %v556
    %v860 = vunpack.c.h.b16 %v556
    %v861 = vunpack.c.l.b16 %v557
    %v862 = vunpack.c.h.b16 %v557
    %v863 = vunpack.c.l.b16 %v558
    %v864 = vunpack.c.h.b16 %v558
    %v865 = vunpack.c.l.b16 %v559
    %v866 = vunpack.c.h.b16 %v559
    %v867 = vunpack.c.l.b16 %v560
    %v868 = vunpack.c.h.b16 %v560
    %v869 = vunpack.c.l.b16 %v561
    %v870 = vunpack.c.h.b16 %v561
    %v871 = vunpack.c.l.b16 %v562
    %v872 = vunpack.c.h.b16 %v562
    %v873 = vunpack.c.l.b16 %v563
    %v874 = vunpack.c.h.b16 %v563
    %v875 = vunpack.c.l.b16 %v564
    %v876 = vunpack.c.h.b16 %v564
    %v877 = vunpack.c.l.b16 %v565
    %v878 = vunpack.c.h.b16 %v565
    %v879 = vunpack.c.l.b16 %v566
    %v880 = vunpack.c.h.b16 %v566
    %v881 = vunpack.c.l.b16 %v567
    %v882 = vunpack.c.h.b16 %v567
    %v883 = vunpack.c.l.b16 %v568
    %v884 = vunpack.c.h.b16 %v568
    %v885 = vunpack.c.l.b16 %v569
    %v886 = vunpack.c.h.b16 %v569
    %v887 = vunpack.c.l.b16 %v570
    %v888 = vunpack.c.h.b16 %v570
    %v889 = vunpack.c.l.b16 %v571
    %v890 = vunpack.c.h.b16 %v571
    %v891 = vunpack.c.l.b16 %v572
    %v892 = vunpack.c.h.b16 %v572
    %v893 = vunpack.c.l.b16 %v573
    %v894 = vunpack.c.h.b16 %v573
    %v895 = vunpack.c.l.b16 %v574
    %v896 = vunpack.c.h.b16 %v574
    %v897 = vunpack.c.l.b16 %v575
    %v898 = vunpack.c.h.b16 %v575
    %v899 = vunpack.c.l.b16 %v576
    %v900 = vunpack.c.h.b16 %v576
    %v901 = vunpack.c.l.b16 %v577
    %v902 = vunpack.c.h.b16 %v577
    %v903 = vunpack.c.l.b16 %v578
    %v904 = vunpack.c.h.b16 %v578
    %v905 = vunpack.c.l.b16 %v579
    %v906 = vunpack.c.h.b16 %v579
    %v907 = vunpack.c.l.b16 %v580
    %v908 = vunpack.c.h.b16 %v580
    %v909 = vunpack.c.l.b16 %v581
    %v910 = vunpack.c.h.b16 %v581
    %v911 = vunpack.c.l.b16 %v582
    %v912 = vunpack.c.h.b16 %v582
    %v913 = vunpack.c.l.b16 %v583
    %v914 = vunpack.c.h.b16 %v583
    %v915 = vunpack.c.l.b16 %v584
    %v916 = vunpack.c.h.b16 %v584
    %v917 = vunpack.c.l.b16 %v585
    %v918 = vunpack.c.h.b16 %v585
    %v919 = vunpack.c.l.b16 %v586
    %v920 = vunpack.c.h.b16 %v586
    %v921 = vunpack.c.l.b16 %v587
    %v922 = vunpack.c.h.b16 %v587
    %v923 = vunpack.c.l.b16 %v588
    %v924 = vunpack.c.h.b16 %v588
    %v925 = vunpack.c.l.b16 %v589
    %v926 = vunpack.c.h.b16 %v589
    %v927 = vunpack.c.l.b16 %v590
    %v928 = vunpack.c.h.b16 %v590
    %v929 = vunpack.c.l.b16 %v591
    %v930 = vunpack.c.h.b16 %v591
    %v931 = vunpack.c.l.b16 %v592
    %v932 = vunpack.c.h.b16 %v592
    %v933 = vunpack.c.l.b16 %v593
    %v934 = vunpack.c.h.b16 %v593
    %v935 = vunpack.c.l.b16 %v594
    %v936 = vunpack.c.h.b16 %v594
    %v937 = vunpack.c.l.b16 %v595
    %v938 = vunpack.c.h.b16 %v595
    %v939 = vunpack.c.l.b16 %v596
    %v940 = vunpack.c.h.b16 %v596
    %v941 = vunpack.c.l.b16 %v597
    %v942 = vunpack.c.h.b16 %v597
    %v943 = vunpack.c.l.b16 %v598
    %v944 = vunpack.c.h.b16 %v598
    %v945 = vunpack.c.l.b16 %v599
    %v946 = vunpack.c.h.b16 %v599
    %v947 = vunpack.c.l.b16 %v600
    %v948 = vunpack.c.h.b16 %v600
    %v949 = vunpack.c.l.b16 %v601
    %v950 = vunpack.c.h.b16 %v601
    %v951 = vunpack.c.l.b16 %v602
    %v952 = vunpack.c.h.b16 %v602
    %v953 = vunpack.c.l.b16 %v603
    %v954 = vunpack.c.h.b16 %v603
    %v955 = vunpack.c.l.b16 %v604
    %v956 = vunpack.c.h.b16 %v604
    %v957 = vunpack.c.l.b16 %v605
    %v958 = vunpack.c.h.b16 %v605
    %v959 = vunpack.c.l.b16 %v606
    %v960 = vunpack.c.h.b16 %v606
    %v961 = vunpack.c.l.b16 %v607
    %v962 = vunpack.c.h.b16 %v607
    %v963 = vunpack.c.l.b16 %v608
    %v964 = vunpack.c.h.b16 %v608
    %v965 = vunpack.c.l.b16 %v609
    %v966 = vunpack.c.h.b16 %v609
    %v967 = vunpack.c.l.b16 %v610
    %v968 = vunpack.c.h.b16 %v610
    %v969 = vunpack.c.l.b16 %v611
    %v970 = vunpack.c.h.b16 %v611
    %v971 = vunpack.c.l.b16 %v612
    %v972 = vunpack.c.h.b16 %v612
    %v973 = vunpack.c.l.b16 %v613
    %v974 = vunpack.c.h.b16 %v613
    %v975 = vunpack.c.l.b16 %v614
    %v976 = vunpack.c.h.b16 %v614
    %v977 = vunpack.c.l.b16 %v615
    %v978 = vunpack.c.h.b16 %v615
    %v979 = vunpack.c.l.b16 %v616
    %v980 = vunpack.c.h.b16 %v616
    %v981 = vunpack.c.l.b16 %v617
    %v982 = vunpack.c.h.b16 %v617
    %v983 = vunpack.c.l.b16 %v618
    %v984 = vunpack.c.h.b16 %v618
    %v985 = vunpack.c.l.b16 %v619
    %v986 = vunpack.c.h.b16 %v619
    %v987 = vunpack.c.l.b16 %v620
    %v988 = vunpack.c.h.b16 %v620
    %v989 = vunpack.c.l.b16 %v621
    %v990 = vunpack.c.h.b16 %v621
    %v991 = vunpack.c.l.b16 %v622
    %v992 = vunpack.c.h.b16 %v622
    %v993 = vunpack.c.l.b16 %v623
    %v994 = vunpack.c.h.b16 %v623
    %v995 = vunpack.c.l.b16 %v624
    %v996 = vunpack.c.h.b16 %v624
    %v997 = vunpack.c.l.b16 %v625
    %v998 = vunpack.c.h.b16 %v625
    %v999 = vunpack.c.l.b16 %v626
    %v1000 = vunpack.c.h.b16 %v626
    %v1001 = vunpack.c.l.b16 %v627
    %v1002 = vunpack.c.h.b16 %v627
    %v1003 = vunpack.c.l.b16 %v628
    %v1004 = vunpack.c.h.b16 %v628
    %v1005 = vunpack.c.l.b16 %v629
    %v1006 = vunpack.c.h.b16 %v629
    %v1007 = vunpack.c.l.b16 %v630
    %v1008 = vunpack.c.h.b16 %v630
    %v1009 = vunpack.c.l.b16 %v631
    %v1010 = vunpack.c.h.b16 %v631
    %v1011 = vunpack.c.l.b16 %v632
    %v1012 = vunpack.c.h.b16 %v632
    %v1013 = vunpack.c.l.b16 %v633
    %v1014 = vunpack.c.h.b16 %v633
    %v1015 = vunpack.c.l.b16 %v634
    %v1016 = vunpack.c.h.b16 %v634
    %v1017 = vunpack.c.l.b16 %v635
    %v1018 = vunpack.c.h.b16 %v635
    %v1019 = vunpack.c.l.b16 %v636
    %v1020 = vunpack.c.h.b16 %v636
    %v1021 = vunpack.c.l.b16 %v637
    %v1022 = vunpack.c.h.b16 %v637
    %v1023 = vunpack.c.l.b16 %v638
    %v1024 = vunpack.c.h.b16 %v638
    %v1025 = vunpack.c.l.b16 %v639
    %v1026 = vunpack.c.h.b16 %v639
    %v1027 = vunpack.c.l.b16 %v640
    %v1028 = vunpack.c.h.b16 %v640
    %v1029 = vunpack.c.l.b16 %v641
    %v1030 = vunpack.c.h.b16 %v641
    %v1031 = vunpack.c.l.b16 %v642
    %v1032 = vunpack.c.h.b16 %v642
    %v1033 = vunpack.c.l.b16 %v643
    %v1034 = vunpack.c.h.b16 %v643
    %v1035 = vunpack.c.l.b16 %v644
    %v1036 = vunpack.c.h.b16 %v644
    %v1037 = vunpack.c.l.b16 %v645
    %v1038 = vunpack.c.h.b16 %v645
    %v1039 = vunpack.c.l.b16 %v646
    %v1040 = vunpack.c.h.b16 %v646
    %v1041 = vunpack.c.l.b16 %v647
    %v1042 = vunpack.c.h.b16 %v647
    %v1043 = vunpack.c.l.b16 %v648
    %v1044 = vunpack.c.h.b16 %v648
    %v1045 = vunpack.c.l.b16 %v649
    %v1046 = vunpack.c.h.b16 %v649
    %v1047 = vpack.c.b16 %v811, %v807
    %v1048 = vpack.c.b16 %v812, %v808
    %v1049 = vpack.c.b16 %v813, %v809
    %v1050 = vpack.c.b16 %v814, %v810
    %v1051 = vpack.c.b16 %v819, %v815
    %v1052 = vpack.c.b16 %v820, %v816
    %v1053 = vpack.c.b16 %v821, %v817
    %v1054 = vpack.c.b16 %v822, %v818
    %v1055 = vpack.c.b16 %v827, %v823
    %v1056 = vpack.c.b16 %v828, %v824
    %v1057 = vpack.c.b16 %v829, %v825
    %v1058 = vpack.c.b16 %v830, %v826
    %v1059 = vpack.c.b16 %v835, %v831
    %v1060 = vpack.c.b16 %v836, %v832
    %v1061 = vpack.c.b16 %v837, %v833
    %v1062 = vpack.c.b16 %v838, %v834
    %v1063 = vpack.c.b16 %v843, %v839
    %v1064 = vpack.c.b16 %v844, %v840
    %v1065 = vpack.c.b16 %v845, %v841
    %v1066 = vpack.c.b16 %v846, %v842
    %v1067 = vpack.c.b16 %v851, %v847
    %v1068 = vpack.c.b16 %v852, %v848
    %v1069 = vpack.c.b16 %v853, %v849
    %v1070 = vpack.c.b16 %v854, %v850
    %v1071 = vpack.c.b16 %v859, %v855
    %v1072 = vpack.c.b16 %v860, %v856
    %v1073 = vpack.c.b16 %v861, %v857
    %v1074 = vpack.c.b16 %v862, %v858
    %v1075 = vpack.c.b16 %v867, %v863
    %v1076 = vpack.c.b16 %v868, %v864
    %v1077 = vpack.c.b16 %v869, %v865
    %v1078 = vpack.c.b16 %v870, %v866
    %v1079 = vpack.c.b16 %v875, %v871
    %v1080 = vpack.c.b16 %v876, %v872
    %v1081 = vpack.c.b16 %v877, %v873
    %v1082 = vpack.c.b16 %v878, %v874
    %v1083 = vpack.c.b16 %v883, %v879
    %v1084 = vpack.c.b16 %v884, %v880
    %v1085 = vpack.c.b16 %v885, %v881
    %v1086 = vpack.c.b16 %v886, %v882
    %v1087 = vpack.c.b16 %v891, %v887
    %v1088 = vpack.c.b16 %v892, %v888
    %v1089 = vpack.c.b16 %v893, %v889
    %v1090 = vpack.c.b16 %v894, %v890
    %v1091 = vpack.c.b16 %v899, %v895
    %v1092 = vpack.c.b16 %v900, %v896
    %v1093 = vpack.c.b16 %v901, %v897
    %v1094 = vpack.c.b16 %v902, %v898
    %v1095 = vpack.c.b16 %v907, %v903
    %v1096 = vpack.c.b16 %v908, %v904
    %v1097 = vpack.c.b16 %v909, %v905
    %v1098 = vpack.c.b16 %v910, %v906
    %v1099 = vpack.c.b16 %v915, %v911
    %v1100 = vpack.c.b16 %v916, %v912
    %v1101 = vpack.c.b16 %v917, %v913
    %v1102 = vpack.c.b16 %v918, %v914
    %v1103 = vpack.c.b16 %v923, %v919
    %v1104 = vpack.c.b16 %v924, %v920
    %v1105 = vpack.c.b16 %v925, %v921
    %v1106 = vpack.c.b16 %v926, %v922
    %v1107 = vpack.c.b16 %v931, %v927
    %v1108 = vpack.c.b16 %v932, %v928
    %v1109 = vpack.c.b16 %v933, %v929
    %v1110 = vpack.c.b16 %v934, %v930
    %v1111 = vpack.c.b16 %v939, %v935
    %v1112 = vpack.c.b16 %v940, %v936
    %v1113 = vpack.c.b16 %v941, %v937
    %v1114 = vpack.c.b16 %v942, %v938
    %v1115 = vpack.c.b16 %v947, %v943
    %v1116 = vpack.c.b16 %v948, %v944
    %v1117 = vpack.c.b16 %v949, %v945
    %v1118 = vpack.c.b16 %v950, %v946
    %v1119 = vpack.c.b16 %v955, %v951
    %v1120 = vpack.c.b16 %v956, %v952
    %v1121 = vpack.c.b16 %v957, %v953
    %v1122 = vpack.c.b16 %v958, %v954
    %v1123 = vpack.c.b16 %v963, %v959
    %v1124 = vpack.c.b16 %v964, %v960
    %v1125 = vpack.c.b16 %v965, %v961
    %v1126 = vpack.c.b16 %v966, %v962
    %v1127 = vpack.c.b16 %v971, %v967
    %v1128 = vpack.c.b16 %v972, %v968
    %v1129 = vpack.c.b16 %v973, %v969
    %v1130 = vpack.c.b16 %v974, %v970
    %v1131 = vpack.c.b16 %v979, %v975
    %v1132 = vpack.c.b16 %v980, %v976
    %v1133 = vpack.c.b16 %v981, %v977
    %v1134 = vpack.c.b16 %v982, %v978
    %v1135 = vpack.c.b16 %v987, %v983
    %v1136 = vpack.c.b16 %v988, %v984
    %v1137 = vpack.c.b16 %v989, %v985
    %v1138 = vpack.c.b16 %v990, %v986
    %v1139 = vpack.c.b16 %v995, %v991
    %v1140 = vpack.c.b16 %v996, %v992
    %v1141 = vpack.c.b16 %v997, %v993
    %v1142 = vpack.c.b16 %v998, %v994
    %v1143 = vpack.c.b16 %v1003, %v999
    %v1144 = vpack.c.b16 %v1004, %v1000
    %v1145 = vpack.c.b16 %v1005, %v1001
    %v1146 = vpack.c.b16 %v1006, %v1002
    %v1147 = vpack.c.b16 %v1011, %v1007
    %v1148 = vpack.c.b16 %v1012, %v1008
    %v1149 = vpack.c.b16 %v1013, %v1009
    %v1150 = vpack.c.b16 %v1014, %v1010
    %v1151 = vpack.c.b16 %v1019, %v1015
    %v1152 = vpack.c.b16 %v1020, %v1016
    %v1153 = vpack.c.b16 %v1021, %v1017
    %v1154 = vpack.c.b16 %v1022, %v1018
    %v1155 = vpack.c.b16 %v1027, %v1023
    %v1156 = vpack.c.b16 %v1028, %v1024
    %v1157 = vpack.c.b16 %v1029, %v1025
    %v1158 = vpack.c.b16 %v1030, %v1026
    %v1159 = vpack.c.b16 %v1035, %v1031
    %v1160 = vpack.c.b16 %v1036, %v1032
    %v1161 = vpack.c.b16 %v1037, %v1033
    %v1162 = vpack.c.b16 %v1038, %v1034
    %v1163 = vpack.c.b16 %v1043, %v1039
    %v1164 = vpack.c.b16 %v1044, %v1040
    %v1165 = vpack.c.b16 %v1045, %v1041
    %v1166 = vpack.c.b16 %v1046, %v1042
    %v1288 = vsel %vm236, %v683, 0
    %1290 = vmatpush.bf16.msra.mxu0 %v1075
    %1291 = vmatpush.bf16.msra.mxu0 %v1071
    %1292 = vmatpush.bf16.msra.mxu0 %v1067
    %1293 = vmatpush.bf16.msra.mxu0 %v1063
    %1294 = vmatpush.bf16.msra.mxu0 %v1059
    %1295 = vmatpush.bf16.msra.mxu0 %v1055
    %1296 = vmatpush.bf16.msra.mxu0 %v1051
    %1297 = vmatpush.bf16.msra.mxu0 %v1047
    %1298 = vmatmul.bf16.gmra.mxu0 %v680
    %v1299 = vpop.f32.mrf.mxu0
    %v1300 = vadd.f32 %v652, %v1299
    %v1301 = vpop.f32.mrf.mxu0
    %1302 = vdwg.mxu0
    %1303 = vmatpush.bf16.msra.mxu0 %v1107
    %1304 = vmatpush.bf16.msra.mxu0 %v1103
    %1305 = vmatpush.bf16.msra.mxu0 %v1099
    %1306 = vmatpush.bf16.msra.mxu0 %v1095
    %1307 = vmatpush.bf16.msra.mxu0 %v1091
    %1308 = vmatpush.bf16.msra.mxu0 %v1087
    %1309 = vmatpush.bf16.msra.mxu0 %v1083
    %1310 = vmatpush.bf16.msra.mxu0 %v1079
    %1311 = vmatmul.bf16.gmra.mxu0 %v681
    %v1312 = vpop.f32.mrf.mxu0
    %v1313 = vadd.f32 %v1300, %v1312
    %v1314 = vpop.f32.mrf.mxu0
    %1315 = vdwg.mxu0
    %1316 = vmatpush.bf16.msra.mxu0 %v1139
    %1317 = vmatpush.bf16.msra.mxu0 %v1135
    %1318 = vmatpush.bf16.msra.mxu0 %v1131
    %1319 = vmatpush.bf16.msra.mxu0 %v1127
    %1320 = vmatpush.bf16.msra.mxu0 %v1123
    %1321 = vmatpush.bf16.msra.mxu0 %v1119
    %1322 = vmatpush.bf16.msra.mxu0 %v1115
    %1323 = vmatpush.bf16.msra.mxu0 %v1111
    %1324 = vmatmul.bf16.gmra.mxu0 %v682
    %v1325 = vpop.f32.mrf.mxu0
    %v1326 = vadd.f32 %v1313, %v1325
    %v1327 = vpop.f32.mrf.mxu0
    %1328 = vdwg.mxu0
    %1329 = vmatpush.bf16.msra.mxu0 0
    %1330 = vmatpush.bf16.msra.mxu0 0
    %1331 = vmatpush.bf16.msra.mxu0 %v1163
    %1332 = vmatpush.bf16.msra.mxu0 %v1159
    %1333 = vmatpush.bf16.msra.mxu0 %v1155
    %1334 = vmatpush.bf16.msra.mxu0 %v1151
    %1335 = vmatpush.bf16.msra.mxu0 %v1147
    %1336 = vmatpush.bf16.msra.mxu0 %v1143
    %1337 = vmatmul.bf16.gmra.mxu0 %v1288
    %v1338 = vpop.f32.mrf.mxu0
    %v1339 = vadd.f32 %v1326, %v1338
    %v1340 = vpop.f32.mrf.mxu0
    %1341 = vdwg.mxu0
    %1342 = vmatpush.bf16.msra.mxu0 %v1076
    %1343 = vmatpush.bf16.msra.mxu0 %v1072
    %1344 = vmatpush.bf16.msra.mxu0 %v1068
    %1345 = vmatpush.bf16.msra.mxu0 %v1064
    %1346 = vmatpush.bf16.msra.mxu0 %v1060
    %1347 = vmatpush.bf16.msra.mxu0 %v1056
    %1348 = vmatpush.bf16.msra.mxu0 %v1052
    %1349 = vmatpush.bf16.msra.mxu0 %v1048
    %1350 = vmatmul.bf16.gmra.mxu0 %v680
    %v1351 = vpop.f32.mrf.mxu0
    %v1352 = vadd.f32 %v653, %v1351
    %v1353 = vpop.f32.mrf.mxu0
    %1354 = vdwg.mxu0
    %1355 = vmatpush.bf16.msra.mxu0 %v1108
    %1356 = vmatpush.bf16.msra.mxu0 %v1104
    %1357 = vmatpush.bf16.msra.mxu0 %v1100
    %1358 = vmatpush.bf16.msra.mxu0 %v1096
    %1359 = vmatpush.bf16.msra.mxu0 %v1092
    %1360 = vmatpush.bf16.msra.mxu0 %v1088
    %1361 = vmatpush.bf16.msra.mxu0 %v1084
    %1362 = vmatpush.bf16.msra.mxu0 %v1080
    %1363 = vmatmul.bf16.gmra.mxu0 %v681
    %v1364 = vpop.f32.mrf.mxu0
    %v1365 = vadd.f32 %v1352, %v1364
    %v1366 = vpop.f32.mrf.mxu0
    %1367 = vdwg.mxu0
    %1368 = vmatpush.bf16.msra.mxu0 %v1140
    %1369 = vmatpush.bf16.msra.mxu0 %v1136
    %1370 = vmatpush.bf16.msra.mxu0 %v1132
    %1371 = vmatpush.bf16.msra.mxu0 %v1128
    %1372 = vmatpush.bf16.msra.mxu0 %v1124
    %1373 = vmatpush.bf16.msra.mxu0 %v1120
    %1374 = vmatpush.bf16.msra.mxu0 %v1116
    %1375 = vmatpush.bf16.msra.mxu0 %v1112
    %1376 = vmatmul.bf16.gmra.mxu0 %v682
    %v1377 = vpop.f32.mrf.mxu0
    %v1378 = vadd.f32 %v1365, %v1377
    %v1379 = vpop.f32.mrf.mxu0
    %1380 = vdwg.mxu0
    %1381 = vmatpush.bf16.msra.mxu0 0
    %1382 = vmatpush.bf16.msra.mxu0 0
    %1383 = vmatpush.bf16.msra.mxu0 %v1164
    %1384 = vmatpush.bf16.msra.mxu0 %v1160
    %1385 = vmatpush.bf16.msra.mxu0 %v1156
    %1386 = vmatpush.bf16.msra.mxu0 %v1152
    %1387 = vmatpush.bf16.msra.mxu0 %v1148
    %1388 = vmatpush.bf16.msra.mxu0 %v1144
    %1389 = vmatmul.bf16.gmra.mxu0 %v1288
    %v1390 = vpop.f32.mrf.mxu0
    %v1391 = vadd.f32 %v1378, %v1390
    %v1392 = vpop.f32.mrf.mxu0
    %1393 = vdwg.mxu0
    %1394 = vmatpush.bf16.msra.mxu0 %v1077
    %1395 = vmatpush.bf16.msra.mxu0 %v1073
    %1396 = vmatpush.bf16.msra.mxu0 %v1069
    %1397 = vmatpush.bf16.msra.mxu0 %v1065
    %1398 = vmatpush.bf16.msra.mxu0 %v1061
    %1399 = vmatpush.bf16.msra.mxu0 %v1057
    %1400 = vmatpush.bf16.msra.mxu0 %v1053
    %1401 = vmatpush.bf16.msra.mxu0 %v1049
    %1402 = vmatmul.bf16.gmra.mxu0 %v680
    %v1403 = vpop.f32.mrf.mxu0
    %v1404 = vadd.f32 %v654, %v1403
    %v1405 = vpop.f32.mrf.mxu0
    %1406 = vdwg.mxu0
    %1407 = vmatpush.bf16.msra.mxu0 %v1109
    %1408 = vmatpush.bf16.msra.mxu0 %v1105
    %1409 = vmatpush.bf16.msra.mxu0 %v1101
    %1410 = vmatpush.bf16.msra.mxu0 %v1097
    %1411 = vmatpush.bf16.msra.mxu0 %v1093
    %1412 = vmatpush.bf16.msra.mxu0 %v1089
    %1413 = vmatpush.bf16.msra.mxu0 %v1085
    %1414 = vmatpush.bf16.msra.mxu0 %v1081
    %1415 = vmatmul.bf16.gmra.mxu0 %v681
    %v1416 = vpop.f32.mrf.mxu0
    %v1417 = vadd.f32 %v1404, %v1416
    %v1418 = vpop.f32.mrf.mxu0
    %1419 = vdwg.mxu0
    %1420 = vmatpush.bf16.msra.mxu0 %v1141
    %1421 = vmatpush.bf16.msra.mxu0 %v1137
    %1422 = vmatpush.bf16.msra.mxu0 %v1133
    %1423 = vmatpush.bf16.msra.mxu0 %v1129
    %1424 = vmatpush.bf16.msra.mxu0 %v1125
    %1425 = vmatpush.bf16.msra.mxu0 %v1121
    %1426 = vmatpush.bf16.msra.mxu0 %v1117
    %1427 = vmatpush.bf16.msra.mxu0 %v1113
    %1428 = vmatmul.bf16.gmra.mxu0 %v682
    %v1429 = vpop.f32.mrf.mxu0
    %v1430 = vadd.f32 %v1417, %v1429
    %v1431 = vpop.f32.mrf.mxu0
    %1432 = vdwg.mxu0
    %1433 = vmatpush.bf16.msra.mxu0 0
    %1434 = vmatpush.bf16.msra.mxu0 0
    %1435 = vmatpush.bf16.msra.mxu0 %v1165
    %1436 = vmatpush.bf16.msra.mxu0 %v1161
    %1437 = vmatpush.bf16.msra.mxu0 %v1157
    %1438 = vmatpush.bf16.msra.mxu0 %v1153
    %1439 = vmatpush.bf16.msra.mxu0 %v1149
    %1440 = vmatpush.bf16.msra.mxu0 %v1145
    %1441 = vmatmul.bf16.gmra.mxu0 %v1288
    %v1442 = vpop.f32.mrf.mxu0
    %v1443 = vadd.f32 %v1430, %v1442
    %v1444 = vpop.f32.mrf.mxu0
    %1445 = vdwg.mxu0
    %1446 = vmatpush.bf16.msra.mxu0 %v1078
    %1447 = vmatpush.bf16.msra.mxu0 %v1074
    %1448 = vmatpush.bf16.msra.mxu0 %v1070
    %1449 = vmatpush.bf16.msra.mxu0 %v1066
    %1450 = vmatpush.bf16.msra.mxu0 %v1062
    %1451 = vmatpush.bf16.msra.mxu0 %v1058
    %1452 = vmatpush.bf16.msra.mxu0 %v1054
    %1453 = vmatpush.bf16.msra.mxu0 %v1050
    %1454 = vmatmul.bf16.gmra.mxu0 %v680
    %v1455 = vpop.f32.mrf.mxu0
    %v1456 = vadd.f32 %v655, %v1455
    %v1457 = vpop.f32.mrf.mxu0
    %1458 = vdwg.mxu0
    %1459 = vmatpush.bf16.msra.mxu0 %v1110
    %1460 = vmatpush.bf16.msra.mxu0 %v1106
    %1461 = vmatpush.bf16.msra.mxu0 %v1102
    %1462 = vmatpush.bf16.msra.mxu0 %v1098
    %1463 = vmatpush.bf16.msra.mxu0 %v1094
    %1464 = vmatpush.bf16.msra.mxu0 %v1090
    %1465 = vmatpush.bf16.msra.mxu0 %v1086
    %1466 = vmatpush.bf16.msra.mxu0 %v1082
    %1467 = vmatmul.bf16.gmra.mxu0 %v681
    %v1468 = vpop.f32.mrf.mxu0
    %v1469 = vadd.f32 %v1456, %v1468
    %v1470 = vpop.f32.mrf.mxu0
    %1471 = vdwg.mxu0
    %1472 = vmatpush.bf16.msra.mxu0 %v1142
    %1473 = vmatpush.bf16.msra.mxu0 %v1138
    %1474 = vmatpush.bf16.msra.mxu0 %v1134
    %1475 = vmatpush.bf16.msra.mxu0 %v1130
    %1476 = vmatpush.bf16.msra.mxu0 %v1126
    %1477 = vmatpush.bf16.msra.mxu0 %v1122
    %1478 = vmatpush.bf16.msra.mxu0 %v1118
    %1479 = vmatpush.bf16.msra.mxu0 %v1114
    %1480 = vmatmul.bf16.gmra.mxu0 %v682
    %v1481 = vpop.f32.mrf.mxu0
    %v1482 = vadd.f32 %v1469, %v1481
    %v1483 = vpop.f32.mrf.mxu0
    %1484 = vdwg.mxu0
    %1485 = vmatpush.bf16.msra.mxu0 0
    %1486 = vmatpush.bf16.msra.mxu0 0
    %1487 = vmatpush.bf16.msra.mxu0 %v1166
    %1488 = vmatpush.bf16.msra.mxu0 %v1162
    %1489 = vmatpush.bf16.msra.mxu0 %v1158
    %1490 = vmatpush.bf16.msra.mxu0 %v1154
    %1491 = vmatpush.bf16.msra.mxu0 %v1150
    %1492 = vmatpush.bf16.msra.mxu0 %v1146
    %1493 = vmatmul.bf16.gmra.mxu0 %v1288
    %v1494 = vpop.f32.mrf.mxu0
    %v1495 = vadd.f32 %v1482, %v1494
    %v1496 = vpop.f32.mrf.mxu0
    %1497 = vdwg.mxu0
    %v1506 = vsel %vm386, %v502, %v477
    %v1507 = vsel %vm386, %v508, %v483
    %v1508 = vsel %vm386, %v514, %v489
    %v1509 = vsel %vm386, %v521, %v496
    %v1514 = vadd.f32 %v1339, %v1506
    %v1515 = vadd.f32 %v1391, %v1507
    %v1516 = vadd.f32 %v1443, %v1508
    %v1517 = vadd.f32 %v1495, %v1509
    %v1518 = vld [vmem:[#allocation13] sm:$0xf]
    %v1519 = vld [vmem:[#allocation14] sm:$0xf]
    %vm1520 = vcmask 1041408
    %v1521 = vsel %vm1520, %v1514, 0.0
    %v1522 = vsel %vm1520, %v1515, 0.0
    %v1523 = vadd.f32 %v1521, %v1522
    %v1524 = vsel %vm1520, %v1516, 0.0
    %v1525 = vadd.f32 %v1523, %v1524
    %vm1526 = vcmask 779264
    %v1527 = vsel %vm1526, %v1517, 0.0
    %v1528 = vadd.f32 %v1525, %v1527
    %1529 = vadd.xlane.f32.xlu0 %v1528
    %v1530 = vpop.xlane.xlu0 %1529
    %v1531 = vmul.f32 %v1530, %v253
    %v1532 = vsub.f32 %v1514, %v1531
    %v1533 = vsub.f32 %v1515, %v1531
    %v1534 = vsub.f32 %v1516, %v1531
    %v1535 = vsub.f32 %v1517, %v1531
    %v1536 = vmul.f32 %v1532, %v1532
    %v1537 = vmul.f32 %v1533, %v1533
    %v1538 = vmul.f32 %v1534, %v1534
    %v1539 = vmul.f32 %v1535, %v1535
    %v1540 = vsel %vm1520, %v1536, 0.0
    %v1541 = vsel %vm1520, %v1537, 0.0
    %v1542 = vadd.f32 %v1540, %v1541
    %v1543 = vsel %vm1520, %v1538, 0.0
    %v1544 = vadd.f32 %v1542, %v1543
    %v1545 = vsel %vm1526, %v1539, 0.0
    %v1546 = vadd.f32 %v1544, %v1545
    %1547 = vadd.xlane.f32.xlu0 %v1546
    %v1548 = vpop.xlane.xlu0 %1547
    %v1549 = vmul.f32 %v1548, %v253
    %v1550 = vadd.f32 %v1549, 1e-12
    %v1551 = vrsqrt.pop %v1550
    %v1552 = vmul.f32 %v1551, %v1550
    %v1553 = vmul.f32 %v1552, %v1551
    %v1554 = vmul.f32 0.5, %v1553
    %v1555 = vsub.f32 1.5, %v1554
    %v1556 = vmul.f32 %v1551, %v1555
    %vm1557 = vweird.f32 %v1550
    %vm1558 = vweird.f32 %v1551
    %vm1559 = vmor %vm1557, %vm1558
    %v1560 = vsel %vm1559, %v1551, %v1556
    %v1561 = vmul.f32 %v1532, %v1560
    %v1562 = vmul.f32 %v1533, %v1560
    %v1563 = vmul.f32 %v1534, %v1560
    %v1564 = vmul.f32 %v1535, %v1560
    %v1566 = vperm.slane %v1518, 0
    %v1567 = vperm.slane %v1518, 1
    %v1568 = vperm.slane %v1518, 2
    %v1569 = vperm.slane %v1518, 3
    %v1574 = vmul.f32 %v1561, %v1566
    %v1575 = vmul.f32 %v1562, %v1567
    %v1576 = vmul.f32 %v1563, %v1568
    %v1577 = vmul.f32 %v1564, %v1569
    %v1579 = vperm.slane %v1519, 0
    %v1580 = vperm.slane %v1519, 1
    %v1581 = vperm.slane %v1519, 2
    %v1582 = vperm.slane %v1519, 3
    %v1587 = vadd.f32 %v1574, %v1579
    %v1588 = vadd.f32 %v1575, %v1580
    %v1589 = vadd.f32 %v1576, %v1581
    %v1590 = vadd.f32 %v1577, %v1582
    %v1591 = vpack.c.bf16 %v1587, %v1587
    %v1592 = vpack.c.bf16 %v1588, %v1588
    %v1593 = vpack.c.bf16 %v1589, %v1589
    %v1594 = vpack.c.bf16 %v1590, %v1590
    %v1596 = vsel %vm236, %v1594, 0
    %1598 = vmatpush.bf16.msra.mxu0 %v1075
    %1599 = vmatpush.bf16.msra.mxu0 %v1071
    %1600 = vmatpush.bf16.msra.mxu0 %v1067
    %1601 = vmatpush.bf16.msra.mxu0 %v1063
    %1602 = vmatpush.bf16.msra.mxu0 %v1059
    %1603 = vmatpush.bf16.msra.mxu0 %v1055
    %1604 = vmatpush.bf16.msra.mxu0 %v1051
    %1605 = vmatpush.bf16.msra.mxu0 %v1047
    %1606 = vmatmul.bf16.gmra.mxu0 %v1591
    %v1607 = vpop.f32.mrf.mxu0
    %v1608 = vadd.f32 %v652, %v1607
    %v1609 = vpop.f32.mrf.mxu0
    %1610 = vdwg.mxu0
    %1611 = vmatpush.bf16.msra.mxu0 %v1107
    %1612 = vmatpush.bf16.msra.mxu0 %v1103
    %1613 = vmatpush.bf16.msra.mxu0 %v1099
    %1614 = vmatpush.bf16.msra.mxu0 %v1095
    %1615 = vmatpush.bf16.msra.mxu0 %v1091
    %1616 = vmatpush.bf16.msra.mxu0 %v1087
    %1617 = vmatpush.bf16.msra.mxu0 %v1083
    %1618 = vmatpush.bf16.msra.mxu0 %v1079
    %1619 = vmatmul.bf16.gmra.mxu0 %v1592
    %v1620 = vpop.f32.mrf.mxu0
    %v1621 = vadd.f32 %v1608, %v1620
    %v1622 = vpop.f32.mrf.mxu0
    %1623 = vdwg.mxu0
    %1624 = vmatpush.bf16.msra.mxu0 %v1139
    %1625 = vmatpush.bf16.msra.mxu0 %v1135
    %1626 = vmatpush.bf16.msra.mxu0 %v1131
    %1627 = vmatpush.bf16.msra.mxu0 %v1127
    %1628 = vmatpush.bf16.msra.mxu0 %v1123
    %1629 = vmatpush.bf16.msra.mxu0 %v1119
    %1630 = vmatpush.bf16.msra.mxu0 %v1115
    %1631 = vmatpush.bf16.msra.mxu0 %v1111
    %1632 = vmatmul.bf16.gmra.mxu0 %v1593
    %v1633 = vpop.f32.mrf.mxu0
    %v1634 = vadd.f32 %v1621, %v1633
    %v1635 = vpop.f32.mrf.mxu0
    %1636 = vdwg.mxu0
    %1637 = vmatpush.bf16.msra.mxu0 0
    %1638 = vmatpush.bf16.msra.mxu0 0
    %1639 = vmatpush.bf16.msra.mxu0 %v1163
    %1640 = vmatpush.bf16.msra.mxu0 %v1159
    %1641 = vmatpush.bf16.msra.mxu0 %v1155
    %1642 = vmatpush.bf16.msra.mxu0 %v1151
    %1643 = vmatpush.bf16.msra.mxu0 %v1147
    %1644 = vmatpush.bf16.msra.mxu0 %v1143
    %1645 = vmatmul.bf16.gmra.mxu0 %v1596
    %v1646 = vpop.f32.mrf.mxu0
    %v1647 = vadd.f32 %v1634, %v1646
    %v1648 = vpop.f32.mrf.mxu0
    %1649 = vdwg.mxu0
    %1650 = vmatpush.bf16.msra.mxu0 %v1076
    %1651 = vmatpush.bf16.msra.mxu0 %v1072
    %1652 = vmatpush.bf16.msra.mxu0 %v1068
    %1653 = vmatpush.bf16.msra.mxu0 %v1064
    %1654 = vmatpush.bf16.msra.mxu0 %v1060
    %1655 = vmatpush.bf16.msra.mxu0 %v1056
    %1656 = vmatpush.bf16.msra.mxu0 %v1052
    %1657 = vmatpush.bf16.msra.mxu0 %v1048
    %1658 = vmatmul.bf16.gmra.mxu0 %v1591
    %v1659 = vpop.f32.mrf.mxu0
    %v1660 = vadd.f32 %v653, %v1659
    %v1661 = vpop.f32.mrf.mxu0
    %1662 = vdwg.mxu0
    %1663 = vmatpush.bf16.msra.mxu0 %v1108
    %1664 = vmatpush.bf16.msra.mxu0 %v1104
    %1665 = vmatpush.bf16.msra.mxu0 %v1100
    %1666 = vmatpush.bf16.msra.mxu0 %v1096
    %1667 = vmatpush.bf16.msra.mxu0 %v1092
    %1668 = vmatpush.bf16.msra.mxu0 %v1088
    %1669 = vmatpush.bf16.msra.mxu0 %v1084
    %1670 = vmatpush.bf16.msra.mxu0 %v1080
    %1671 = vmatmul.bf16.gmra.mxu0 %v1592
    %v1672 = vpop.f32.mrf.mxu0
    %v1673 = vadd.f32 %v1660, %v1672
    %v1674 = vpop.f32.mrf.mxu0
    %1675 = vdwg.mxu0
    %1676 = vmatpush.bf16.msra.mxu0 %v1140
    %1677 = vmatpush.bf16.msra.mxu0 %v1136
    %1678 = vmatpush.bf16.msra.mxu0 %v1132
    %1679 = vmatpush.bf16.msra.mxu0 %v1128
    %1680 = vmatpush.bf16.msra.mxu0 %v1124
    %1681 = vmatpush.bf16.msra.mxu0 %v1120
    %1682 = vmatpush.bf16.msra.mxu0 %v1116
    %1683 = vmatpush.bf16.msra.mxu0 %v1112
    %1684 = vmatmul.bf16.gmra.mxu0 %v1593
    %v1685 = vpop.f32.mrf.mxu0
    %v1686 = vadd.f32 %v1673, %v1685
    %v1687 = vpop.f32.mrf.mxu0
    %1688 = vdwg.mxu0
    %1689 = vmatpush.bf16.msra.mxu0 0
    %1690 = vmatpush.bf16.msra.mxu0 0
    %1691 = vmatpush.bf16.msra.mxu0 %v1164
    %1692 = vmatpush.bf16.msra.mxu0 %v1160
    %1693 = vmatpush.bf16.msra.mxu0 %v1156
    %1694 = vmatpush.bf16.msra.mxu0 %v1152
    %1695 = vmatpush.bf16.msra.mxu0 %v1148
    %1696 = vmatpush.bf16.msra.mxu0 %v1144
    %1697 = vmatmul.bf16.gmra.mxu0 %v1596
    %v1698 = vpop.f32.mrf.mxu0
    %v1699 = vadd.f32 %v1686, %v1698
    %v1700 = vpop.f32.mrf.mxu0
    %1701 = vdwg.mxu0
    %1702 = vmatpush.bf16.msra.mxu0 %v1077
    %1703 = vmatpush.bf16.msra.mxu0 %v1073
    %1704 = vmatpush.bf16.msra.mxu0 %v1069
    %1705 = vmatpush.bf16.msra.mxu0 %v1065
    %1706 = vmatpush.bf16.msra.mxu0 %v1061
    %1707 = vmatpush.bf16.msra.mxu0 %v1057
    %1708 = vmatpush.bf16.msra.mxu0 %v1053
    %1709 = vmatpush.bf16.msra.mxu0 %v1049
    %1710 = vmatmul.bf16.gmra.mxu0 %v1591
    %v1711 = vpop.f32.mrf.mxu0
    %v1712 = vadd.f32 %v654, %v1711
    %v1713 = vpop.f32.mrf.mxu0
    %1714 = vdwg.mxu0
    %1715 = vmatpush.bf16.msra.mxu0 %v1109
    %1716 = vmatpush.bf16.msra.mxu0 %v1105
    %1717 = vmatpush.bf16.msra.mxu0 %v1101
    %1718 = vmatpush.bf16.msra.mxu0 %v1097
    %1719 = vmatpush.bf16.msra.mxu0 %v1093
    %1720 = vmatpush.bf16.msra.mxu0 %v1089
    %1721 = vmatpush.bf16.msra.mxu0 %v1085
    %1722 = vmatpush.bf16.msra.mxu0 %v1081
    %1723 = vmatmul.bf16.gmra.mxu0 %v1592
    %v1724 = vpop.f32.mrf.mxu0
    %v1725 = vadd.f32 %v1712, %v1724
    %v1726 = vpop.f32.mrf.mxu0
    %1727 = vdwg.mxu0
    %1728 = vmatpush.bf16.msra.mxu0 %v1141
    %1729 = vmatpush.bf16.msra.mxu0 %v1137
    %1730 = vmatpush.bf16.msra.mxu0 %v1133
    %1731 = vmatpush.bf16.msra.mxu0 %v1129
    %1732 = vmatpush.bf16.msra.mxu0 %v1125
    %1733 = vmatpush.bf16.msra.mxu0 %v1121
    %1734 = vmatpush.bf16.msra.mxu0 %v1117
    %1735 = vmatpush.bf16.msra.mxu0 %v1113
    %1736 = vmatmul.bf16.gmra.mxu0 %v1593
    %v1737 = vpop.f32.mrf.mxu0
    %v1738 = vadd.f32 %v1725, %v1737
    %v1739 = vpop.f32.mrf.mxu0
    %1740 = vdwg.mxu0
    %1741 = vmatpush.bf16.msra.mxu0 0
    %1742 = vmatpush.bf16.msra.mxu0 0
    %1743 = vmatpush.bf16.msra.mxu0 %v1165
    %1744 = vmatpush.bf16.msra.mxu0 %v1161
    %1745 = vmatpush.bf16.msra.mxu0 %v1157
    %1746 = vmatpush.bf16.msra.mxu0 %v1153
    %1747 = vmatpush.bf16.msra.mxu0 %v1149
    %1748 = vmatpush.bf16.msra.mxu0 %v1145
    %1749 = vmatmul.bf16.gmra.mxu0 %v1596
    %v1750 = vpop.f32.mrf.mxu0
    %v1751 = vadd.f32 %v1738, %v1750
    %v1752 = vpop.f32.mrf.mxu0
    %1753 = vdwg.mxu0
    %1754 = vmatpush.bf16.msra.mxu0 %v1078
    %1755 = vmatpush.bf16.msra.mxu0 %v1074
    %1756 = vmatpush.bf16.msra.mxu0 %v1070
    %1757 = vmatpush.bf16.msra.mxu0 %v1066
    %1758 = vmatpush.bf16.msra.mxu0 %v1062
    %1759 = vmatpush.bf16.msra.mxu0 %v1058
    %1760 = vmatpush.bf16.msra.mxu0 %v1054
    %1761 = vmatpush.bf16.msra.mxu0 %v1050
    %1762 = vmatmul.bf16.gmra.mxu0 %v1591
    %v1763 = vpop.f32.mrf.mxu0
    %v1764 = vadd.f32 %v655, %v1763
    %v1765 = vpop.f32.mrf.mxu0
    %1766 = vdwg.mxu0
    %1767 = vmatpush.bf16.msra.mxu0 %v1110
    %1768 = vmatpush.bf16.msra.mxu0 %v1106
    %1769 = vmatpush.bf16.msra.mxu0 %v1102
    %1770 = vmatpush.bf16.msra.mxu0 %v1098
    %1771 = vmatpush.bf16.msra.mxu0 %v1094
    %1772 = vmatpush.bf16.msra.mxu0 %v1090
    %1773 = vmatpush.bf16.msra.mxu0 %v1086
    %1774 = vmatpush.bf16.msra.mxu0 %v1082
    %1775 = vmatmul.bf16.gmra.mxu0 %v1592
    %v1776 = vpop.f32.mrf.mxu0
    %v1777 = vadd.f32 %v1764, %v1776
    %v1778 = vpop.f32.mrf.mxu0
    %1779 = vdwg.mxu0
    %1780 = vmatpush.bf16.msra.mxu0 %v1142
    %1781 = vmatpush.bf16.msra.mxu0 %v1138
    %1782 = vmatpush.bf16.msra.mxu0 %v1134
    %1783 = vmatpush.bf16.msra.mxu0 %v1130
    %1784 = vmatpush.bf16.msra.mxu0 %v1126
    %1785 = vmatpush.bf16.msra.mxu0 %v1122
    %1786 = vmatpush.bf16.msra.mxu0 %v1118
    %1787 = vmatpush.bf16.msra.mxu0 %v1114
    %1788 = vmatmul.bf16.gmra.mxu0 %v1593
    %v1789 = vpop.f32.mrf.mxu0
    %v1790 = vadd.f32 %v1777, %v1789
    %v1791 = vpop.f32.mrf.mxu0
    %1792 = vdwg.mxu0
    %1793 = vmatpush.bf16.msra.mxu0 0
    %1794 = vmatpush.bf16.msra.mxu0 0
    %1795 = vmatpush.bf16.msra.mxu0 %v1166
    %1796 = vmatpush.bf16.msra.mxu0 %v1162
    %1797 = vmatpush.bf16.msra.mxu0 %v1158
    %1798 = vmatpush.bf16.msra.mxu0 %v1154
    %1799 = vmatpush.bf16.msra.mxu0 %v1150
    %1800 = vmatpush.bf16.msra.mxu0 %v1146
    %1801 = vmatmul.bf16.gmra.mxu0 %v1596
    %v1802 = vpop.f32.mrf.mxu0
    %v1803 = vadd.f32 %v1790, %v1802
    %v1804 = vpop.f32.mrf.mxu0
    %1805 = vdwg.mxu0
    %v1806 = vadd.f32 %v1647, %v1587
    %v1807 = vadd.f32 %v1699, %v1588
    %v1808 = vadd.f32 %v1751, %v1589
    %v1809 = vadd.f32 %v1803, %v1590
    %v1810 = vsel %vm1520, %v1806, 0.0
    %v1811 = vsel %vm1520, %v1807, 0.0
    %v1812 = vadd.f32 %v1810, %v1811
    %v1813 = vsel %vm1520, %v1808, 0.0
    %v1814 = vadd.f32 %v1812, %v1813
    %v1815 = vsel %vm1526, %v1809, 0.0
    %v1816 = vadd.f32 %v1814, %v1815
    %1817 = vadd.xlane.f32.xlu0 %v1816
    %v1818 = vpop.xlane.xlu0 %1817
    %v1819 = vmul.f32 %v1818, %v253
    %v1820 = vsub.f32 %v1806, %v1819
    %v1821 = vsub.f32 %v1807, %v1819
    %v1822 = vsub.f32 %v1808, %v1819
    %v1823 = vsub.f32 %v1809, %v1819
    %v1824 = vmul.f32 %v1820, %v1820
    %v1825 = vmul.f32 %v1821, %v1821
    %v1826 = vmul.f32 %v1822, %v1822
    %v1827 = vmul.f32 %v1823, %v1823
    %v1828 = vsel %vm1520, %v1824, 0.0
    %v1829 = vsel %vm1520, %v1825, 0.0
    %v1830 = vadd.f32 %v1828, %v1829
    %v1831 = vsel %vm1520, %v1826, 0.0
    %v1832 = vadd.f32 %v1830, %v1831
    %v1833 = vsel %vm1526, %v1827, 0.0
    %v1834 = vadd.f32 %v1832, %v1833
    %1835 = vadd.xlane.f32.xlu0 %v1834
    %v1836 = vpop.xlane.xlu0 %1835
    %v1837 = vmul.f32 %v1836, %v253
    %v1838 = vadd.f32 %v1837, 1e-12
    %v1839 = vrsqrt.pop %v1838
    %v1840 = vmul.f32 %v1839, %v1838
    %v1841 = vmul.f32 %v1840, %v1839
    %v1842 = vmul.f32 0.5, %v1841
    %v1843 = vsub.f32 1.5, %v1842
    %v1844 = vmul.f32 %v1839, %v1843
    %vm1845 = vweird.f32 %v1838
    %vm1846 = vweird.f32 %v1839
    %vm1847 = vmor %vm1845, %vm1846
    %v1848 = vsel %vm1847, %v1839, %v1844
    %v1849 = vmul.f32 %v1820, %v1848
    %v1850 = vmul.f32 %v1821, %v1848
    %v1851 = vmul.f32 %v1822, %v1848
    %v1852 = vmul.f32 %v1823, %v1848
    %v1853 = vmul.f32 %v1849, %v1566
    %v1854 = vmul.f32 %v1850, %v1567
    %v1855 = vmul.f32 %v1851, %v1568
    %v1856 = vmul.f32 %v1852, %v1569
    %v1857 = vadd.f32 %v1853, %v1579
    %v1858 = vadd.f32 %v1854, %v1580
    %v1859 = vadd.f32 %v1855, %v1581
    %v1860 = vadd.f32 %v1856, %v1582
    %v1861 = vpack.c.bf16 %v1857, %v1857
    %v1862 = vpack.c.bf16 %v1858, %v1858
    %v1863 = vpack.c.bf16 %v1859, %v1859
    %v1864 = vpack.c.bf16 %v1860, %v1860
    %v1865 = vld [vmem:[#allocation16] sm:$0xff]
    %v1866 = vld [vmem:[#allocation16 + $0x8] sm:$0xff]
    %v1867 = vld [vmem:[#allocation16 + $0x10] sm:$0xff]
    %v1868 = vld [vmem:[#allocation16 + $0x18] sm:$0xff]
    %v1869 = vld [vmem:[#allocation16 + $0x20] sm:$0xff]
    %v1870 = vld [vmem:[#allocation16 + $0x28] sm:$0xff]
    %v1871 = vld [vmem:[#allocation16 + $0x30] sm:$0xff]
    %v1872 = vld [vmem:[#allocation16 + $0x38] sm:$0xff]
    %v1873 = vld [vmem:[#allocation16 + $0x40] sm:$0xff]
    %v1874 = vld [vmem:[#allocation16 + $0x48] sm:$0xff]
    %v1875 = vld [vmem:[#allocation16 + $0x50] sm:$0xff]
    %v1876 = vld [vmem:[#allocation16 + $0x58] sm:$0xff]
    %v1877 = vld [vmem:[#allocation16 + $0x60] sm:$0xff]
    %v1878 = vld [vmem:[#allocation16 + $0x68] sm:$0xff]
    %v1879 = vld [vmem:[#allocation16 + $0x70] sm:$0xff]
    %v1880 = vld [vmem:[#allocation16 + $0x78] sm:$0xff]
    %v1881 = vld [vmem:[#allocation16 + $0x80] sm:$0xff]
    %v1882 = vld [vmem:[#allocation16 + $0x88] sm:$0xff]
    %v1883 = vld [vmem:[#allocation16 + $0x90] sm:$0xff]
    %v1884 = vld [vmem:[#allocation16 + $0x98] sm:$0xff]
    %v1885 = vld [vmem:[#allocation16 + $0xa0] sm:$0xff]
    %v1886 = vld [vmem:[#allocation16 + $0xa8] sm:$0xff]
    %v1887 = vld [vmem:[#allocation16 + $0xb0] sm:$0xff]
    %v1888 = vld [vmem:[#allocation16 + $0xb8] sm:$0xff]
    %v1889 = vld [vmem:[#allocation16 + $0xc0] sm:$0xff]
    %v1890 = vld [vmem:[#allocation16 + $0xc8] sm:$0xff]
    %v1891 = vld [vmem:[#allocation16 + $0xd0] sm:$0xff]
    %v1892 = vld [vmem:[#allocation16 + $0xd8] sm:$0xff]
    %v1893 = vld [vmem:[#allocation16 + $0xe0] sm:$0xff]
    %v1894 = vld [vmem:[#allocation16 + $0xe8] sm:$0xff]
    %v1895 = vld [vmem:[#allocation16 + $0xf0] sm:$0xff]
    %v1896 = vld [vmem:[#allocation16 + $0xf8] sm:$0xff]
    %v1897 = vld [vmem:[#allocation16 + $0x100] sm:$0xff]
    %v1898 = vld [vmem:[#allocation16 + $0x108] sm:$0xff]
    %v1899 = vld [vmem:[#allocation16 + $0x110] sm:$0xff]
    %v1900 = vld [vmem:[#allocation16 + $0x118] sm:$0xff]
    %v1901 = vld [vmem:[#allocation16 + $0x120] sm:$0xff]
    %v1902 = vld [vmem:[#allocation16 + $0x128] sm:$0xff]
    %v1903 = vld [vmem:[#allocation16 + $0x130] sm:$0xff]
    %v1904 = vld [vmem:[#allocation16 + $0x138] sm:$0xff]
    %v1905 = vld [vmem:[#allocation16 + $0x140] sm:$0xff]
    %v1906 = vld [vmem:[#allocation16 + $0x148] sm:$0xff]
    %v1907 = vld [vmem:[#allocation16 + $0x150] sm:$0xff]
    %v1908 = vld [vmem:[#allocation16 + $0x158] sm:$0xff]
    %v1909 = vld [vmem:[#allocation16 + $0x160] sm:$0xff]
    %v1910 = vld [vmem:[#allocation16 + $0x168] sm:$0xff]
    %v1911 = vld [vmem:[#allocation16 + $0x170] sm:$0xff]
    %v1912 = vld [vmem:[#allocation16 + $0x178] sm:$0xff]
    %v1913 = vld [vmem:[#allocation16 + $0x180] sm:$0xff]
    %v1914 = vld [vmem:[#allocation16 + $0x188] sm:$0xff]
    %v1915 = vld [vmem:[#allocation16 + $0x190] sm:$0xff]
    %v1916 = vld [vmem:[#allocation16 + $0x198] sm:$0xff]
    %v1917 = vld [vmem:[#allocation16 + $0x1a0] sm:$0xff]
    %v1918 = vld [vmem:[#allocation16 + $0x1a8] sm:$0xff]
    %v1919 = vld [vmem:[#allocation16 + $0x1b0] sm:$0xff]
    %v1920 = vld [vmem:[#allocation16 + $0x1b8] sm:$0xff]
    %v1921 = vld [vmem:[#allocation16 + $0x1c0] sm:$0xff]
    %v1922 = vld [vmem:[#allocation16 + $0x1c8] sm:$0xff]
    %v1923 = vld [vmem:[#allocation16 + $0x1d0] sm:$0xff]
    %v1924 = vld [vmem:[#allocation16 + $0x1d8] sm:$0xff]
    %v1925 = vld [vmem:[#allocation16 + $0x1e0] sm:$0xff]
    %v1926 = vld [vmem:[#allocation16 + $0x1e8] sm:$0xff]
    %v1927 = vld [vmem:[#allocation16 + $0x1f0] sm:$0xff]
    %v1928 = vld [vmem:[#allocation16 + $0x1f8] sm:$0xff]
    %v1929 = vld [vmem:[#allocation16 + $0x200] sm:$0xff]
    %v1930 = vld [vmem:[#allocation16 + $0x208] sm:$0xff]
    %v1931 = vld [vmem:[#allocation16 + $0x210] sm:$0xff]
    %v1932 = vld [vmem:[#allocation16 + $0x218] sm:$0xff]
    %v1933 = vld [vmem:[#allocation16 + $0x220] sm:$0xff]
    %v1934 = vld [vmem:[#allocation16 + $0x228] sm:$0xff]
    %v1935 = vld [vmem:[#allocation16 + $0x230] sm:$0xff]
    %v1936 = vld [vmem:[#allocation16 + $0x238] sm:$0xff]
    %v1937 = vld [vmem:[#allocation16 + $0x240] sm:$0xff]
    %v1938 = vld [vmem:[#allocation16 + $0x248] sm:$0xff]
    %v1939 = vld [vmem:[#allocation16 + $0x250] sm:$0xff]
    %v1940 = vld [vmem:[#allocation16 + $0x258] sm:$0xff]
    %v1941 = vld [vmem:[#allocation16 + $0x260] sm:$0xff]
    %v1942 = vld [vmem:[#allocation16 + $0x268] sm:$0xff]
    %v1943 = vld [vmem:[#allocation16 + $0x270] sm:$0xff]
    %v1944 = vld [vmem:[#allocation16 + $0x278] sm:$0xff]
    %v1945 = vld [vmem:[#allocation16 + $0x280] sm:$0xff]
    %v1946 = vld [vmem:[#allocation16 + $0x288] sm:$0xff]
    %v1947 = vld [vmem:[#allocation16 + $0x290] sm:$0xff]
    %v1948 = vld [vmem:[#allocation16 + $0x298] sm:$0xff]
    %v1949 = vld [vmem:[#allocation16 + $0x2a0] sm:$0xff]
    %v1950 = vld [vmem:[#allocation16 + $0x2a8] sm:$0xff]
    %v1951 = vld [vmem:[#allocation16 + $0x2b0] sm:$0xff]
    %v1952 = vld [vmem:[#allocation16 + $0x2b8] sm:$0xff]
    %v1953 = vld [vmem:[#allocation16 + $0x2c0] sm:$0xff]
    %v1954 = vld [vmem:[#allocation16 + $0x2c8] sm:$0xff]
    %v1955 = vld [vmem:[#allocation16 + $0x2d0] sm:$0xff]
    %v1956 = vld [vmem:[#allocation16 + $0x2d8] sm:$0xff]
    %v1957 = vld [vmem:[#allocation16 + $0x2e0] sm:$0xff]
    %v1958 = vld [vmem:[#allocation16 + $0x2e8] sm:$0xff]
    %v1959 = vld [vmem:[#allocation16 + $0x2f0] sm:$0xff]
    %v1960 = vld [vmem:[#allocation16 + $0x2f8] sm:$0xff]
    %v1961 = vld [vmem:[#allocation16 + $0x300] sm:$0xff]
    %v1962 = vld [vmem:[#allocation16 + $0x308] sm:$0xff]
    %v1963 = vld [vmem:[#allocation16 + $0x310] sm:$0xff]
    %v1964 = vld [vmem:[#allocation16 + $0x318] sm:$0xff]
    %v1965 = vld [vmem:[#allocation16 + $0x320] sm:$0xff]
    %v1966 = vld [vmem:[#allocation16 + $0x328] sm:$0xff]
    %v1967 = vld [vmem:[#allocation16 + $0x330] sm:$0xff]
    %v1968 = vld [vmem:[#allocation16 + $0x338] sm:$0xff]
    %v1969 = vld [vmem:[#allocation16 + $0x340] sm:$0xff]
    %v1970 = vld [vmem:[#allocation16 + $0x348] sm:$0xff]
    %v1971 = vld [vmem:[#allocation16 + $0x350] sm:$0xff]
    %v1972 = vld [vmem:[#allocation16 + $0x358] sm:$0xff]
    %v1973 = vld [vmem:[#allocation16 + $0x360] sm:$0xff]
    %v1974 = vld [vmem:[#allocation16 + $0x368] sm:$0xff]
    %v1975 = vld [vmem:[#allocation16 + $0x370] sm:$0xff]
    %v1976 = vld [vmem:[#allocation16 + $0x378] sm:$0xff]
    %v1977 = vld [vmem:[#allocation16 + $0x380] sm:$0xff]
    %v1978 = vld [vmem:[#allocation16 + $0x388] sm:$0xff]
    %v1979 = vld [vmem:[#allocation16 + $0x390] sm:$0xff]
    %v1980 = vld [vmem:[#allocation16 + $0x398] sm:$0xff]
    %v1981 = vld [vmem:[#allocation16 + $0x3a0] sm:$0xff]
    %v1982 = vld [vmem:[#allocation16 + $0x3a8] sm:$0xff]
    %v1983 = vld [vmem:[#allocation16 + $0x3b0] sm:$0xff]
    %v1984 = vld [vmem:[#allocation16 + $0x3b8] sm:$0xff]
    %v1985 = vld [vmem:[#allocation16 + $0x3c0] sm:$0xff]
    %v1986 = vld [vmem:[#allocation16 + $0x3c8] sm:$0xff]
    %v1987 = vld [vmem:[#allocation16 + $0x3d0] sm:$0xff]
    %v1988 = vld [vmem:[#allocation16 + $0x3d8] sm:$0xff]
    %v1989 = vld [vmem:[#allocation16 + $0x3e0] sm:$0xff]
    %v1990 = vld [vmem:[#allocation16 + $0x3e8] sm:$0xff]
    %v1991 = vld [vmem:[#allocation16 + $0x3f0] sm:$0xff]
    %v1992 = vld [vmem:[#allocation16 + $0x3f8] sm:$0xff]
    %v1993 = vld [vmem:[#allocation16 + $0x400] sm:$0xff]
    %v1994 = vld [vmem:[#allocation16 + $0x408] sm:$0xff]
    %v1995 = vld [vmem:[#allocation16 + $0x410] sm:$0xff]
    %v1996 = vld [vmem:[#allocation16 + $0x418] sm:$0xff]
    %v1997 = vld [vmem:[#allocation16 + $0x420] sm:$0xff]
    %v1998 = vld [vmem:[#allocation16 + $0x428] sm:$0xff]
    %v1999 = vld [vmem:[#allocation16 + $0x430] sm:$0xff]
    %v2000 = vld [vmem:[#allocation16 + $0x438] sm:$0xff]
    %v2001 = vld [vmem:[#allocation16 + $0x440] sm:$0xff]
    %v2002 = vld [vmem:[#allocation16 + $0x448] sm:$0xff]
    %v2003 = vld [vmem:[#allocation16 + $0x450] sm:$0xff]
    %v2004 = vld [vmem:[#allocation16 + $0x458] sm:$0xff]
    %v2005 = vld [vmem:[#allocation16 + $0x460] sm:$0xff]
    %v2006 = vld [vmem:[#allocation16 + $0x468] sm:$0xff]
    %v2007 = vld [vmem:[#allocation16 + $0x470] sm:$0xff]
    %v2008 = vld [vmem:[#allocation16 + $0x478] sm:$0xff]
    %v2009 = vld [vmem:[#allocation16 + $0x480] sm:$0xff]
    %v2010 = vld [vmem:[#allocation16 + $0x488] sm:$0xff]
    %v2011 = vld [vmem:[#allocation16 + $0x490] sm:$0xff]
    %v2012 = vld [vmem:[#allocation16 + $0x498] sm:$0xff]
    %v2013 = vld [vmem:[#allocation16 + $0x4a0] sm:$0xff]
    %v2014 = vld [vmem:[#allocation16 + $0x4a8] sm:$0xff]
    %v2015 = vld [vmem:[#allocation16 + $0x4b0] sm:$0xff]
    %v2016 = vld [vmem:[#allocation16 + $0x4b8] sm:$0xff]
    %v2017 = vld [vmem:[#allocation16 + $0x4c0] sm:$0xff]
    %v2018 = vld [vmem:[#allocation16 + $0x4c8] sm:$0xff]
    %v2019 = vld [vmem:[#allocation16 + $0x4d0] sm:$0xff]
    %v2020 = vld [vmem:[#allocation16 + $0x4d8] sm:$0xff]
    %v2021 = vld [vmem:[#allocation16 + $0x4e0] sm:$0xff]
    %v2022 = vld [vmem:[#allocation16 + $0x4e8] sm:$0xff]
    %v2023 = vld [vmem:[#allocation16 + $0x4f0] sm:$0xff]
    %v2024 = vld [vmem:[#allocation16 + $0x4f8] sm:$0xff]
    %v2025 = vld [vmem:[#allocation16 + $0x500] sm:$0xff]
    %v2026 = vld [vmem:[#allocation16 + $0x508] sm:$0xff]
    %v2027 = vld [vmem:[#allocation16 + $0x510] sm:$0xff]
    %v2028 = vld [vmem:[#allocation16 + $0x518] sm:$0xff]
    %v2029 = vld [vmem:[#allocation16 + $0x520] sm:$0xff]
    %v2030 = vld [vmem:[#allocation16 + $0x528] sm:$0xff]
    %v2031 = vld [vmem:[#allocation16 + $0x530] sm:$0xff]
    %v2032 = vld [vmem:[#allocation16 + $0x538] sm:$0xff]
    %v2033 = vld [vmem:[#allocation16 + $0x540] sm:$0xff]
    %v2034 = vld [vmem:[#allocation16 + $0x548] sm:$0xff]
    %v2035 = vld [vmem:[#allocation16 + $0x550] sm:$0xff]
    %v2036 = vld [vmem:[#allocation16 + $0x558] sm:$0xff]
    %v2037 = vld [vmem:[#allocation16 + $0x560] sm:$0xff]
    %v2038 = vld [vmem:[#allocation16 + $0x568] sm:$0xff]
    %v2039 = vld [vmem:[#allocation16 + $0x570] sm:$0xff]
    %v2040 = vld [vmem:[#allocation16 + $0x578] sm:$0xff]
    %v2041 = vld [vmem:[#allocation16 + $0x580] sm:$0xff]
    %v2042 = vld [vmem:[#allocation16 + $0x588] sm:$0xff]
    %v2043 = vld [vmem:[#allocation16 + $0x590] sm:$0xff]
    %v2044 = vld [vmem:[#allocation16 + $0x598] sm:$0xff]
    %v2045 = vld [vmem:[#allocation16 + $0x5a0] sm:$0xff]
    %v2046 = vld [vmem:[#allocation16 + $0x5a8] sm:$0xff]
    %v2047 = vld [vmem:[#allocation16 + $0x5b0] sm:$0xff]
    %v2048 = vld [vmem:[#allocation16 + $0x5b8] sm:$0xff]
    %v2049 = vld [vmem:[#allocation16 + $0x5c0] sm:$0xff]
    %v2050 = vld [vmem:[#allocation16 + $0x5c8] sm:$0xff]
    %v2051 = vld [vmem:[#allocation16 + $0x5d0] sm:$0xff]
    %v2052 = vld [vmem:[#allocation16 + $0x5d8] sm:$0xff]
    %v2053 = vld [vmem:[#allocation16 + $0x5e0] sm:$0xff]
    %v2054 = vld [vmem:[#allocation16 + $0x5e8] sm:$0xff]
    %v2055 = vld [vmem:[#allocation16 + $0x5f0] sm:$0xff]
    %v2056 = vld [vmem:[#allocation16 + $0x5f8] sm:$0xff]
    %v2057 = vld [vmem:[#allocation16 + $0x600] sm:$0xff]
    %v2058 = vld [vmem:[#allocation16 + $0x608] sm:$0xff]
    %v2059 = vld [vmem:[#allocation16 + $0x610] sm:$0xff]
    %v2060 = vld [vmem:[#allocation16 + $0x618] sm:$0xff]
    %v2061 = vld [vmem:[#allocation16 + $0x620] sm:$0xff]
    %v2062 = vld [vmem:[#allocation16 + $0x628] sm:$0xff]
    %v2063 = vld [vmem:[#allocation16 + $0x630] sm:$0xff]
    %v2064 = vld [vmem:[#allocation16 + $0x638] sm:$0xff]
    %v2065 = vld [vmem:[#allocation16 + $0x640] sm:$0xff]
    %v2066 = vld [vmem:[#allocation16 + $0x648] sm:$0xff]
    %v2067 = vld [vmem:[#allocation16 + $0x650] sm:$0xff]
    %v2068 = vld [vmem:[#allocation16 + $0x658] sm:$0xff]
    %v2069 = vld [vmem:[#allocation16 + $0x660] sm:$0xff]
    %v2070 = vld [vmem:[#allocation16 + $0x668] sm:$0xff]
    %v2071 = vld [vmem:[#allocation16 + $0x670] sm:$0xff]
    %v2072 = vld [vmem:[#allocation16 + $0x678] sm:$0xff]
    %v2073 = vld [vmem:[#allocation16 + $0x680] sm:$0xff]
    %v2074 = vld [vmem:[#allocation16 + $0x688] sm:$0xff]
    %v2075 = vld [vmem:[#allocation16 + $0x690] sm:$0xff]
    %v2076 = vld [vmem:[#allocation16 + $0x698] sm:$0xff]
    %v2077 = vld [vmem:[#allocation16 + $0x6a0] sm:$0xff]
    %v2078 = vld [vmem:[#allocation16 + $0x6a8] sm:$0xff]
    %v2079 = vld [vmem:[#allocation16 + $0x6b0] sm:$0xff]
    %v2080 = vld [vmem:[#allocation16 + $0x6b8] sm:$0xff]
    %v2081 = vld [vmem:[#allocation16 + $0x6c0] sm:$0xff]
    %v2082 = vld [vmem:[#allocation16 + $0x6c8] sm:$0xff]
    %v2083 = vld [vmem:[#allocation16 + $0x6d0] sm:$0xff]
    %v2084 = vld [vmem:[#allocation16 + $0x6d8] sm:$0xff]
    %v2085 = vld [vmem:[#allocation16 + $0x6e0] sm:$0xff]
    %v2086 = vld [vmem:[#allocation16 + $0x6e8] sm:$0xff]
    %v2087 = vld [vmem:[#allocation16 + $0x6f0] sm:$0xff]
    %v2088 = vld [vmem:[#allocation16 + $0x6f8] sm:$0xff]
    %v2089 = vld [vmem:[#allocation16 + $0x700] sm:$0xff]
    %v2090 = vld [vmem:[#allocation16 + $0x708] sm:$0xff]
    %v2091 = vld [vmem:[#allocation16 + $0x710] sm:$0xff]
    %v2092 = vld [vmem:[#allocation16 + $0x718] sm:$0xff]
    %v2093 = vld [vmem:[#allocation16 + $0x720] sm:$0xff]
    %v2094 = vld [vmem:[#allocation16 + $0x728] sm:$0xff]
    %v2095 = vld [vmem:[#allocation16 + $0x730] sm:$0xff]
    %v2096 = vld [vmem:[#allocation16 + $0x738] sm:$0xff]
    %v2097 = vld [vmem:[#allocation16 + $0x740] sm:$0xff]
    %v2098 = vld [vmem:[#allocation16 + $0x748] sm:$0xff]
    %v2099 = vld [vmem:[#allocation16 + $0x750] sm:$0xff]
    %v2100 = vld [vmem:[#allocation16 + $0x758] sm:$0xff]
    %v2101 = vld [vmem:[#allocation16 + $0x760] sm:$0xff]
    %v2102 = vld [vmem:[#allocation16 + $0x768] sm:$0xff]
    %v2103 = vld [vmem:[#allocation16 + $0x770] sm:$0xff]
    %v2104 = vld [vmem:[#allocation16 + $0x778] sm:$0xff]
    %v2105 = vld [vmem:[%s9] sm:$0xff]
    %v2107 = vperm.slane %v2105, 0
    %v2108 = vperm.slane %v2105, 1
    %v2109 = vperm.slane %v2105, 2
    %v2110 = vperm.slane %v2105, 3
    %v2111 = vperm.slane %v2105, 4
    %v2112 = vperm.slane %v2105, 5
    %v2113 = vperm.slane %v2105, 6
    %v2114 = vperm.slane %v2105, 7
    %v2363 = vunpack.c.l.b16 %v1865
    %v2364 = vunpack.c.h.b16 %v1865
    %v2365 = vunpack.c.l.b16 %v1866
    %v2366 = vunpack.c.h.b16 %v1866
    %v2367 = vunpack.c.l.b16 %v1867
    %v2368 = vunpack.c.h.b16 %v1867
    %v2369 = vunpack.c.l.b16 %v1868
    %v2370 = vunpack.c.h.b16 %v1868
    %v2371 = vunpack.c.l.b16 %v1869
    %v2372 = vunpack.c.h.b16 %v1869
    %v2373 = vunpack.c.l.b16 %v1870
    %v2374 = vunpack.c.h.b16 %v1870
    %v2375 = vunpack.c.l.b16 %v1871
    %v2376 = vunpack.c.h.b16 %v1871
    %v2377 = vunpack.c.l.b16 %v1872
    %v2378 = vunpack.c.h.b16 %v1872
    %v2379 = vunpack.c.l.b16 %v1873
    %v2380 = vunpack.c.h.b16 %v1873
    %v2381 = vunpack.c.l.b16 %v1874
    %v2382 = vunpack.c.h.b16 %v1874
    %v2383 = vunpack.c.l.b16 %v1875
    %v2384 = vunpack.c.h.b16 %v1875
    %v2385 = vunpack.c.l.b16 %v1876
    %v2386 = vunpack.c.h.b16 %v1876
    %v2387 = vunpack.c.l.b16 %v1877
    %v2388 = vunpack.c.h.b16 %v1877
    %v2389 = vunpack.c.l.b16 %v1878
    %v2390 = vunpack.c.h.b16 %v1878
    %v2391 = vunpack.c.l.b16 %v1879
    %v2392 = vunpack.c.h.b16 %v1879
    %v2393 = vunpack.c.l.b16 %v1880
    %v2394 = vunpack.c.h.b16 %v1880
    %v2395 = vunpack.c.l.b16 %v1881
    %v2396 = vunpack.c.h.b16 %v1881
    %v2397 = vunpack.c.l.b16 %v1882
    %v2398 = vunpack.c.h.b16 %v1882
    %v2399 = vunpack.c.l.b16 %v1883
    %v2400 = vunpack.c.h.b16 %v1883
    %v2401 = vunpack.c.l.b16 %v1884
    %v2402 = vunpack.c.h.b16 %v1884
    %v2403 = vunpack.c.l.b16 %v1885
    %v2404 = vunpack.c.h.b16 %v1885
    %v2405 = vunpack.c.l.b16 %v1886
    %v2406 = vunpack.c.h.b16 %v1886
    %v2407 = vunpack.c.l.b16 %v1887
    %v2408 = vunpack.c.h.b16 %v1887
    %v2409 = vunpack.c.l.b16 %v1888
    %v2410 = vunpack.c.h.b16 %v1888
    %v2411 = vunpack.c.l.b16 %v1889
    %v2412 = vunpack.c.h.b16 %v1889
    %v2413 = vunpack.c.l.b16 %v1890
    %v2414 = vunpack.c.h.b16 %v1890
    %v2415 = vunpack.c.l.b16 %v1891
    %v2416 = vunpack.c.h.b16 %v1891
    %v2417 = vunpack.c.l.b16 %v1892
    %v2418 = vunpack.c.h.b16 %v1892
    %v2419 = vunpack.c.l.b16 %v1893
    %v2420 = vunpack.c.h.b16 %v1893
    %v2421 = vunpack.c.l.b16 %v1894
    %v2422 = vunpack.c.h.b16 %v1894
    %v2423 = vunpack.c.l.b16 %v1895
    %v2424 = vunpack.c.h.b16 %v1895
    %v2425 = vunpack.c.l.b16 %v1896
    %v2426 = vunpack.c.h.b16 %v1896
    %v2427 = vunpack.c.l.b16 %v1897
    %v2428 = vunpack.c.h.b16 %v1897
    %v2429 = vunpack.c.l.b16 %v1898
    %v2430 = vunpack.c.h.b16 %v1898
    %v2431 = vunpack.c.l.b16 %v1899
    %v2432 = vunpack.c.h.b16 %v1899
    %v2433 = vunpack.c.l.b16 %v1900
    %v2434 = vunpack.c.h.b16 %v1900
    %v2435 = vunpack.c.l.b16 %v1901
    %v2436 = vunpack.c.h.b16 %v1901
    %v2437 = vunpack.c.l.b16 %v1902
    %v2438 = vunpack.c.h.b16 %v1902
    %v2439 = vunpack.c.l.b16 %v1903
    %v2440 = vunpack.c.h.b16 %v1903
    %v2441 = vunpack.c.l.b16 %v1904
    %v2442 = vunpack.c.h.b16 %v1904
    %v2443 = vunpack.c.l.b16 %v1905
    %v2444 = vunpack.c.h.b16 %v1905
    %v2445 = vunpack.c.l.b16 %v1906
    %v2446 = vunpack.c.h.b16 %v1906
    %v2447 = vunpack.c.l.b16 %v1907
    %v2448 = vunpack.c.h.b16 %v1907
    %v2449 = vunpack.c.l.b16 %v1908
    %v2450 = vunpack.c.h.b16 %v1908
    %v2451 = vunpack.c.l.b16 %v1909
    %v2452 = vunpack.c.h.b16 %v1909
    %v2453 = vunpack.c.l.b16 %v1910
    %v2454 = vunpack.c.h.b16 %v1910
    %v2455 = vunpack.c.l.b16 %v1911
    %v2456 = vunpack.c.h.b16 %v1911
    %v2457 = vunpack.c.l.b16 %v1912
    %v2458 = vunpack.c.h.b16 %v1912
    %v2459 = vunpack.c.l.b16 %v1913
    %v2460 = vunpack.c.h.b16 %v1913
    %v2461 = vunpack.c.l.b16 %v1914
    %v2462 = vunpack.c.h.b16 %v1914
    %v2463 = vunpack.c.l.b16 %v1915
    %v2464 = vunpack.c.h.b16 %v1915
    %v2465 = vunpack.c.l.b16 %v1916
    %v2466 = vunpack.c.h.b16 %v1916
    %v2467 = vunpack.c.l.b16 %v1917
    %v2468 = vunpack.c.h.b16 %v1917
    %v2469 = vunpack.c.l.b16 %v1918
    %v2470 = vunpack.c.h.b16 %v1918
    %v2471 = vunpack.c.l.b16 %v1919
    %v2472 = vunpack.c.h.b16 %v1919
    %v2473 = vunpack.c.l.b16 %v1920
    %v2474 = vunpack.c.h.b16 %v1920
    %v2475 = vunpack.c.l.b16 %v1921
    %v2476 = vunpack.c.h.b16 %v1921
    %v2477 = vunpack.c.l.b16 %v1922
    %v2478 = vunpack.c.h.b16 %v1922
    %v2479 = vunpack.c.l.b16 %v1923
    %v2480 = vunpack.c.h.b16 %v1923
    %v2481 = vunpack.c.l.b16 %v1924
    %v2482 = vunpack.c.h.b16 %v1924
    %v2483 = vunpack.c.l.b16 %v1925
    %v2484 = vunpack.c.h.b16 %v1925
    %v2485 = vunpack.c.l.b16 %v1926
    %v2486 = vunpack.c.h.b16 %v1926
    %v2487 = vunpack.c.l.b16 %v1927
    %v2488 = vunpack.c.h.b16 %v1927
    %v2489 = vunpack.c.l.b16 %v1928
    %v2490 = vunpack.c.h.b16 %v1928
    %v2491 = vunpack.c.l.b16 %v1929
    %v2492 = vunpack.c.h.b16 %v1929
    %v2493 = vunpack.c.l.b16 %v1930
    %v2494 = vunpack.c.h.b16 %v1930
    %v2495 = vunpack.c.l.b16 %v1931
    %v2496 = vunpack.c.h.b16 %v1931
    %v2497 = vunpack.c.l.b16 %v1932
    %v2498 = vunpack.c.h.b16 %v1932
    %v2499 = vunpack.c.l.b16 %v1933
    %v2500 = vunpack.c.h.b16 %v1933
    %v2501 = vunpack.c.l.b16 %v1934
    %v2502 = vunpack.c.h.b16 %v1934
    %v2503 = vunpack.c.l.b16 %v1935
    %v2504 = vunpack.c.h.b16 %v1935
    %v2505 = vunpack.c.l.b16 %v1936
    %v2506 = vunpack.c.h.b16 %v1936
    %v2507 = vunpack.c.l.b16 %v1937
    %v2508 = vunpack.c.h.b16 %v1937
    %v2509 = vunpack.c.l.b16 %v1938
    %v2510 = vunpack.c.h.b16 %v1938
    %v2511 = vunpack.c.l.b16 %v1939
    %v2512 = vunpack.c.h.b16 %v1939
    %v2513 = vunpack.c.l.b16 %v1940
    %v2514 = vunpack.c.h.b16 %v1940
    %v2515 = vunpack.c.l.b16 %v1941
    %v2516 = vunpack.c.h.b16 %v1941
    %v2517 = vunpack.c.l.b16 %v1942
    %v2518 = vunpack.c.h.b16 %v1942
    %v2519 = vunpack.c.l.b16 %v1943
    %v2520 = vunpack.c.h.b16 %v1943
    %v2521 = vunpack.c.l.b16 %v1944
    %v2522 = vunpack.c.h.b16 %v1944
    %v2523 = vunpack.c.l.b16 %v1945
    %v2524 = vunpack.c.h.b16 %v1945
    %v2525 = vunpack.c.l.b16 %v1946
    %v2526 = vunpack.c.h.b16 %v1946
    %v2527 = vunpack.c.l.b16 %v1947
    %v2528 = vunpack.c.h.b16 %v1947
    %v2529 = vunpack.c.l.b16 %v1948
    %v2530 = vunpack.c.h.b16 %v1948
    %v2531 = vunpack.c.l.b16 %v1949
    %v2532 = vunpack.c.h.b16 %v1949
    %v2533 = vunpack.c.l.b16 %v1950
    %v2534 = vunpack.c.h.b16 %v1950
    %v2535 = vunpack.c.l.b16 %v1951
    %v2536 = vunpack.c.h.b16 %v1951
    %v2537 = vunpack.c.l.b16 %v1952
    %v2538 = vunpack.c.h.b16 %v1952
    %v2539 = vunpack.c.l.b16 %v1953
    %v2540 = vunpack.c.h.b16 %v1953
    %v2541 = vunpack.c.l.b16 %v1954
    %v2542 = vunpack.c.h.b16 %v1954
    %v2543 = vunpack.c.l.b16 %v1955
    %v2544 = vunpack.c.h.b16 %v1955
    %v2545 = vunpack.c.l.b16 %v1956
    %v2546 = vunpack.c.h.b16 %v1956
    %v2547 = vunpack.c.l.b16 %v1957
    %v2548 = vunpack.c.h.b16 %v1957
    %v2549 = vunpack.c.l.b16 %v1958
    %v2550 = vunpack.c.h.b16 %v1958
    %v2551 = vunpack.c.l.b16 %v1959
    %v2552 = vunpack.c.h.b16 %v1959
    %v2553 = vunpack.c.l.b16 %v1960
    %v2554 = vunpack.c.h.b16 %v1960
    %v2555 = vunpack.c.l.b16 %v1961
    %v2556 = vunpack.c.h.b16 %v1961
    %v2557 = vunpack.c.l.b16 %v1962
    %v2558 = vunpack.c.h.b16 %v1962
    %v2559 = vunpack.c.l.b16 %v1963
    %v2560 = vunpack.c.h.b16 %v1963
    %v2561 = vunpack.c.l.b16 %v1964
    %v2562 = vunpack.c.h.b16 %v1964
    %v2563 = vunpack.c.l.b16 %v1965
    %v2564 = vunpack.c.h.b16 %v1965
    %v2565 = vunpack.c.l.b16 %v1966
    %v2566 = vunpack.c.h.b16 %v1966
    %v2567 = vunpack.c.l.b16 %v1967
    %v2568 = vunpack.c.h.b16 %v1967
    %v2569 = vunpack.c.l.b16 %v1968
    %v2570 = vunpack.c.h.b16 %v1968
    %v2571 = vunpack.c.l.b16 %v1969
    %v2572 = vunpack.c.h.b16 %v1969
    %v2573 = vunpack.c.l.b16 %v1970
    %v2574 = vunpack.c.h.b16 %v1970
    %v2575 = vunpack.c.l.b16 %v1971
    %v2576 = vunpack.c.h.b16 %v1971
    %v2577 = vunpack.c.l.b16 %v1972
    %v2578 = vunpack.c.h.b16 %v1972
    %v2579 = vunpack.c.l.b16 %v1973
    %v2580 = vunpack.c.h.b16 %v1973
    %v2581 = vunpack.c.l.b16 %v1974
    %v2582 = vunpack.c.h.b16 %v1974
    %v2583 = vunpack.c.l.b16 %v1975
    %v2584 = vunpack.c.h.b16 %v1975
    %v2585 = vunpack.c.l.b16 %v1976
    %v2586 = vunpack.c.h.b16 %v1976
    %v2587 = vunpack.c.l.b16 %v1977
    %v2588 = vunpack.c.h.b16 %v1977
    %v2589 = vunpack.c.l.b16 %v1978
    %v2590 = vunpack.c.h.b16 %v1978
    %v2591 = vunpack.c.l.b16 %v1979
    %v2592 = vunpack.c.h.b16 %v1979
    %v2593 = vunpack.c.l.b16 %v1980
    %v2594 = vunpack.c.h.b16 %v1980
    %v2595 = vunpack.c.l.b16 %v1981
    %v2596 = vunpack.c.h.b16 %v1981
    %v2597 = vunpack.c.l.b16 %v1982
    %v2598 = vunpack.c.h.b16 %v1982
    %v2599 = vunpack.c.l.b16 %v1983
    %v2600 = vunpack.c.h.b16 %v1983
    %v2601 = vunpack.c.l.b16 %v1984
    %v2602 = vunpack.c.h.b16 %v1984
    %v2603 = vunpack.c.l.b16 %v1985
    %v2604 = vunpack.c.h.b16 %v1985
    %v2605 = vunpack.c.l.b16 %v1986
    %v2606 = vunpack.c.h.b16 %v1986
    %v2607 = vunpack.c.l.b16 %v1987
    %v2608 = vunpack.c.h.b16 %v1987
    %v2609 = vunpack.c.l.b16 %v1988
    %v2610 = vunpack.c.h.b16 %v1988
    %v2611 = vunpack.c.l.b16 %v1989
    %v2612 = vunpack.c.h.b16 %v1989
    %v2613 = vunpack.c.l.b16 %v1990
    %v2614 = vunpack.c.h.b16 %v1990
    %v2615 = vunpack.c.l.b16 %v1991
    %v2616 = vunpack.c.h.b16 %v1991
    %v2617 = vunpack.c.l.b16 %v1992
    %v2618 = vunpack.c.h.b16 %v1992
    %v2619 = vunpack.c.l.b16 %v1993
    %v2620 = vunpack.c.h.b16 %v1993
    %v2621 = vunpack.c.l.b16 %v1994
    %v2622 = vunpack.c.h.b16 %v1994
    %v2623 = vunpack.c.l.b16 %v1995
    %v2624 = vunpack.c.h.b16 %v1995
    %v2625 = vunpack.c.l.b16 %v1996
    %v2626 = vunpack.c.h.b16 %v1996
    %v2627 = vunpack.c.l.b16 %v1997
    %v2628 = vunpack.c.h.b16 %v1997
    %v2629 = vunpack.c.l.b16 %v1998
    %v2630 = vunpack.c.h.b16 %v1998
    %v2631 = vunpack.c.l.b16 %v1999
    %v2632 = vunpack.c.h.b16 %v1999
    %v2633 = vunpack.c.l.b16 %v2000
    %v2634 = vunpack.c.h.b16 %v2000
    %v2635 = vunpack.c.l.b16 %v2001
    %v2636 = vunpack.c.h.b16 %v2001
    %v2637 = vunpack.c.l.b16 %v2002
    %v2638 = vunpack.c.h.b16 %v2002
    %v2639 = vunpack.c.l.b16 %v2003
    %v2640 = vunpack.c.h.b16 %v2003
    %v2641 = vunpack.c.l.b16 %v2004
    %v2642 = vunpack.c.h.b16 %v2004
    %v2643 = vunpack.c.l.b16 %v2005
    %v2644 = vunpack.c.h.b16 %v2005
    %v2645 = vunpack.c.l.b16 %v2006
    %v2646 = vunpack.c.h.b16 %v2006
    %v2647 = vunpack.c.l.b16 %v2007
    %v2648 = vunpack.c.h.b16 %v2007
    %v2649 = vunpack.c.l.b16 %v2008
    %v2650 = vunpack.c.h.b16 %v2008
    %v2651 = vunpack.c.l.b16 %v2009
    %v2652 = vunpack.c.h.b16 %v2009
    %v2653 = vunpack.c.l.b16 %v2010
    %v2654 = vunpack.c.h.b16 %v2010
    %v2655 = vunpack.c.l.b16 %v2011
    %v2656 = vunpack.c.h.b16 %v2011
    %v2657 = vunpack.c.l.b16 %v2012
    %v2658 = vunpack.c.h.b16 %v2012
    %v2659 = vunpack.c.l.b16 %v2013
    %v2660 = vunpack.c.h.b16 %v2013
    %v2661 = vunpack.c.l.b16 %v2014
    %v2662 = vunpack.c.h.b16 %v2014
    %v2663 = vunpack.c.l.b16 %v2015
    %v2664 = vunpack.c.h.b16 %v2015
    %v2665 = vunpack.c.l.b16 %v2016
    %v2666 = vunpack.c.h.b16 %v2016
    %v2667 = vunpack.c.l.b16 %v2017
    %v2668 = vunpack.c.h.b16 %v2017
    %v2669 = vunpack.c.l.b16 %v2018
    %v2670 = vunpack.c.h.b16 %v2018
    %v2671 = vunpack.c.l.b16 %v2019
    %v2672 = vunpack.c.h.b16 %v2019
    %v2673 = vunpack.c.l.b16 %v2020
    %v2674 = vunpack.c.h.b16 %v2020
    %v2675 = vunpack.c.l.b16 %v2021
    %v2676 = vunpack.c.h.b16 %v2021
    %v2677 = vunpack.c.l.b16 %v2022
    %v2678 = vunpack.c.h.b16 %v2022
    %v2679 = vunpack.c.l.b16 %v2023
    %v2680 = vunpack.c.h.b16 %v2023
    %v2681 = vunpack.c.l.b16 %v2024
    %v2682 = vunpack.c.h.b16 %v2024
    %v2683 = vunpack.c.l.b16 %v2025
    %v2684 = vunpack.c.h.b16 %v2025
    %v2685 = vunpack.c.l.b16 %v2026
    %v2686 = vunpack.c.h.b16 %v2026
    %v2687 = vunpack.c.l.b16 %v2027
    %v2688 = vunpack.c.h.b16 %v2027
    %v2689 = vunpack.c.l.b16 %v2028
    %v2690 = vunpack.c.h.b16 %v2028
    %v2691 = vunpack.c.l.b16 %v2029
    %v2692 = vunpack.c.h.b16 %v2029
    %v2693 = vunpack.c.l.b16 %v2030
    %v2694 = vunpack.c.h.b16 %v2030
    %v2695 = vunpack.c.l.b16 %v2031
    %v2696 = vunpack.c.h.b16 %v2031
    %v2697 = vunpack.c.l.b16 %v2032
    %v2698 = vunpack.c.h.b16 %v2032
    %v2699 = vunpack.c.l.b16 %v2033
    %v2700 = vunpack.c.h.b16 %v2033
    %v2701 = vunpack.c.l.b16 %v2034
    %v2702 = vunpack.c.h.b16 %v2034
    %v2703 = vunpack.c.l.b16 %v2035
    %v2704 = vunpack.c.h.b16 %v2035
    %v2705 = vunpack.c.l.b16 %v2036
    %v2706 = vunpack.c.h.b16 %v2036
    %v2707 = vunpack.c.l.b16 %v2037
    %v2708 = vunpack.c.h.b16 %v2037
    %v2709 = vunpack.c.l.b16 %v2038
    %v2710 = vunpack.c.h.b16 %v2038
    %v2711 = vunpack.c.l.b16 %v2039
    %v2712 = vunpack.c.h.b16 %v2039
    %v2713 = vunpack.c.l.b16 %v2040
    %v2714 = vunpack.c.h.b16 %v2040
    %v2715 = vunpack.c.l.b16 %v2041
    %v2716 = vunpack.c.h.b16 %v2041
    %v2717 = vunpack.c.l.b16 %v2042
    %v2718 = vunpack.c.h.b16 %v2042
    %v2719 = vunpack.c.l.b16 %v2043
    %v2720 = vunpack.c.h.b16 %v2043
    %v2721 = vunpack.c.l.b16 %v2044
    %v2722 = vunpack.c.h.b16 %v2044
    %v2723 = vunpack.c.l.b16 %v2045
    %v2724 = vunpack.c.h.b16 %v2045
    %v2725 = vunpack.c.l.b16 %v2046
    %v2726 = vunpack.c.h.b16 %v2046
    %v2727 = vunpack.c.l.b16 %v2047
    %v2728 = vunpack.c.h.b16 %v2047
    %v2729 = vunpack.c.l.b16 %v2048
    %v2730 = vunpack.c.h.b16 %v2048
    %v2731 = vunpack.c.l.b16 %v2049
    %v2732 = vunpack.c.h.b16 %v2049
    %v2733 = vunpack.c.l.b16 %v2050
    %v2734 = vunpack.c.h.b16 %v2050
    %v2735 = vunpack.c.l.b16 %v2051
    %v2736 = vunpack.c.h.b16 %v2051
    %v2737 = vunpack.c.l.b16 %v2052
    %v2738 = vunpack.c.h.b16 %v2052
    %v2739 = vunpack.c.l.b16 %v2053
    %v2740 = vunpack.c.h.b16 %v2053
    %v2741 = vunpack.c.l.b16 %v2054
    %v2742 = vunpack.c.h.b16 %v2054
    %v2743 = vunpack.c.l.b16 %v2055
    %v2744 = vunpack.c.h.b16 %v2055
    %v2745 = vunpack.c.l.b16 %v2056
    %v2746 = vunpack.c.h.b16 %v2056
    %v2747 = vunpack.c.l.b16 %v2057
    %v2748 = vunpack.c.h.b16 %v2057
    %v2749 = vunpack.c.l.b16 %v2058
    %v2750 = vunpack.c.h.b16 %v2058
    %v2751 = vunpack.c.l.b16 %v2059
    %v2752 = vunpack.c.h.b16 %v2059
    %v2753 = vunpack.c.l.b16 %v2060
    %v2754 = vunpack.c.h.b16 %v2060
    %v2755 = vunpack.c.l.b16 %v2061
    %v2756 = vunpack.c.h.b16 %v2061
    %v2757 = vunpack.c.l.b16 %v2062
    %v2758 = vunpack.c.h.b16 %v2062
    %v2759 = vunpack.c.l.b16 %v2063
    %v2760 = vunpack.c.h.b16 %v2063
    %v2761 = vunpack.c.l.b16 %v2064
    %v2762 = vunpack.c.h.b16 %v2064
    %v2763 = vunpack.c.l.b16 %v2065
    %v2764 = vunpack.c.h.b16 %v2065
    %v2765 = vunpack.c.l.b16 %v2066
    %v2766 = vunpack.c.h.b16 %v2066
    %v2767 = vunpack.c.l.b16 %v2067
    %v2768 = vunpack.c.h.b16 %v2067
    %v2769 = vunpack.c.l.b16 %v2068
    %v2770 = vunpack.c.h.b16 %v2068
    %v2771 = vunpack.c.l.b16 %v2069
    %v2772 = vunpack.c.h.b16 %v2069
    %v2773 = vunpack.c.l.b16 %v2070
    %v2774 = vunpack.c.h.b16 %v2070
    %v2775 = vunpack.c.l.b16 %v2071
    %v2776 = vunpack.c.h.b16 %v2071
    %v2777 = vunpack.c.l.b16 %v2072
    %v2778 = vunpack.c.h.b16 %v2072
    %v2779 = vunpack.c.l.b16 %v2073
    %v2780 = vunpack.c.h.b16 %v2073
    %v2781 = vunpack.c.l.b16 %v2074
    %v2782 = vunpack.c.h.b16 %v2074
    %v2783 = vunpack.c.l.b16 %v2075
    %v2784 = vunpack.c.h.b16 %v2075
    %v2785 = vunpack.c.l.b16 %v2076
    %v2786 = vunpack.c.h.b16 %v2076
    %v2787 = vunpack.c.l.b16 %v2077
    %v2788 = vunpack.c.h.b16 %v2077
    %v2789 = vunpack.c.l.b16 %v2078
    %v2790 = vunpack.c.h.b16 %v2078
    %v2791 = vunpack.c.l.b16 %v2079
    %v2792 = vunpack.c.h.b16 %v2079
    %v2793 = vunpack.c.l.b16 %v2080
    %v2794 = vunpack.c.h.b16 %v2080
    %v2795 = vunpack.c.l.b16 %v2081
    %v2796 = vunpack.c.h.b16 %v2081
    %v2797 = vunpack.c.l.b16 %v2082
    %v2798 = vunpack.c.h.b16 %v2082
    %v2799 = vunpack.c.l.b16 %v2083
    %v2800 = vunpack.c.h.b16 %v2083
    %v2801 = vunpack.c.l.b16 %v2084
    %v2802 = vunpack.c.h.b16 %v2084
    %v2803 = vunpack.c.l.b16 %v2085
    %v2804 = vunpack.c.h.b16 %v2085
    %v2805 = vunpack.c.l.b16 %v2086
    %v2806 = vunpack.c.h.b16 %v2086
    %v2807 = vunpack.c.l.b16 %v2087
    %v2808 = vunpack.c.h.b16 %v2087
    %v2809 = vunpack.c.l.b16 %v2088
    %v2810 = vunpack.c.h.b16 %v2088
    %v2811 = vunpack.c.l.b16 %v2089
    %v2812 = vunpack.c.h.b16 %v2089
    %v2813 = vunpack.c.l.b16 %v2090
    %v2814 = vunpack.c.h.b16 %v2090
    %v2815 = vunpack.c.l.b16 %v2091
    %v2816 = vunpack.c.h.b16 %v2091
    %v2817 = vunpack.c.l.b16 %v2092
    %v2818 = vunpack.c.h.b16 %v2092
    %v2819 = vunpack.c.l.b16 %v2093
    %v2820 = vunpack.c.h.b16 %v2093
    %v2821 = vunpack.c.l.b16 %v2094
    %v2822 = vunpack.c.h.b16 %v2094
    %v2823 = vunpack.c.l.b16 %v2095
    %v2824 = vunpack.c.h.b16 %v2095
    %v2825 = vunpack.c.l.b16 %v2096
    %v2826 = vunpack.c.h.b16 %v2096
    %v2827 = vunpack.c.l.b16 %v2097
    %v2828 = vunpack.c.h.b16 %v2097
    %v2829 = vunpack.c.l.b16 %v2098
    %v2830 = vunpack.c.h.b16 %v2098
    %v2831 = vunpack.c.l.b16 %v2099
    %v2832 = vunpack.c.h.b16 %v2099
    %v2833 = vunpack.c.l.b16 %v2100
    %v2834 = vunpack.c.h.b16 %v2100
    %v2835 = vunpack.c.l.b16 %v2101
    %v2836 = vunpack.c.h.b16 %v2101
    %v2837 = vunpack.c.l.b16 %v2102
    %v2838 = vunpack.c.h.b16 %v2102
    %v2839 = vunpack.c.l.b16 %v2103
    %v2840 = vunpack.c.h.b16 %v2103
    %v2841 = vunpack.c.l.b16 %v2104
    %v2842 = vunpack.c.h.b16 %v2104
    %v2843 = vpack.c.b16 %v2371, %v2363
    %v2844 = vpack.c.b16 %v2372, %v2364
    %v2845 = vpack.c.b16 %v2373, %v2365
    %v2846 = vpack.c.b16 %v2374, %v2366
    %v2847 = vpack.c.b16 %v2375, %v2367
    %v2848 = vpack.c.b16 %v2376, %v2368
    %v2849 = vpack.c.b16 %v2377, %v2369
    %v2850 = vpack.c.b16 %v2378, %v2370
    %v2851 = vpack.c.b16 %v2387, %v2379
    %v2852 = vpack.c.b16 %v2388, %v2380
    %v2853 = vpack.c.b16 %v2389, %v2381
    %v2854 = vpack.c.b16 %v2390, %v2382
    %v2855 = vpack.c.b16 %v2391, %v2383
    %v2856 = vpack.c.b16 %v2392, %v2384
    %v2857 = vpack.c.b16 %v2393, %v2385
    %v2858 = vpack.c.b16 %v2394, %v2386
    %v2859 = vpack.c.b16 %v2403, %v2395
    %v2860 = vpack.c.b16 %v2404, %v2396
    %v2861 = vpack.c.b16 %v2405, %v2397
    %v2862 = vpack.c.b16 %v2406, %v2398
    %v2863 = vpack.c.b16 %v2407, %v2399
    %v2864 = vpack.c.b16 %v2408, %v2400
    %v2865 = vpack.c.b16 %v2409, %v2401
    %v2866 = vpack.c.b16 %v2410, %v2402
    %v2867 = vpack.c.b16 %v2419, %v2411
    %v2868 = vpack.c.b16 %v2420, %v2412
    %v2869 = vpack.c.b16 %v2421, %v2413
    %v2870 = vpack.c.b16 %v2422, %v2414
    %v2871 = vpack.c.b16 %v2423, %v2415
    %v2872 = vpack.c.b16 %v2424, %v2416
    %v2873 = vpack.c.b16 %v2425, %v2417
    %v2874 = vpack.c.b16 %v2426, %v2418
    %v2875 = vpack.c.b16 %v2435, %v2427
    %v2876 = vpack.c.b16 %v2436, %v2428
    %v2877 = vpack.c.b16 %v2437, %v2429
    %v2878 = vpack.c.b16 %v2438, %v2430
    %v2879 = vpack.c.b16 %v2439, %v2431
    %v2880 = vpack.c.b16 %v2440, %v2432
    %v2881 = vpack.c.b16 %v2441, %v2433
    %v2882 = vpack.c.b16 %v2442, %v2434
    %v2883 = vpack.c.b16 %v2451, %v2443
    %v2884 = vpack.c.b16 %v2452, %v2444
    %v2885 = vpack.c.b16 %v2453, %v2445
    %v2886 = vpack.c.b16 %v2454, %v2446
    %v2887 = vpack.c.b16 %v2455, %v2447
    %v2888 = vpack.c.b16 %v2456, %v2448
    %v2889 = vpack.c.b16 %v2457, %v2449
    %v2890 = vpack.c.b16 %v2458, %v2450
    %v2891 = vpack.c.b16 %v2467, %v2459
    %v2892 = vpack.c.b16 %v2468, %v2460
    %v2893 = vpack.c.b16 %v2469, %v2461
    %v2894 = vpack.c.b16 %v2470, %v2462
    %v2895 = vpack.c.b16 %v2471, %v2463
    %v2896 = vpack.c.b16 %v2472, %v2464
    %v2897 = vpack.c.b16 %v2473, %v2465
    %v2898 = vpack.c.b16 %v2474, %v2466
    %v2899 = vpack.c.b16 %v2483, %v2475
    %v2900 = vpack.c.b16 %v2484, %v2476
    %v2901 = vpack.c.b16 %v2485, %v2477
    %v2902 = vpack.c.b16 %v2486, %v2478
    %v2903 = vpack.c.b16 %v2487, %v2479
    %v2904 = vpack.c.b16 %v2488, %v2480
    %v2905 = vpack.c.b16 %v2489, %v2481
    %v2906 = vpack.c.b16 %v2490, %v2482
    %v2907 = vpack.c.b16 %v2499, %v2491
    %v2908 = vpack.c.b16 %v2500, %v2492
    %v2909 = vpack.c.b16 %v2501, %v2493
    %v2910 = vpack.c.b16 %v2502, %v2494
    %v2911 = vpack.c.b16 %v2503, %v2495
    %v2912 = vpack.c.b16 %v2504, %v2496
    %v2913 = vpack.c.b16 %v2505, %v2497
    %v2914 = vpack.c.b16 %v2506, %v2498
    %v2915 = vpack.c.b16 %v2515, %v2507
    %v2916 = vpack.c.b16 %v2516, %v2508
    %v2917 = vpack.c.b16 %v2517, %v2509
    %v2918 = vpack.c.b16 %v2518, %v2510
    %v2919 = vpack.c.b16 %v2519, %v2511
    %v2920 = vpack.c.b16 %v2520, %v2512
    %v2921 = vpack.c.b16 %v2521, %v2513
    %v2922 = vpack.c.b16 %v2522, %v2514
    %v2923 = vpack.c.b16 %v2531, %v2523
    %v2924 = vpack.c.b16 %v2532, %v2524
    %v2925 = vpack.c.b16 %v2533, %v2525
    %v2926 = vpack.c.b16 %v2534, %v2526
    %v2927 = vpack.c.b16 %v2535, %v2527
    %v2928 = vpack.c.b16 %v2536, %v2528
    %v2929 = vpack.c.b16 %v2537, %v2529
    %v2930 = vpack.c.b16 %v2538, %v2530
    %v2931 = vpack.c.b16 %v2547, %v2539
    %v2932 = vpack.c.b16 %v2548, %v2540
    %v2933 = vpack.c.b16 %v2549, %v2541
    %v2934 = vpack.c.b16 %v2550, %v2542
    %v2935 = vpack.c.b16 %v2551, %v2543
    %v2936 = vpack.c.b16 %v2552, %v2544
    %v2937 = vpack.c.b16 %v2553, %v2545
    %v2938 = vpack.c.b16 %v2554, %v2546
    %v2939 = vpack.c.b16 %v2563, %v2555
    %v2940 = vpack.c.b16 %v2564, %v2556
    %v2941 = vpack.c.b16 %v2565, %v2557
    %v2942 = vpack.c.b16 %v2566, %v2558
    %v2943 = vpack.c.b16 %v2567, %v2559
    %v2944 = vpack.c.b16 %v2568, %v2560
    %v2945 = vpack.c.b16 %v2569, %v2561
    %v2946 = vpack.c.b16 %v2570, %v2562
    %v2947 = vpack.c.b16 %v2579, %v2571
    %v2948 = vpack.c.b16 %v2580, %v2572
    %v2949 = vpack.c.b16 %v2581, %v2573
    %v2950 = vpack.c.b16 %v2582, %v2574
    %v2951 = vpack.c.b16 %v2583, %v2575
    %v2952 = vpack.c.b16 %v2584, %v2576
    %v2953 = vpack.c.b16 %v2585, %v2577
    %v2954 = vpack.c.b16 %v2586, %v2578
    %v2955 = vpack.c.b16 %v2595, %v2587
    %v2956 = vpack.c.b16 %v2596, %v2588
    %v2957 = vpack.c.b16 %v2597, %v2589
    %v2958 = vpack.c.b16 %v2598, %v2590
    %v2959 = vpack.c.b16 %v2599, %v2591
    %v2960 = vpack.c.b16 %v2600, %v2592
    %v2961 = vpack.c.b16 %v2601, %v2593
    %v2962 = vpack.c.b16 %v2602, %v2594
    %v2963 = vpack.c.b16 %v2611, %v2603
    %v2964 = vpack.c.b16 %v2612, %v2604
    %v2965 = vpack.c.b16 %v2613, %v2605
    %v2966 = vpack.c.b16 %v2614, %v2606
    %v2967 = vpack.c.b16 %v2615, %v2607
    %v2968 = vpack.c.b16 %v2616, %v2608
    %v2969 = vpack.c.b16 %v2617, %v2609
    %v2970 = vpack.c.b16 %v2618, %v2610
    %v2971 = vpack.c.b16 %v2627, %v2619
    %v2972 = vpack.c.b16 %v2628, %v2620
    %v2973 = vpack.c.b16 %v2629, %v2621
    %v2974 = vpack.c.b16 %v2630, %v2622
    %v2975 = vpack.c.b16 %v2631, %v2623
    %v2976 = vpack.c.b16 %v2632, %v2624
    %v2977 = vpack.c.b16 %v2633, %v2625
    %v2978 = vpack.c.b16 %v2634, %v2626
    %v2979 = vpack.c.b16 %v2643, %v2635
    %v2980 = vpack.c.b16 %v2644, %v2636
    %v2981 = vpack.c.b16 %v2645, %v2637
    %v2982 = vpack.c.b16 %v2646, %v2638
    %v2983 = vpack.c.b16 %v2647, %v2639
    %v2984 = vpack.c.b16 %v2648, %v2640
    %v2985 = vpack.c.b16 %v2649, %v2641
    %v2986 = vpack.c.b16 %v2650, %v2642
    %v2987 = vpack.c.b16 %v2659, %v2651
    %v2988 = vpack.c.b16 %v2660, %v2652
    %v2989 = vpack.c.b16 %v2661, %v2653
    %v2990 = vpack.c.b16 %v2662, %v2654
    %v2991 = vpack.c.b16 %v2663, %v2655
    %v2992 = vpack.c.b16 %v2664, %v2656
    %v2993 = vpack.c.b16 %v2665, %v2657
    %v2994 = vpack.c.b16 %v2666, %v2658
    %v2995 = vpack.c.b16 %v2675, %v2667
    %v2996 = vpack.c.b16 %v2676, %v2668
    %v2997 = vpack.c.b16 %v2677, %v2669
    %v2998 = vpack.c.b16 %v2678, %v2670
    %v2999 = vpack.c.b16 %v2679, %v2671
    %v3000 = vpack.c.b16 %v2680, %v2672
    %v3001 = vpack.c.b16 %v2681, %v2673
    %v3002 = vpack.c.b16 %v2682, %v2674
    %v3003 = vpack.c.b16 %v2691, %v2683
    %v3004 = vpack.c.b16 %v2692, %v2684
    %v3005 = vpack.c.b16 %v2693, %v2685
    %v3006 = vpack.c.b16 %v2694, %v2686
    %v3007 = vpack.c.b16 %v2695, %v2687
    %v3008 = vpack.c.b16 %v2696, %v2688
    %v3009 = vpack.c.b16 %v2697, %v2689
    %v3010 = vpack.c.b16 %v2698, %v2690
    %v3011 = vpack.c.b16 %v2707, %v2699
    %v3012 = vpack.c.b16 %v2708, %v2700
    %v3013 = vpack.c.b16 %v2709, %v2701
    %v3014 = vpack.c.b16 %v2710, %v2702
    %v3015 = vpack.c.b16 %v2711, %v2703
    %v3016 = vpack.c.b16 %v2712, %v2704
    %v3017 = vpack.c.b16 %v2713, %v2705
    %v3018 = vpack.c.b16 %v2714, %v2706
    %v3019 = vpack.c.b16 %v2723, %v2715
    %v3020 = vpack.c.b16 %v2724, %v2716
    %v3021 = vpack.c.b16 %v2725, %v2717
    %v3022 = vpack.c.b16 %v2726, %v2718
    %v3023 = vpack.c.b16 %v2727, %v2719
    %v3024 = vpack.c.b16 %v2728, %v2720
    %v3025 = vpack.c.b16 %v2729, %v2721
    %v3026 = vpack.c.b16 %v2730, %v2722
    %v3027 = vpack.c.b16 %v2739, %v2731
    %v3028 = vpack.c.b16 %v2740, %v2732
    %v3029 = vpack.c.b16 %v2741, %v2733
    %v3030 = vpack.c.b16 %v2742, %v2734
    %v3031 = vpack.c.b16 %v2743, %v2735
    %v3032 = vpack.c.b16 %v2744, %v2736
    %v3033 = vpack.c.b16 %v2745, %v2737
    %v3034 = vpack.c.b16 %v2746, %v2738
    %v3035 = vpack.c.b16 %v2755, %v2747
    %v3036 = vpack.c.b16 %v2756, %v2748
    %v3037 = vpack.c.b16 %v2757, %v2749
    %v3038 = vpack.c.b16 %v2758, %v2750
    %v3039 = vpack.c.b16 %v2759, %v2751
    %v3040 = vpack.c.b16 %v2760, %v2752
    %v3041 = vpack.c.b16 %v2761, %v2753
    %v3042 = vpack.c.b16 %v2762, %v2754
    %v3043 = vpack.c.b16 %v2771, %v2763
    %v3044 = vpack.c.b16 %v2772, %v2764
    %v3045 = vpack.c.b16 %v2773, %v2765
    %v3046 = vpack.c.b16 %v2774, %v2766
    %v3047 = vpack.c.b16 %v2775, %v2767
    %v3048 = vpack.c.b16 %v2776, %v2768
    %v3049 = vpack.c.b16 %v2777, %v2769
    %v3050 = vpack.c.b16 %v2778, %v2770
    %v3051 = vpack.c.b16 %v2787, %v2779
    %v3052 = vpack.c.b16 %v2788, %v2780
    %v3053 = vpack.c.b16 %v2789, %v2781
    %v3054 = vpack.c.b16 %v2790, %v2782
    %v3055 = vpack.c.b16 %v2791, %v2783
    %v3056 = vpack.c.b16 %v2792, %v2784
    %v3057 = vpack.c.b16 %v2793, %v2785
    %v3058 = vpack.c.b16 %v2794, %v2786
    %v3059 = vpack.c.b16 %v2803, %v2795
    %v3060 = vpack.c.b16 %v2804, %v2796
    %v3061 = vpack.c.b16 %v2805, %v2797
    %v3062 = vpack.c.b16 %v2806, %v2798
    %v3063 = vpack.c.b16 %v2807, %v2799
    %v3064 = vpack.c.b16 %v2808, %v2800
    %v3065 = vpack.c.b16 %v2809, %v2801
    %v3066 = vpack.c.b16 %v2810, %v2802
    %v3067 = vpack.c.b16 %v2819, %v2811
    %v3068 = vpack.c.b16 %v2820, %v2812
    %v3069 = vpack.c.b16 %v2821, %v2813
    %v3070 = vpack.c.b16 %v2822, %v2814
    %v3071 = vpack.c.b16 %v2823, %v2815
    %v3072 = vpack.c.b16 %v2824, %v2816
    %v3073 = vpack.c.b16 %v2825, %v2817
    %v3074 = vpack.c.b16 %v2826, %v2818
    %v3075 = vpack.c.b16 %v2835, %v2827
    %v3076 = vpack.c.b16 %v2836, %v2828
    %v3077 = vpack.c.b16 %v2837, %v2829
    %v3078 = vpack.c.b16 %v2838, %v2830
    %v3079 = vpack.c.b16 %v2839, %v2831
    %v3080 = vpack.c.b16 %v2840, %v2832
    %v3081 = vpack.c.b16 %v2841, %v2833
    %v3082 = vpack.c.b16 %v2842, %v2834
    %v3324 = vsel %vm236, %v1864, 0
    %3326 = vmatpush.bf16.msra.mxu0 %v2899
    %3327 = vmatpush.bf16.msra.mxu0 %v2891
    %3328 = vmatpush.bf16.msra.mxu0 %v2883
    %3329 = vmatpush.bf16.msra.mxu0 %v2875
    %3330 = vmatpush.bf16.msra.mxu0 %v2867
    %3331 = vmatpush.bf16.msra.mxu0 %v2859
    %3332 = vmatpush.bf16.msra.mxu0 %v2851
    %3333 = vmatpush.bf16.msra.mxu0 %v2843
    %3334 = vmatmul.bf16.gmra.mxu0 %v1861
    %v3335 = vpop.f32.mrf.mxu0
    %v3336 = vadd.f32 %v2107, %v3335
    %v3337 = vpop.f32.mrf.mxu0
    %3338 = vdwg.mxu0
    %3339 = vmatpush.bf16.msra.mxu0 %v2963
    %3340 = vmatpush.bf16.msra.mxu0 %v2955
    %3341 = vmatpush.bf16.msra.mxu0 %v2947
    %3342 = vmatpush.bf16.msra.mxu0 %v2939
    %3343 = vmatpush.bf16.msra.mxu0 %v2931
    %3344 = vmatpush.bf16.msra.mxu0 %v2923
    %3345 = vmatpush.bf16.msra.mxu0 %v2915
    %3346 = vmatpush.bf16.msra.mxu0 %v2907
    %3347 = vmatmul.bf16.gmra.mxu0 %v1862
    %v3348 = vpop.f32.mrf.mxu0
    %v3349 = vadd.f32 %v3336, %v3348
    %v3350 = vpop.f32.mrf.mxu0
    %3351 = vdwg.mxu0
    %3352 = vmatpush.bf16.msra.mxu0 %v3027
    %3353 = vmatpush.bf16.msra.mxu0 %v3019
    %3354 = vmatpush.bf16.msra.mxu0 %v3011
    %3355 = vmatpush.bf16.msra.mxu0 %v3003
    %3356 = vmatpush.bf16.msra.mxu0 %v2995
    %3357 = vmatpush.bf16.msra.mxu0 %v2987
    %3358 = vmatpush.bf16.msra.mxu0 %v2979
    %3359 = vmatpush.bf16.msra.mxu0 %v2971
    %3360 = vmatmul.bf16.gmra.mxu0 %v1863
    %v3361 = vpop.f32.mrf.mxu0
    %v3362 = vadd.f32 %v3349, %v3361
    %v3363 = vpop.f32.mrf.mxu0
    %3364 = vdwg.mxu0
    %3365 = vmatpush.bf16.msra.mxu0 0
    %3366 = vmatpush.bf16.msra.mxu0 0
    %3367 = vmatpush.bf16.msra.mxu0 %v3075
    %3368 = vmatpush.bf16.msra.mxu0 %v3067
    %3369 = vmatpush.bf16.msra.mxu0 %v3059
    %3370 = vmatpush.bf16.msra.mxu0 %v3051
    %3371 = vmatpush.bf16.msra.mxu0 %v3043
    %3372 = vmatpush.bf16.msra.mxu0 %v3035
    %3373 = vmatmul.bf16.gmra.mxu0 %v3324
    %v3374 = vpop.f32.mrf.mxu0
    %v3375 = vadd.f32 %v3362, %v3374
    %v3376 = vpop.f32.mrf.mxu0
    %3377 = vdwg.mxu0
    %3378 = vmatpush.bf16.msra.mxu0 %v2900
    %3379 = vmatpush.bf16.msra.mxu0 %v2892
    %3380 = vmatpush.bf16.msra.mxu0 %v2884
    %3381 = vmatpush.bf16.msra.mxu0 %v2876
    %3382 = vmatpush.bf16.msra.mxu0 %v2868
    %3383 = vmatpush.bf16.msra.mxu0 %v2860
    %3384 = vmatpush.bf16.msra.mxu0 %v2852
    %3385 = vmatpush.bf16.msra.mxu0 %v2844
    %3386 = vmatmul.bf16.gmra.mxu0 %v1861
    %v3387 = vpop.f32.mrf.mxu0
    %v3388 = vadd.f32 %v2108, %v3387
    %v3389 = vpop.f32.mrf.mxu0
    %3390 = vdwg.mxu0
    %3391 = vmatpush.bf16.msra.mxu0 %v2964
    %3392 = vmatpush.bf16.msra.mxu0 %v2956
    %3393 = vmatpush.bf16.msra.mxu0 %v2948
    %3394 = vmatpush.bf16.msra.mxu0 %v2940
    %3395 = vmatpush.bf16.msra.mxu0 %v2932
    %3396 = vmatpush.bf16.msra.mxu0 %v2924
    %3397 = vmatpush.bf16.msra.mxu0 %v2916
    %3398 = vmatpush.bf16.msra.mxu0 %v2908
    %3399 = vmatmul.bf16.gmra.mxu0 %v1862
    %v3400 = vpop.f32.mrf.mxu0
    %v3401 = vadd.f32 %v3388, %v3400
    %v3402 = vpop.f32.mrf.mxu0
    %3403 = vdwg.mxu0
    %3404 = vmatpush.bf16.msra.mxu0 %v3028
    %3405 = vmatpush.bf16.msra.mxu0 %v3020
    %3406 = vmatpush.bf16.msra.mxu0 %v3012
    %3407 = vmatpush.bf16.msra.mxu0 %v3004
    %3408 = vmatpush.bf16.msra.mxu0 %v2996
    %3409 = vmatpush.bf16.msra.mxu0 %v2988
    %3410 = vmatpush.bf16.msra.mxu0 %v2980
    %3411 = vmatpush.bf16.msra.mxu0 %v2972
    %3412 = vmatmul.bf16.gmra.mxu0 %v1863
    %v3413 = vpop.f32.mrf.mxu0
    %v3414 = vadd.f32 %v3401, %v3413
    %v3415 = vpop.f32.mrf.mxu0
    %3416 = vdwg.mxu0
    %3417 = vmatpush.bf16.msra.mxu0 0
    %3418 = vmatpush.bf16.msra.mxu0 0
    %3419 = vmatpush.bf16.msra.mxu0 %v3076
    %3420 = vmatpush.bf16.msra.mxu0 %v3068
    %3421 = vmatpush.bf16.msra.mxu0 %v3060
    %3422 = vmatpush.bf16.msra.mxu0 %v3052
    %3423 = vmatpush.bf16.msra.mxu0 %v3044
    %3424 = vmatpush.bf16.msra.mxu0 %v3036
    %3425 = vmatmul.bf16.gmra.mxu0 %v3324
    %v3426 = vpop.f32.mrf.mxu0
    %v3427 = vadd.f32 %v3414, %v3426
    %v3428 = vpop.f32.mrf.mxu0
    %3429 = vdwg.mxu0
    %3430 = vmatpush.bf16.msra.mxu0 %v2901
    %3431 = vmatpush.bf16.msra.mxu0 %v2893
    %3432 = vmatpush.bf16.msra.mxu0 %v2885
    %3433 = vmatpush.bf16.msra.mxu0 %v2877
    %3434 = vmatpush.bf16.msra.mxu0 %v2869
    %3435 = vmatpush.bf16.msra.mxu0 %v2861
    %3436 = vmatpush.bf16.msra.mxu0 %v2853
    %3437 = vmatpush.bf16.msra.mxu0 %v2845
    %3438 = vmatmul.bf16.gmra.mxu0 %v1861
    %v3439 = vpop.f32.mrf.mxu0
    %v3440 = vadd.f32 %v2109, %v3439
    %v3441 = vpop.f32.mrf.mxu0
    %3442 = vdwg.mxu0
    %3443 = vmatpush.bf16.msra.mxu0 %v2965
    %3444 = vmatpush.bf16.msra.mxu0 %v2957
    %3445 = vmatpush.bf16.msra.mxu0 %v2949
    %3446 = vmatpush.bf16.msra.mxu0 %v2941
    %3447 = vmatpush.bf16.msra.mxu0 %v2933
    %3448 = vmatpush.bf16.msra.mxu0 %v2925
    %3449 = vmatpush.bf16.msra.mxu0 %v2917
    %3450 = vmatpush.bf16.msra.mxu0 %v2909
    %3451 = vmatmul.bf16.gmra.mxu0 %v1862
    %v3452 = vpop.f32.mrf.mxu0
    %v3453 = vadd.f32 %v3440, %v3452
    %v3454 = vpop.f32.mrf.mxu0
    %3455 = vdwg.mxu0
    %3456 = vmatpush.bf16.msra.mxu0 %v3029
    %3457 = vmatpush.bf16.msra.mxu0 %v3021
    %3458 = vmatpush.bf16.msra.mxu0 %v3013
    %3459 = vmatpush.bf16.msra.mxu0 %v3005
    %3460 = vmatpush.bf16.msra.mxu0 %v2997
    %3461 = vmatpush.bf16.msra.mxu0 %v2989
    %3462 = vmatpush.bf16.msra.mxu0 %v2981
    %3463 = vmatpush.bf16.msra.mxu0 %v2973
    %3464 = vmatmul.bf16.gmra.mxu0 %v1863
    %v3465 = vpop.f32.mrf.mxu0
    %v3466 = vadd.f32 %v3453, %v3465
    %v3467 = vpop.f32.mrf.mxu0
    %3468 = vdwg.mxu0
    %3469 = vmatpush.bf16.msra.mxu0 0
    %3470 = vmatpush.bf16.msra.mxu0 0
    %3471 = vmatpush.bf16.msra.mxu0 %v3077
    %3472 = vmatpush.bf16.msra.mxu0 %v3069
    %3473 = vmatpush.bf16.msra.mxu0 %v3061
    %3474 = vmatpush.bf16.msra.mxu0 %v3053
    %3475 = vmatpush.bf16.msra.mxu0 %v3045
    %3476 = vmatpush.bf16.msra.mxu0 %v3037
    %3477 = vmatmul.bf16.gmra.mxu0 %v3324
    %v3478 = vpop.f32.mrf.mxu0
    %v3479 = vadd.f32 %v3466, %v3478
    %v3480 = vpop.f32.mrf.mxu0
    %3481 = vdwg.mxu0
    %3482 = vmatpush.bf16.msra.mxu0 %v2902
    %3483 = vmatpush.bf16.msra.mxu0 %v2894
    %3484 = vmatpush.bf16.msra.mxu0 %v2886
    %3485 = vmatpush.bf16.msra.mxu0 %v2878
    %3486 = vmatpush.bf16.msra.mxu0 %v2870
    %3487 = vmatpush.bf16.msra.mxu0 %v2862
    %3488 = vmatpush.bf16.msra.mxu0 %v2854
    %3489 = vmatpush.bf16.msra.mxu0 %v2846
    %3490 = vmatmul.bf16.gmra.mxu0 %v1861
    %v3491 = vpop.f32.mrf.mxu0
    %v3492 = vadd.f32 %v2110, %v3491
    %v3493 = vpop.f32.mrf.mxu0
    %3494 = vdwg.mxu0
    %3495 = vmatpush.bf16.msra.mxu0 %v2966
    %3496 = vmatpush.bf16.msra.mxu0 %v2958
    %3497 = vmatpush.bf16.msra.mxu0 %v2950
    %3498 = vmatpush.bf16.msra.mxu0 %v2942
    %3499 = vmatpush.bf16.msra.mxu0 %v2934
    %3500 = vmatpush.bf16.msra.mxu0 %v2926
    %3501 = vmatpush.bf16.msra.mxu0 %v2918
    %3502 = vmatpush.bf16.msra.mxu0 %v2910
    %3503 = vmatmul.bf16.gmra.mxu0 %v1862
    %v3504 = vpop.f32.mrf.mxu0
    %v3505 = vadd.f32 %v3492, %v3504
    %v3506 = vpop.f32.mrf.mxu0
    %3507 = vdwg.mxu0
    %3508 = vmatpush.bf16.msra.mxu0 %v3030
    %3509 = vmatpush.bf16.msra.mxu0 %v3022
    %3510 = vmatpush.bf16.msra.mxu0 %v3014
    %3511 = vmatpush.bf16.msra.mxu0 %v3006
    %3512 = vmatpush.bf16.msra.mxu0 %v2998
    %3513 = vmatpush.bf16.msra.mxu0 %v2990
    %3514 = vmatpush.bf16.msra.mxu0 %v2982
    %3515 = vmatpush.bf16.msra.mxu0 %v2974
    %3516 = vmatmul.bf16.gmra.mxu0 %v1863
    %v3517 = vpop.f32.mrf.mxu0
    %v3518 = vadd.f32 %v3505, %v3517
    %v3519 = vpop.f32.mrf.mxu0
    %3520 = vdwg.mxu0
    %3521 = vmatpush.bf16.msra.mxu0 0
    %3522 = vmatpush.bf16.msra.mxu0 0
    %3523 = vmatpush.bf16.msra.mxu0 %v3078
    %3524 = vmatpush.bf16.msra.mxu0 %v3070
    %3525 = vmatpush.bf16.msra.mxu0 %v3062
    %3526 = vmatpush.bf16.msra.mxu0 %v3054
    %3527 = vmatpush.bf16.msra.mxu0 %v3046
    %3528 = vmatpush.bf16.msra.mxu0 %v3038
    %3529 = vmatmul.bf16.gmra.mxu0 %v3324
    %v3530 = vpop.f32.mrf.mxu0
    %v3531 = vadd.f32 %v3518, %v3530
    %v3532 = vpop.f32.mrf.mxu0
    %3533 = vdwg.mxu0
    %3534 = vmatpush.bf16.msra.mxu0 %v2903
    %3535 = vmatpush.bf16.msra.mxu0 %v2895
    %3536 = vmatpush.bf16.msra.mxu0 %v2887
    %3537 = vmatpush.bf16.msra.mxu0 %v2879
    %3538 = vmatpush.bf16.msra.mxu0 %v2871
    %3539 = vmatpush.bf16.msra.mxu0 %v2863
    %3540 = vmatpush.bf16.msra.mxu0 %v2855
    %3541 = vmatpush.bf16.msra.mxu0 %v2847
    %3542 = vmatmul.bf16.gmra.mxu0 %v1861
    %v3543 = vpop.f32.mrf.mxu0
    %v3544 = vadd.f32 %v2111, %v3543
    %v3545 = vpop.f32.mrf.mxu0
    %3546 = vdwg.mxu0
    %3547 = vmatpush.bf16.msra.mxu0 %v2967
    %3548 = vmatpush.bf16.msra.mxu0 %v2959
    %3549 = vmatpush.bf16.msra.mxu0 %v2951
    %3550 = vmatpush.bf16.msra.mxu0 %v2943
    %3551 = vmatpush.bf16.msra.mxu0 %v2935
    %3552 = vmatpush.bf16.msra.mxu0 %v2927
    %3553 = vmatpush.bf16.msra.mxu0 %v2919
    %3554 = vmatpush.bf16.msra.mxu0 %v2911
    %3555 = vmatmul.bf16.gmra.mxu0 %v1862
    %v3556 = vpop.f32.mrf.mxu0
    %v3557 = vadd.f32 %v3544, %v3556
    %v3558 = vpop.f32.mrf.mxu0
    %3559 = vdwg.mxu0
    %3560 = vmatpush.bf16.msra.mxu0 %v3031
    %3561 = vmatpush.bf16.msra.mxu0 %v3023
    %3562 = vmatpush.bf16.msra.mxu0 %v3015
    %3563 = vmatpush.bf16.msra.mxu0 %v3007
    %3564 = vmatpush.bf16.msra.mxu0 %v2999
    %3565 = vmatpush.bf16.msra.mxu0 %v2991
    %3566 = vmatpush.bf16.msra.mxu0 %v2983
    %3567 = vmatpush.bf16.msra.mxu0 %v2975
    %3568 = vmatmul.bf16.gmra.mxu0 %v1863
    %v3569 = vpop.f32.mrf.mxu0
    %v3570 = vadd.f32 %v3557, %v3569
    %v3571 = vpop.f32.mrf.mxu0
    %3572 = vdwg.mxu0
    %3573 = vmatpush.bf16.msra.mxu0 0
    %3574 = vmatpush.bf16.msra.mxu0 0
    %3575 = vmatpush.bf16.msra.mxu0 %v3079
    %3576 = vmatpush.bf16.msra.mxu0 %v3071
    %3577 = vmatpush.bf16.msra.mxu0 %v3063
    %3578 = vmatpush.bf16.msra.mxu0 %v3055
    %3579 = vmatpush.bf16.msra.mxu0 %v3047
    %3580 = vmatpush.bf16.msra.mxu0 %v3039
    %3581 = vmatmul.bf16.gmra.mxu0 %v3324
    %v3582 = vpop.f32.mrf.mxu0
    %v3583 = vadd.f32 %v3570, %v3582
    %v3584 = vpop.f32.mrf.mxu0
    %3585 = vdwg.mxu0
    %3586 = vmatpush.bf16.msra.mxu0 %v2904
    %3587 = vmatpush.bf16.msra.mxu0 %v2896
    %3588 = vmatpush.bf16.msra.mxu0 %v2888
    %3589 = vmatpush.bf16.msra.mxu0 %v2880
    %3590 = vmatpush.bf16.msra.mxu0 %v2872
    %3591 = vmatpush.bf16.msra.mxu0 %v2864
    %3592 = vmatpush.bf16.msra.mxu0 %v2856
    %3593 = vmatpush.bf16.msra.mxu0 %v2848
    %3594 = vmatmul.bf16.gmra.mxu0 %v1861
    %v3595 = vpop.f32.mrf.mxu0
    %v3596 = vadd.f32 %v2112, %v3595
    %v3597 = vpop.f32.mrf.mxu0
    %3598 = vdwg.mxu0
    %3599 = vmatpush.bf16.msra.mxu0 %v2968
    %3600 = vmatpush.bf16.msra.mxu0 %v2960
    %3601 = vmatpush.bf16.msra.mxu0 %v2952
    %3602 = vmatpush.bf16.msra.mxu0 %v2944
    %3603 = vmatpush.bf16.msra.mxu0 %v2936
    %3604 = vmatpush.bf16.msra.mxu0 %v2928
    %3605 = vmatpush.bf16.msra.mxu0 %v2920
    %3606 = vmatpush.bf16.msra.mxu0 %v2912
    %3607 = vmatmul.bf16.gmra.mxu0 %v1862
    %v3608 = vpop.f32.mrf.mxu0
    %v3609 = vadd.f32 %v3596, %v3608
    %v3610 = vpop.f32.mrf.mxu0
    %3611 = vdwg.mxu0
    %3612 = vmatpush.bf16.msra.mxu0 %v3032
    %3613 = vmatpush.bf16.msra.mxu0 %v3024
    %3614 = vmatpush.bf16.msra.mxu0 %v3016
    %3615 = vmatpush.bf16.msra.mxu0 %v3008
    %3616 = vmatpush.bf16.msra.mxu0 %v3000
    %3617 = vmatpush.bf16.msra.mxu0 %v2992
    %3618 = vmatpush.bf16.msra.mxu0 %v2984
    %3619 = vmatpush.bf16.msra.mxu0 %v2976
    %3620 = vmatmul.bf16.gmra.mxu0 %v1863
    %v3621 = vpop.f32.mrf.mxu0
    %v3622 = vadd.f32 %v3609, %v3621
    %v3623 = vpop.f32.mrf.mxu0
    %3624 = vdwg.mxu0
    %3625 = vmatpush.bf16.msra.mxu0 0
    %3626 = vmatpush.bf16.msra.mxu0 0
    %3627 = vmatpush.bf16.msra.mxu0 %v3080
    %3628 = vmatpush.bf16.msra.mxu0 %v3072
    %3629 = vmatpush.bf16.msra.mxu0 %v3064
    %3630 = vmatpush.bf16.msra.mxu0 %v3056
    %3631 = vmatpush.bf16.msra.mxu0 %v3048
    %3632 = vmatpush.bf16.msra.mxu0 %v3040
    %3633 = vmatmul.bf16.gmra.mxu0 %v3324
    %v3634 = vpop.f32.mrf.mxu0
    %v3635 = vadd.f32 %v3622, %v3634
    %v3636 = vpop.f32.mrf.mxu0
    %3637 = vdwg.mxu0
    %3638 = vmatpush.bf16.msra.mxu0 %v2905
    %3639 = vmatpush.bf16.msra.mxu0 %v2897
    %3640 = vmatpush.bf16.msra.mxu0 %v2889
    %3641 = vmatpush.bf16.msra.mxu0 %v2881
    %3642 = vmatpush.bf16.msra.mxu0 %v2873
    %3643 = vmatpush.bf16.msra.mxu0 %v2865
    %3644 = vmatpush.bf16.msra.mxu0 %v2857
    %3645 = vmatpush.bf16.msra.mxu0 %v2849
    %3646 = vmatmul.bf16.gmra.mxu0 %v1861
    %v3647 = vpop.f32.mrf.mxu0
    %v3648 = vadd.f32 %v2113, %v3647
    %v3649 = vpop.f32.mrf.mxu0
    %3650 = vdwg.mxu0
    %3651 = vmatpush.bf16.msra.mxu0 %v2969
    %3652 = vmatpush.bf16.msra.mxu0 %v2961
    %3653 = vmatpush.bf16.msra.mxu0 %v2953
    %3654 = vmatpush.bf16.msra.mxu0 %v2945
    %3655 = vmatpush.bf16.msra.mxu0 %v2937
    %3656 = vmatpush.bf16.msra.mxu0 %v2929
    %3657 = vmatpush.bf16.msra.mxu0 %v2921
    %3658 = vmatpush.bf16.msra.mxu0 %v2913
    %3659 = vmatmul.bf16.gmra.mxu0 %v1862
    %v3660 = vpop.f32.mrf.mxu0
    %v3661 = vadd.f32 %v3648, %v3660
    %v3662 = vpop.f32.mrf.mxu0
    %3663 = vdwg.mxu0
    %3664 = vmatpush.bf16.msra.mxu0 %v3033
    %3665 = vmatpush.bf16.msra.mxu0 %v3025
    %3666 = vmatpush.bf16.msra.mxu0 %v3017
    %3667 = vmatpush.bf16.msra.mxu0 %v3009
    %3668 = vmatpush.bf16.msra.mxu0 %v3001
    %3669 = vmatpush.bf16.msra.mxu0 %v2993
    %3670 = vmatpush.bf16.msra.mxu0 %v2985
    %3671 = vmatpush.bf16.msra.mxu0 %v2977
    %3672 = vmatmul.bf16.gmra.mxu0 %v1863
    %v3673 = vpop.f32.mrf.mxu0
    %v3674 = vadd.f32 %v3661, %v3673
    %v3675 = vpop.f32.mrf.mxu0
    %3676 = vdwg.mxu0
    %3677 = vmatpush.bf16.msra.mxu0 0
    %3678 = vmatpush.bf16.msra.mxu0 0
    %3679 = vmatpush.bf16.msra.mxu0 %v3081
    %3680 = vmatpush.bf16.msra.mxu0 %v3073
    %3681 = vmatpush.bf16.msra.mxu0 %v3065
    %3682 = vmatpush.bf16.msra.mxu0 %v3057
    %3683 = vmatpush.bf16.msra.mxu0 %v3049
    %3684 = vmatpush.bf16.msra.mxu0 %v3041
    %3685 = vmatmul.bf16.gmra.mxu0 %v3324
    %v3686 = vpop.f32.mrf.mxu0
    %v3687 = vadd.f32 %v3674, %v3686
    %v3688 = vpop.f32.mrf.mxu0
    %3689 = vdwg.mxu0
    %3690 = vmatpush.bf16.msra.mxu0 %v2906
    %3691 = vmatpush.bf16.msra.mxu0 %v2898
    %3692 = vmatpush.bf16.msra.mxu0 %v2890
    %3693 = vmatpush.bf16.msra.mxu0 %v2882
    %3694 = vmatpush.bf16.msra.mxu0 %v2874
    %3695 = vmatpush.bf16.msra.mxu0 %v2866
    %3696 = vmatpush.bf16.msra.mxu0 %v2858
    %3697 = vmatpush.bf16.msra.mxu0 %v2850
    %3698 = vmatmul.bf16.gmra.mxu0 %v1861
    %v3699 = vpop.f32.mrf.mxu0
    %v3700 = vadd.f32 %v2114, %v3699
    %v3701 = vpop.f32.mrf.mxu0
    %3702 = vdwg.mxu0
    %3703 = vmatpush.bf16.msra.mxu0 %v2970
    %3704 = vmatpush.bf16.msra.mxu0 %v2962
    %3705 = vmatpush.bf16.msra.mxu0 %v2954
    %3706 = vmatpush.bf16.msra.mxu0 %v2946
    %3707 = vmatpush.bf16.msra.mxu0 %v2938
    %3708 = vmatpush.bf16.msra.mxu0 %v2930
    %3709 = vmatpush.bf16.msra.mxu0 %v2922
    %3710 = vmatpush.bf16.msra.mxu0 %v2914
    %3711 = vmatmul.bf16.gmra.mxu0 %v1862
    %v3712 = vpop.f32.mrf.mxu0
    %v3713 = vadd.f32 %v3700, %v3712
    %v3714 = vpop.f32.mrf.mxu0
    %3715 = vdwg.mxu0
    %3716 = vmatpush.bf16.msra.mxu0 %v3034
    %3717 = vmatpush.bf16.msra.mxu0 %v3026
    %3718 = vmatpush.bf16.msra.mxu0 %v3018
    %3719 = vmatpush.bf16.msra.mxu0 %v3010
    %3720 = vmatpush.bf16.msra.mxu0 %v3002
    %3721 = vmatpush.bf16.msra.mxu0 %v2994
    %3722 = vmatpush.bf16.msra.mxu0 %v2986
    %3723 = vmatpush.bf16.msra.mxu0 %v2978
    %3724 = vmatmul.bf16.gmra.mxu0 %v1863
    %v3725 = vpop.f32.mrf.mxu0
    %v3726 = vadd.f32 %v3713, %v3725
    %v3727 = vpop.f32.mrf.mxu0
    %3728 = vdwg.mxu0
    %3729 = vmatpush.bf16.msra.mxu0 0
    %3730 = vmatpush.bf16.msra.mxu0 0
    %3731 = vmatpush.bf16.msra.mxu0 %v3082
    %3732 = vmatpush.bf16.msra.mxu0 %v3074
    %3733 = vmatpush.bf16.msra.mxu0 %v3066
    %3734 = vmatpush.bf16.msra.mxu0 %v3058
    %3735 = vmatpush.bf16.msra.mxu0 %v3050
    %3736 = vmatpush.bf16.msra.mxu0 %v3042
    %3737 = vmatmul.bf16.gmra.mxu0 %v3324
    %v3738 = vpop.f32.mrf.mxu0
    %v3739 = vadd.f32 %v3726, %v3738
    %v3740 = vpop.f32.mrf.mxu0
    %3741 = vdwg.mxu0
    %v3742 = vmax.f32 %v3375, 0.0
    %v3743 = vmax.f32 %v3427, 0.0
    %v3744 = vmax.f32 %v3479, 0.0
    %v3745 = vmax.f32 %v3531, 0.0
    %v3746 = vmax.f32 %v3583, 0.0
    %v3747 = vmax.f32 %v3635, 0.0
    %v3748 = vmax.f32 %v3687, 0.0
    %v3749 = vmax.f32 %v3739, 0.0
    %v3750 = vld [vmem:[#allocation17] sm:$0xff]
    %v3751 = vld [vmem:[#allocation19] sm:$0xff]
    %v3752 = vsel %vm1520, %v3742, 0.0
    %v3753 = vsel %vm1520, %v3743, 0.0
    %v3754 = vadd.f32 %v3752, %v3753
    %v3755 = vsel %vm1520, %v3744, 0.0
    %v3756 = vadd.f32 %v3754, %v3755
    %v3757 = vsel %vm1520, %v3745, 0.0
    %v3758 = vadd.f32 %v3756, %v3757
    %v3759 = vsel %vm1520, %v3746, 0.0
    %v3760 = vadd.f32 %v3758, %v3759
    %v3761 = vsel %vm1520, %v3747, 0.0
    %v3762 = vadd.f32 %v3760, %v3761
    %v3763 = vsel %vm1520, %v3748, 0.0
    %v3764 = vadd.f32 %v3762, %v3763
    %v3765 = vsel %vm1520, %v3749, 0.0
    %v3766 = vadd.f32 %v3764, %v3765
    %3767 = vadd.xlane.f32.xlu0 %v3766
    %v3768 = vpop.xlane.xlu0 %3767
    %v3769 = vrcp.pop 1024.0
    %v3770 = vmul.f32 1024.0, %v3769
    %v3771 = vsub.f32 1.0, %v3770
    %v3772 = vmul.f32 %v3769, %v3771
    %v3773 = vadd.f32 %v3769, %v3772
    %vm3774 = vweird.f32 %v3769
    %v3775 = vsel %vm3774, %v3769, %v3773
    %v3776 = vmul.f32 %v3768, %v3775
    %v3777 = vsub.f32 %v3742, %v3776
    %v3778 = vsub.f32 %v3743, %v3776
    %v3779 = vsub.f32 %v3744, %v3776
    %v3780 = vsub.f32 %v3745, %v3776
    %v3781 = vsub.f32 %v3746, %v3776
    %v3782 = vsub.f32 %v3747, %v3776
    %v3783 = vsub.f32 %v3748, %v3776
    %v3784 = vsub.f32 %v3749, %v3776
    %v3785 = vmul.f32 %v3777, %v3777
    %v3786 = vmul.f32 %v3778, %v3778
    %v3787 = vmul.f32 %v3779, %v3779
    %v3788 = vmul.f32 %v3780, %v3780
    %v3789 = vmul.f32 %v3781, %v3781
    %v3790 = vmul.f32 %v3782, %v3782
    %v3791 = vmul.f32 %v3783, %v3783
    %v3792 = vmul.f32 %v3784, %v3784
    %v3793 = vsel %vm1520, %v3785, 0.0
    %v3794 = vsel %vm1520, %v3786, 0.0
    %v3795 = vadd.f32 %v3793, %v3794
    %v3796 = vsel %vm1520, %v3787, 0.0
    %v3797 = vadd.f32 %v3795, %v3796
    %v3798 = vsel %vm1520, %v3788, 0.0
    %v3799 = vadd.f32 %v3797, %v3798
    %v3800 = vsel %vm1520, %v3789, 0.0
    %v3801 = vadd.f32 %v3799, %v3800
    %v3802 = vsel %vm1520, %v3790, 0.0
    %v3803 = vadd.f32 %v3801, %v3802
    %v3804 = vsel %vm1520, %v3791, 0.0
    %v3805 = vadd.f32 %v3803, %v3804
    %v3806 = vsel %vm1520, %v3792, 0.0
    %v3807 = vadd.f32 %v3805, %v3806
    %3808 = vadd.xlane.f32.xlu0 %v3807
    %v3809 = vpop.xlane.xlu0 %3808
    %v3810 = vmul.f32 %v3809, %v3775
    %v3811 = vadd.f32 %v3810, 1e-05
    %v3812 = vrsqrt.pop %v3811
    %v3813 = vmul.f32 %v3812, %v3811
    %v3814 = vmul.f32 %v3813, %v3812
    %v3815 = vmul.f32 0.5, %v3814
    %v3816 = vsub.f32 1.5, %v3815
    %v3817 = vmul.f32 %v3812, %v3816
    %vm3818 = vweird.f32 %v3811
    %vm3819 = vweird.f32 %v3812
    %vm3820 = vmor %vm3818, %vm3819
    %v3821 = vsel %vm3820, %v3812, %v3817
    %v3822 = vmul.f32 %v3777, %v3821
    %v3823 = vmul.f32 %v3778, %v3821
    %v3824 = vmul.f32 %v3779, %v3821
    %v3825 = vmul.f32 %v3780, %v3821
    %v3826 = vmul.f32 %v3781, %v3821
    %v3827 = vmul.f32 %v3782, %v3821
    %v3828 = vmul.f32 %v3783, %v3821
    %v3829 = vmul.f32 %v3784, %v3821
    %v3831 = vperm.slane %v3750, 0
    %v3832 = vperm.slane %v3750, 1
    %v3833 = vperm.slane %v3750, 2
    %v3834 = vperm.slane %v3750, 3
    %v3835 = vperm.slane %v3750, 4
    %v3836 = vperm.slane %v3750, 5
    %v3837 = vperm.slane %v3750, 6
    %v3838 = vperm.slane %v3750, 7
    %v3847 = vmul.f32 %v3822, %v3831
    %v3848 = vmul.f32 %v3823, %v3832
    %v3849 = vmul.f32 %v3824, %v3833
    %v3850 = vmul.f32 %v3825, %v3834
    %v3851 = vmul.f32 %v3826, %v3835
    %v3852 = vmul.f32 %v3827, %v3836
    %v3853 = vmul.f32 %v3828, %v3837
    %v3854 = vmul.f32 %v3829, %v3838
    %v3856 = vperm.slane %v3751, 0
    %v3857 = vperm.slane %v3751, 1
    %v3858 = vperm.slane %v3751, 2
    %v3859 = vperm.slane %v3751, 3
    %v3860 = vperm.slane %v3751, 4
    %v3861 = vperm.slane %v3751, 5
    %v3862 = vperm.slane %v3751, 6
    %v3863 = vperm.slane %v3751, 7
    %v3872 = vadd.f32 %v3847, %v3856
    %v3873 = vadd.f32 %v3848, %v3857
    %v3874 = vadd.f32 %v3849, %v3858
    %v3875 = vadd.f32 %v3850, %v3859
    %v3876 = vadd.f32 %v3851, %v3860
    %v3877 = vadd.f32 %v3852, %v3861
    %v3878 = vadd.f32 %v3853, %v3862
    %v3879 = vadd.f32 %v3854, %v3863
    %v3880 = vpack.c.bf16 %v3872, %v3872
    %v3881 = vpack.c.bf16 %v3873, %v3873
    %v3882 = vpack.c.bf16 %v3874, %v3874
    %v3883 = vpack.c.bf16 %v3875, %v3875
    %v3884 = vpack.c.bf16 %v3876, %v3876
    %v3885 = vpack.c.bf16 %v3877, %v3877
    %v3886 = vpack.c.bf16 %v3878, %v3878
    %v3887 = vpack.c.bf16 %v3879, %v3879
    %v3888 = vld [vmem:[#allocation20] sm:$0xf]
    %v3889 = vld [vmem:[#allocation20 + $0x4] sm:$0xf]
    %v3890 = vld [vmem:[#allocation20 + $0x8] sm:$0xf]
    %v3891 = vld [vmem:[#allocation20 + $0xc] sm:$0xf]
    %v3892 = vld [vmem:[#allocation20 + $0x10] sm:$0xf]
    %v3893 = vld [vmem:[#allocation20 + $0x14] sm:$0xf]
    %v3894 = vld [vmem:[#allocation20 + $0x18] sm:$0xf]
    %v3895 = vld [vmem:[#allocation20 + $0x1c] sm:$0xf]
    %v3896 = vld [vmem:[#allocation20 + $0x20] sm:$0xf]
    %v3897 = vld [vmem:[#allocation20 + $0x24] sm:$0xf]
    %v3898 = vld [vmem:[#allocation20 + $0x28] sm:$0xf]
    %v3899 = vld [vmem:[#allocation20 + $0x2c] sm:$0xf]
    %v3900 = vld [vmem:[#allocation20 + $0x30] sm:$0xf]
    %v3901 = vld [vmem:[#allocation20 + $0x34] sm:$0xf]
    %v3902 = vld [vmem:[#allocation20 + $0x38] sm:$0xf]
    %v3903 = vld [vmem:[#allocation20 + $0x3c] sm:$0xf]
    %v3904 = vld [vmem:[#allocation20 + $0x40] sm:$0xf]
    %v3905 = vld [vmem:[#allocation20 + $0x44] sm:$0xf]
    %v3906 = vld [vmem:[#allocation20 + $0x48] sm:$0xf]
    %v3907 = vld [vmem:[#allocation20 + $0x4c] sm:$0xf]
    %v3908 = vld [vmem:[#allocation20 + $0x50] sm:$0xf]
    %v3909 = vld [vmem:[#allocation20 + $0x54] sm:$0xf]
    %v3910 = vld [vmem:[#allocation20 + $0x58] sm:$0xf]
    %v3911 = vld [vmem:[#allocation20 + $0x5c] sm:$0xf]
    %v3912 = vld [vmem:[#allocation20 + $0x60] sm:$0xf]
    %v3913 = vld [vmem:[#allocation20 + $0x64] sm:$0xf]
    %v3914 = vld [vmem:[#allocation20 + $0x68] sm:$0xf]
    %v3915 = vld [vmem:[#allocation20 + $0x6c] sm:$0xf]
    %v3916 = vld [vmem:[#allocation20 + $0x70] sm:$0xf]
    %v3917 = vld [vmem:[#allocation20 + $0x74] sm:$0xf]
    %v3918 = vld [vmem:[#allocation20 + $0x78] sm:$0xf]
    %v3919 = vld [vmem:[#allocation20 + $0x7c] sm:$0xf]
    %v3920 = vld [vmem:[#allocation20 + $0x80] sm:$0xf]
    %v3921 = vld [vmem:[#allocation20 + $0x84] sm:$0xf]
    %v3922 = vld [vmem:[#allocation20 + $0x88] sm:$0xf]
    %v3923 = vld [vmem:[#allocation20 + $0x8c] sm:$0xf]
    %v3924 = vld [vmem:[#allocation20 + $0x90] sm:$0xf]
    %v3925 = vld [vmem:[#allocation20 + $0x94] sm:$0xf]
    %v3926 = vld [vmem:[#allocation20 + $0x98] sm:$0xf]
    %v3927 = vld [vmem:[#allocation20 + $0x9c] sm:$0xf]
    %v3928 = vld [vmem:[#allocation20 + $0xa0] sm:$0xf]
    %v3929 = vld [vmem:[#allocation20 + $0xa4] sm:$0xf]
    %v3930 = vld [vmem:[#allocation20 + $0xa8] sm:$0xf]
    %v3931 = vld [vmem:[#allocation20 + $0xac] sm:$0xf]
    %v3932 = vld [vmem:[#allocation20 + $0xb0] sm:$0xf]
    %v3933 = vld [vmem:[#allocation20 + $0xb4] sm:$0xf]
    %v3934 = vld [vmem:[#allocation20 + $0xb8] sm:$0xf]
    %v3935 = vld [vmem:[#allocation20 + $0xbc] sm:$0xf]
    %v3936 = vld [vmem:[#allocation20 + $0xc0] sm:$0xf]
    %v3937 = vld [vmem:[#allocation20 + $0xc4] sm:$0xf]
    %v3938 = vld [vmem:[#allocation20 + $0xc8] sm:$0xf]
    %v3939 = vld [vmem:[#allocation20 + $0xcc] sm:$0xf]
    %v3940 = vld [vmem:[#allocation20 + $0xd0] sm:$0xf]
    %v3941 = vld [vmem:[#allocation20 + $0xd4] sm:$0xf]
    %v3942 = vld [vmem:[#allocation20 + $0xd8] sm:$0xf]
    %v3943 = vld [vmem:[#allocation20 + $0xdc] sm:$0xf]
    %v3944 = vld [vmem:[#allocation20 + $0xe0] sm:$0xf]
    %v3945 = vld [vmem:[#allocation20 + $0xe4] sm:$0xf]
    %v3946 = vld [vmem:[#allocation20 + $0xe8] sm:$0xf]
    %v3947 = vld [vmem:[#allocation20 + $0xec] sm:$0xf]
    %v3948 = vld [vmem:[#allocation20 + $0xf0] sm:$0xf]
    %v3949 = vld [vmem:[#allocation20 + $0xf4] sm:$0xf]
    %v3950 = vld [vmem:[#allocation20 + $0xf8] sm:$0xf]
    %v3951 = vld [vmem:[#allocation20 + $0xfc] sm:$0xf]
    %v3952 = vld [vmem:[#allocation20 + $0x100] sm:$0xf]
    %v3953 = vld [vmem:[#allocation20 + $0x104] sm:$0xf]
    %v3954 = vld [vmem:[#allocation20 + $0x108] sm:$0xf]
    %v3955 = vld [vmem:[#allocation20 + $0x10c] sm:$0xf]
    %v3956 = vld [vmem:[#allocation20 + $0x110] sm:$0xf]
    %v3957 = vld [vmem:[#allocation20 + $0x114] sm:$0xf]
    %v3958 = vld [vmem:[#allocation20 + $0x118] sm:$0xf]
    %v3959 = vld [vmem:[#allocation20 + $0x11c] sm:$0xf]
    %v3960 = vld [vmem:[#allocation20 + $0x120] sm:$0xf]
    %v3961 = vld [vmem:[#allocation20 + $0x124] sm:$0xf]
    %v3962 = vld [vmem:[#allocation20 + $0x128] sm:$0xf]
    %v3963 = vld [vmem:[#allocation20 + $0x12c] sm:$0xf]
    %v3964 = vld [vmem:[#allocation20 + $0x130] sm:$0xf]
    %v3965 = vld [vmem:[#allocation20 + $0x134] sm:$0xf]
    %v3966 = vld [vmem:[#allocation20 + $0x138] sm:$0xf]
    %v3967 = vld [vmem:[#allocation20 + $0x13c] sm:$0xf]
    %v3968 = vld [vmem:[#allocation20 + $0x140] sm:$0xf]
    %v3969 = vld [vmem:[#allocation20 + $0x144] sm:$0xf]
    %v3970 = vld [vmem:[#allocation20 + $0x148] sm:$0xf]
    %v3971 = vld [vmem:[#allocation20 + $0x14c] sm:$0xf]
    %v3972 = vld [vmem:[#allocation20 + $0x150] sm:$0xf]
    %v3973 = vld [vmem:[#allocation20 + $0x154] sm:$0xf]
    %v3974 = vld [vmem:[#allocation20 + $0x158] sm:$0xf]
    %v3975 = vld [vmem:[#allocation20 + $0x15c] sm:$0xf]
    %v3976 = vld [vmem:[#allocation20 + $0x160] sm:$0xf]
    %v3977 = vld [vmem:[#allocation20 + $0x164] sm:$0xf]
    %v3978 = vld [vmem:[#allocation20 + $0x168] sm:$0xf]
    %v3979 = vld [vmem:[#allocation20 + $0x16c] sm:$0xf]
    %v3980 = vld [vmem:[#allocation20 + $0x170] sm:$0xf]
    %v3981 = vld [vmem:[#allocation20 + $0x174] sm:$0xf]
    %v3982 = vld [vmem:[#allocation20 + $0x178] sm:$0xf]
    %v3983 = vld [vmem:[#allocation20 + $0x17c] sm:$0xf]
    %v3984 = vld [vmem:[#allocation20 + $0x180] sm:$0xf]
    %v3985 = vld [vmem:[#allocation20 + $0x184] sm:$0xf]
    %v3986 = vld [vmem:[#allocation20 + $0x188] sm:$0xf]
    %v3987 = vld [vmem:[#allocation20 + $0x18c] sm:$0xf]
    %v3988 = vld [vmem:[#allocation20 + $0x190] sm:$0xf]
    %v3989 = vld [vmem:[#allocation20 + $0x194] sm:$0xf]
    %v3990 = vld [vmem:[#allocation20 + $0x198] sm:$0xf]
    %v3991 = vld [vmem:[#allocation20 + $0x19c] sm:$0xf]
    %v3992 = vld [vmem:[#allocation20 + $0x1a0] sm:$0xf]
    %v3993 = vld [vmem:[#allocation20 + $0x1a4] sm:$0xf]
    %v3994 = vld [vmem:[#allocation20 + $0x1a8] sm:$0xf]
    %v3995 = vld [vmem:[#allocation20 + $0x1ac] sm:$0xf]
    %v3996 = vld [vmem:[#allocation20 + $0x1b0] sm:$0xf]
    %v3997 = vld [vmem:[#allocation20 + $0x1b4] sm:$0xf]
    %v3998 = vld [vmem:[#allocation20 + $0x1b8] sm:$0xf]
    %v3999 = vld [vmem:[#allocation20 + $0x1bc] sm:$0xf]
    %v4000 = vld [vmem:[#allocation20 + $0x1c0] sm:$0xf]
    %v4001 = vld [vmem:[#allocation20 + $0x1c4] sm:$0xf]
    %v4002 = vld [vmem:[#allocation20 + $0x1c8] sm:$0xf]
    %v4003 = vld [vmem:[#allocation20 + $0x1cc] sm:$0xf]
    %v4004 = vld [vmem:[#allocation20 + $0x1d0] sm:$0xf]
    %v4005 = vld [vmem:[#allocation20 + $0x1d4] sm:$0xf]
    %v4006 = vld [vmem:[#allocation20 + $0x1d8] sm:$0xf]
    %v4007 = vld [vmem:[#allocation20 + $0x1dc] sm:$0xf]
    %v4008 = vld [vmem:[#allocation20 + $0x1e0] sm:$0xf]
    %v4009 = vld [vmem:[#allocation20 + $0x1e4] sm:$0xf]
    %v4010 = vld [vmem:[#allocation20 + $0x1e8] sm:$0xf]
    %v4011 = vld [vmem:[#allocation20 + $0x1ec] sm:$0xf]
    %v4012 = vld [vmem:[#allocation20 + $0x1f0] sm:$0xf]
    %v4013 = vld [vmem:[#allocation20 + $0x1f4] sm:$0xf]
    %v4014 = vld [vmem:[#allocation20 + $0x1f8] sm:$0xf]
    %v4015 = vld [vmem:[#allocation20 + $0x1fc] sm:$0xf]
    %v4016 = vld [vmem:[%s13] sm:$0x1]
    %v4018 = vperm.slane %v4016, 0
    %v4148 = vunpack.c.l.b16 %v3888
    %v4149 = vunpack.c.l.b16 %v3889
    %v4150 = vunpack.c.l.b16 %v3890
    %v4151 = vunpack.c.l.b16 %v3891
    %v4152 = vunpack.c.l.b16 %v3892
    %v4153 = vunpack.c.l.b16 %v3893
    %v4154 = vunpack.c.l.b16 %v3894
    %v4155 = vunpack.c.l.b16 %v3895
    %v4156 = vunpack.c.l.b16 %v3896
    %v4157 = vunpack.c.l.b16 %v3897
    %v4158 = vunpack.c.l.b16 %v3898
    %v4159 = vunpack.c.l.b16 %v3899
    %v4160 = vunpack.c.l.b16 %v3900
    %v4161 = vunpack.c.l.b16 %v3901
    %v4162 = vunpack.c.l.b16 %v3902
    %v4163 = vunpack.c.l.b16 %v3903
    %v4164 = vunpack.c.l.b16 %v3904
    %v4165 = vunpack.c.l.b16 %v3905
    %v4166 = vunpack.c.l.b16 %v3906
    %v4167 = vunpack.c.l.b16 %v3907
    %v4168 = vunpack.c.l.b16 %v3908
    %v4169 = vunpack.c.l.b16 %v3909
    %v4170 = vunpack.c.l.b16 %v3910
    %v4171 = vunpack.c.l.b16 %v3911
    %v4172 = vunpack.c.l.b16 %v3912
    %v4173 = vunpack.c.l.b16 %v3913
    %v4174 = vunpack.c.l.b16 %v3914
    %v4175 = vunpack.c.l.b16 %v3915
    %v4176 = vunpack.c.l.b16 %v3916
    %v4177 = vunpack.c.l.b16 %v3917
    %v4178 = vunpack.c.l.b16 %v3918
    %v4179 = vunpack.c.l.b16 %v3919
    %v4180 = vunpack.c.l.b16 %v3920
    %v4181 = vunpack.c.l.b16 %v3921
    %v4182 = vunpack.c.l.b16 %v3922
    %v4183 = vunpack.c.l.b16 %v3923
    %v4184 = vunpack.c.l.b16 %v3924
    %v4185 = vunpack.c.l.b16 %v3925
    %v4186 = vunpack.c.l.b16 %v3926
    %v4187 = vunpack.c.l.b16 %v3927
    %v4188 = vunpack.c.l.b16 %v3928
    %v4189 = vunpack.c.l.b16 %v3929
    %v4190 = vunpack.c.l.b16 %v3930
    %v4191 = vunpack.c.l.b16 %v3931
    %v4192 = vunpack.c.l.b16 %v3932
    %v4193 = vunpack.c.l.b16 %v3933
    %v4194 = vunpack.c.l.b16 %v3934
    %v4195 = vunpack.c.l.b16 %v3935
    %v4196 = vunpack.c.l.b16 %v3936
    %v4197 = vunpack.c.l.b16 %v3937
    %v4198 = vunpack.c.l.b16 %v3938
    %v4199 = vunpack.c.l.b16 %v3939
    %v4200 = vunpack.c.l.b16 %v3940
    %v4201 = vunpack.c.l.b16 %v3941
    %v4202 = vunpack.c.l.b16 %v3942
    %v4203 = vunpack.c.l.b16 %v3943
    %v4204 = vunpack.c.l.b16 %v3944
    %v4205 = vunpack.c.l.b16 %v3945
    %v4206 = vunpack.c.l.b16 %v3946
    %v4207 = vunpack.c.l.b16 %v3947
    %v4208 = vunpack.c.l.b16 %v3948
    %v4209 = vunpack.c.l.b16 %v3949
    %v4210 = vunpack.c.l.b16 %v3950
    %v4211 = vunpack.c.l.b16 %v3951
    %v4212 = vunpack.c.l.b16 %v3952
    %v4213 = vunpack.c.l.b16 %v3953
    %v4214 = vunpack.c.l.b16 %v3954
    %v4215 = vunpack.c.l.b16 %v3955
    %v4216 = vunpack.c.l.b16 %v3956
    %v4217 = vunpack.c.l.b16 %v3957
    %v4218 = vunpack.c.l.b16 %v3958
    %v4219 = vunpack.c.l.b16 %v3959
    %v4220 = vunpack.c.l.b16 %v3960
    %v4221 = vunpack.c.l.b16 %v3961
    %v4222 = vunpack.c.l.b16 %v3962
    %v4223 = vunpack.c.l.b16 %v3963
    %v4224 = vunpack.c.l.b16 %v3964
    %v4225 = vunpack.c.l.b16 %v3965
    %v4226 = vunpack.c.l.b16 %v3966
    %v4227 = vunpack.c.l.b16 %v3967
    %v4228 = vunpack.c.l.b16 %v3968
    %v4229 = vunpack.c.l.b16 %v3969
    %v4230 = vunpack.c.l.b16 %v3970
    %v4231 = vunpack.c.l.b16 %v3971
    %v4232 = vunpack.c.l.b16 %v3972
    %v4233 = vunpack.c.l.b16 %v3973
    %v4234 = vunpack.c.l.b16 %v3974
    %v4235 = vunpack.c.l.b16 %v3975
    %v4236 = vunpack.c.l.b16 %v3976
    %v4237 = vunpack.c.l.b16 %v3977
    %v4238 = vunpack.c.l.b16 %v3978
    %v4239 = vunpack.c.l.b16 %v3979
    %v4240 = vunpack.c.l.b16 %v3980
    %v4241 = vunpack.c.l.b16 %v3981
    %v4242 = vunpack.c.l.b16 %v3982
    %v4243 = vunpack.c.l.b16 %v3983
    %v4244 = vunpack.c.l.b16 %v3984
    %v4245 = vunpack.c.l.b16 %v3985
    %v4246 = vunpack.c.l.b16 %v3986
    %v4247 = vunpack.c.l.b16 %v3987
    %v4248 = vunpack.c.l.b16 %v3988
    %v4249 = vunpack.c.l.b16 %v3989
    %v4250 = vunpack.c.l.b16 %v3990
    %v4251 = vunpack.c.l.b16 %v3991
    %v4252 = vunpack.c.l.b16 %v3992
    %v4253 = vunpack.c.l.b16 %v3993
    %v4254 = vunpack.c.l.b16 %v3994
    %v4255 = vunpack.c.l.b16 %v3995
    %v4256 = vunpack.c.l.b16 %v3996
    %v4257 = vunpack.c.l.b16 %v3997
    %v4258 = vunpack.c.l.b16 %v3998
    %v4259 = vunpack.c.l.b16 %v3999
    %v4260 = vunpack.c.l.b16 %v4000
    %v4261 = vunpack.c.l.b16 %v4001
    %v4262 = vunpack.c.l.b16 %v4002
    %v4263 = vunpack.c.l.b16 %v4003
    %v4264 = vunpack.c.l.b16 %v4004
    %v4265 = vunpack.c.l.b16 %v4005
    %v4266 = vunpack.c.l.b16 %v4006
    %v4267 = vunpack.c.l.b16 %v4007
    %v4268 = vunpack.c.l.b16 %v4008
    %v4269 = vunpack.c.l.b16 %v4009
    %v4270 = vunpack.c.l.b16 %v4010
    %v4271 = vunpack.c.l.b16 %v4011
    %v4272 = vunpack.c.l.b16 %v4012
    %v4273 = vunpack.c.l.b16 %v4013
    %v4274 = vunpack.c.l.b16 %v4014
    %v4275 = vunpack.c.l.b16 %v4015
    %v4276 = vpack.c.b16 %v4149, %v4148
    %v4277 = vpack.c.b16 %v4151, %v4150
    %v4278 = vpack.c.b16 %v4153, %v4152
    %v4279 = vpack.c.b16 %v4155, %v4154
    %v4280 = vpack.c.b16 %v4157, %v4156
    %v4281 = vpack.c.b16 %v4159, %v4158
    %v4282 = vpack.c.b16 %v4161, %v4160
    %v4283 = vpack.c.b16 %v4163, %v4162
    %v4284 = vpack.c.b16 %v4165, %v4164
    %v4285 = vpack.c.b16 %v4167, %v4166
    %v4286 = vpack.c.b16 %v4169, %v4168
    %v4287 = vpack.c.b16 %v4171, %v4170
    %v4288 = vpack.c.b16 %v4173, %v4172
    %v4289 = vpack.c.b16 %v4175, %v4174
    %v4290 = vpack.c.b16 %v4177, %v4176
    %v4291 = vpack.c.b16 %v4179, %v4178
    %v4292 = vpack.c.b16 %v4181, %v4180
    %v4293 = vpack.c.b16 %v4183, %v4182
    %v4294 = vpack.c.b16 %v4185, %v4184
    %v4295 = vpack.c.b16 %v4187, %v4186
    %v4296 = vpack.c.b16 %v4189, %v4188
    %v4297 = vpack.c.b16 %v4191, %v4190
    %v4298 = vpack.c.b16 %v4193, %v4192
    %v4299 = vpack.c.b16 %v4195, %v4194
    %v4300 = vpack.c.b16 %v4197, %v4196
    %v4301 = vpack.c.b16 %v4199, %v4198
    %v4302 = vpack.c.b16 %v4201, %v4200
    %v4303 = vpack.c.b16 %v4203, %v4202
    %v4304 = vpack.c.b16 %v4205, %v4204
    %v4305 = vpack.c.b16 %v4207, %v4206
    %v4306 = vpack.c.b16 %v4209, %v4208
    %v4307 = vpack.c.b16 %v4211, %v4210
    %v4308 = vpack.c.b16 %v4213, %v4212
    %v4309 = vpack.c.b16 %v4215, %v4214
    %v4310 = vpack.c.b16 %v4217, %v4216
    %v4311 = vpack.c.b16 %v4219, %v4218
    %v4312 = vpack.c.b16 %v4221, %v4220
    %v4313 = vpack.c.b16 %v4223, %v4222
    %v4314 = vpack.c.b16 %v4225, %v4224
    %v4315 = vpack.c.b16 %v4227, %v4226
    %v4316 = vpack.c.b16 %v4229, %v4228
    %v4317 = vpack.c.b16 %v4231, %v4230
    %v4318 = vpack.c.b16 %v4233, %v4232
    %v4319 = vpack.c.b16 %v4235, %v4234
    %v4320 = vpack.c.b16 %v4237, %v4236
    %v4321 = vpack.c.b16 %v4239, %v4238
    %v4322 = vpack.c.b16 %v4241, %v4240
    %v4323 = vpack.c.b16 %v4243, %v4242
    %v4324 = vpack.c.b16 %v4245, %v4244
    %v4325 = vpack.c.b16 %v4247, %v4246
    %v4326 = vpack.c.b16 %v4249, %v4248
    %v4327 = vpack.c.b16 %v4251, %v4250
    %v4328 = vpack.c.b16 %v4253, %v4252
    %v4329 = vpack.c.b16 %v4255, %v4254
    %v4330 = vpack.c.b16 %v4257, %v4256
    %v4331 = vpack.c.b16 %v4259, %v4258
    %v4332 = vpack.c.b16 %v4261, %v4260
    %v4333 = vpack.c.b16 %v4263, %v4262
    %v4334 = vpack.c.b16 %v4265, %v4264
    %v4335 = vpack.c.b16 %v4267, %v4266
    %v4336 = vpack.c.b16 %v4269, %v4268
    %v4337 = vpack.c.b16 %v4271, %v4270
    %v4338 = vpack.c.b16 %v4273, %v4272
    %v4339 = vpack.c.b16 %v4275, %v4274
    %4404 = vmatpush.bf16.msra.mxu0 %v4283
    %4405 = vmatpush.bf16.msra.mxu0 %v4282
    %4406 = vmatpush.bf16.msra.mxu0 %v4281
    %4407 = vmatpush.bf16.msra.mxu0 %v4280
    %4408 = vmatpush.bf16.msra.mxu0 %v4279
    %4409 = vmatpush.bf16.msra.mxu0 %v4278
    %4410 = vmatpush.bf16.msra.mxu0 %v4277
    %4411 = vmatpush.bf16.msra.mxu0 %v4276
    %4412 = vmatmul.bf16.gmra.mxu0 %v3880
    %v4413 = vpop.f32.mrf.mxu0
    %v4414 = vadd.f32 %v4018, %v4413
    %v4415 = vpop.f32.mrf.mxu0
    %4416 = vdwg.mxu0
    %4417 = vmatpush.bf16.msra.mxu0 %v4291
    %4418 = vmatpush.bf16.msra.mxu0 %v4290
    %4419 = vmatpush.bf16.msra.mxu0 %v4289
    %4420 = vmatpush.bf16.msra.mxu0 %v4288
    %4421 = vmatpush.bf16.msra.mxu0 %v4287
    %4422 = vmatpush.bf16.msra.mxu0 %v4286
    %4423 = vmatpush.bf16.msra.mxu0 %v4285
    %4424 = vmatpush.bf16.msra.mxu0 %v4284
    %4425 = vmatmul.bf16.gmra.mxu0 %v3881
    %v4426 = vpop.f32.mrf.mxu0
    %v4427 = vadd.f32 %v4414, %v4426
    %v4428 = vpop.f32.mrf.mxu0
    %4429 = vdwg.mxu0
    %4430 = vmatpush.bf16.msra.mxu0 %v4299
    %4431 = vmatpush.bf16.msra.mxu0 %v4298
    %4432 = vmatpush.bf16.msra.mxu0 %v4297
    %4433 = vmatpush.bf16.msra.mxu0 %v4296
    %4434 = vmatpush.bf16.msra.mxu0 %v4295
    %4435 = vmatpush.bf16.msra.mxu0 %v4294
    %4436 = vmatpush.bf16.msra.mxu0 %v4293
    %4437 = vmatpush.bf16.msra.mxu0 %v4292
    %4438 = vmatmul.bf16.gmra.mxu0 %v3882
    %v4439 = vpop.f32.mrf.mxu0
    %v4440 = vadd.f32 %v4427, %v4439
    %v4441 = vpop.f32.mrf.mxu0
    %4442 = vdwg.mxu0
    %4443 = vmatpush.bf16.msra.mxu0 %v4307
    %4444 = vmatpush.bf16.msra.mxu0 %v4306
    %4445 = vmatpush.bf16.msra.mxu0 %v4305
    %4446 = vmatpush.bf16.msra.mxu0 %v4304
    %4447 = vmatpush.bf16.msra.mxu0 %v4303
    %4448 = vmatpush.bf16.msra.mxu0 %v4302
    %4449 = vmatpush.bf16.msra.mxu0 %v4301
    %4450 = vmatpush.bf16.msra.mxu0 %v4300
    %4451 = vmatmul.bf16.gmra.mxu0 %v3883
    %v4452 = vpop.f32.mrf.mxu0
    %v4453 = vadd.f32 %v4440, %v4452
    %v4454 = vpop.f32.mrf.mxu0
    %4455 = vdwg.mxu0
    %4456 = vmatpush.bf16.msra.mxu0 %v4315
    %4457 = vmatpush.bf16.msra.mxu0 %v4314
    %4458 = vmatpush.bf16.msra.mxu0 %v4313
    %4459 = vmatpush.bf16.msra.mxu0 %v4312
    %4460 = vmatpush.bf16.msra.mxu0 %v4311
    %4461 = vmatpush.bf16.msra.mxu0 %v4310
    %4462 = vmatpush.bf16.msra.mxu0 %v4309
    %4463 = vmatpush.bf16.msra.mxu0 %v4308
    %4464 = vmatmul.bf16.gmra.mxu0 %v3884
    %v4465 = vpop.f32.mrf.mxu0
    %v4466 = vadd.f32 %v4453, %v4465
    %v4467 = vpop.f32.mrf.mxu0
    %4468 = vdwg.mxu0
    %4469 = vmatpush.bf16.msra.mxu0 %v4323
    %4470 = vmatpush.bf16.msra.mxu0 %v4322
    %4471 = vmatpush.bf16.msra.mxu0 %v4321
    %4472 = vmatpush.bf16.msra.mxu0 %v4320
    %4473 = vmatpush.bf16.msra.mxu0 %v4319
    %4474 = vmatpush.bf16.msra.mxu0 %v4318
    %4475 = vmatpush.bf16.msra.mxu0 %v4317
    %4476 = vmatpush.bf16.msra.mxu0 %v4316
    %4477 = vmatmul.bf16.gmra.mxu0 %v3885
    %v4478 = vpop.f32.mrf.mxu0
    %v4479 = vadd.f32 %v4466, %v4478
    %v4480 = vpop.f32.mrf.mxu0
    %4481 = vdwg.mxu0
    %4482 = vmatpush.bf16.msra.mxu0 %v4331
    %4483 = vmatpush.bf16.msra.mxu0 %v4330
    %4484 = vmatpush.bf16.msra.mxu0 %v4329
    %4485 = vmatpush.bf16.msra.mxu0 %v4328
    %4486 = vmatpush.bf16.msra.mxu0 %v4327
    %4487 = vmatpush.bf16.msra.mxu0 %v4326
    %4488 = vmatpush.bf16.msra.mxu0 %v4325
    %4489 = vmatpush.bf16.msra.mxu0 %v4324
    %4490 = vmatmul.bf16.gmra.mxu0 %v3886
    %v4491 = vpop.f32.mrf.mxu0
    %v4492 = vadd.f32 %v4479, %v4491
    %v4493 = vpop.f32.mrf.mxu0
    %4494 = vdwg.mxu0
    %4495 = vmatpush.bf16.msra.mxu0 %v4339
    %4496 = vmatpush.bf16.msra.mxu0 %v4338
    %4497 = vmatpush.bf16.msra.mxu0 %v4337
    %4498 = vmatpush.bf16.msra.mxu0 %v4336
    %4499 = vmatpush.bf16.msra.mxu0 %v4335
    %4500 = vmatpush.bf16.msra.mxu0 %v4334
    %4501 = vmatpush.bf16.msra.mxu0 %v4333
    %4502 = vmatpush.bf16.msra.mxu0 %v4332
    %4503 = vmatmul.bf16.gmra.mxu0 %v3887
    %v4504 = vpop.f32.mrf.mxu0
    %v4505 = vadd.f32 %v4492, %v4504
    %v4506 = vpop.f32.mrf.mxu0
    %4507 = vdwg.mxu0
    %4508 = vst [vmem:[#allocation22] sm:$0x3] %v4505
    // Predicated region
    $region106: #{tpu_custom_call.1} parent=1 // pred_check
      _
    $region107: #{tpu_custom_call.1} parent=1 // pred_check_branch
      %4510 = sbr.rel (0) target = $region109
    $region108: #{tpu_custom_call.1} parent=1 // pred_region
      %4512 = vsyncadd [#allocation4], 0
      %s4514 = sshll.u32 [#allocation22], 4
      %s4515 = int_to_ptr.vmem [resolvable:$true] %s4514
      %s4516 = sshll.u32 %s14, 4
      %s4517 = int_to_ptr.hbm [resolvable:$true] %s4516
      %4519 = dma.vmem_to_hbm [thread:$0]  %s4515, 32, %s4517, [#allocation4]
    $region109: #{tpu_custom_call.1} parent=1 // pred_fallthru
      _
    // Predicated region
    $region110: #{tpu_custom_call.1} parent=1 // pred_check
      _
    $region111: #{tpu_custom_call.1} parent=1 // pred_check_branch
      %4521 = sbr.rel (0) target = $region113
    $region112: #{tpu_custom_call.1} parent=1 // pred_region
      %4523 = dma.done [#allocation4], 32
    $region113: #{tpu_custom_call.1} parent=1 // pred_fallthru
      _
    %4524 = vsyncpa [#allocation3], 1
    %4525 = vsyncpa [#allocation6], 1
    %4526 = vsyncpa [#allocation9], 1
    %4527 = vsyncpa [#allocation12], 1
    %4528 = vsyncpa [#allocation15], 1
    %4529 = vsyncpa [#allocation18], 1
    %4530 = vsyncpa [#allocation21], 1
    %4531 = vsyncpa [#allocation4], 1

</llo_original>
